<compile_context>
chip_gen: v7x
topology: tpu7x:2x2x1
jax: 0.10.0
libtpu: 0.0.40
codegen_flags: <defaults>
</compile_context>

<pallas_src>
import numpy as np

import jax
import jax.numpy as jnp
from jax.experimental import pallas as pl
from jax.experimental.pallas import tpu as pltpu

VMEM = pltpu.MemorySpace.VMEM

# ----------------------- static model configuration -----------------------
IMG_SIZE = 16
PATCH_SIZE = 4
IN_CHANS = 3
EMBED_DIM = 32          # gpt2 n_embd (small deterministic stand-in config)
N_LAYER = 2
N_HEAD = 4
N_POSITIONS = 32
LN_EPS = 1e-5
MASK_RATIO = 0.75

NUM_PATCHES = (IMG_SIZE // PATCH_SIZE) ** 2          # L = 16
PATCH_VOCAB = PATCH_SIZE * PATCH_SIZE * IN_CHANS     # p*p*3 = 48


# ------------------------------ fused Pallas kernel ------------------------------

def _fused_forward_kernel(
    # data
    patches_ref,   # (N*L, C*P*P) f32   im2col'd patches in (c, p, q) order
    src_ref,       # (N*T, 1)     i32   flat patch index per decoder token, -1 => mask token
    pos_ref,       # (N*T, E)     f32   wpe[:T] tiled per batch
    bias_ref,      # (N*T, N*T)   f32   additive attn bias (causal + block-diag per batch)
    sel_ref,       # (N*L, N*T)   f32   selects decoder tokens 1..T-1 per batch (drops token 0)
    target_ref,    # (N*L, P*P*C) f32   patchified target, (p, q, c) order
    mask_ref,      # (N*L, 1)     f32   1 = removed patch
    # params (all resident in VMEM for the whole forward)
    patch_w_ref, patch_b_ref, mask_tok_ref,
    ln1_g_ref, ln1_b_ref, attn_w_ref, attn_b_ref,
    proj_w_ref, proj_b_ref, ln2_g_ref, ln2_b_ref,
    fc_w_ref, fc_b_ref, mproj_w_ref, mproj_b_ref,
    lnf_g_ref, lnf_b_ref, out_w_ref, out_b_ref,
    # outputs
    pred_ref,      # (N*L, P*P*C) f32
    loss_ref,      # (1, 1)       f32
):
    f32 = jnp.float32
    bf16 = jnp.bfloat16
    NT, E = pos_ref.shape
    NL = patches_ref.shape[0]
    dh = E // N_HEAD
    scale = 1.0 / (dh ** 0.5)

    def mm(a, b):
        # bf16 MXU feeds, f32 accumulate (elementwise math stays f32).
        return jnp.dot(a.astype(bf16), b.astype(bf16), preferred_element_type=f32)

    def layernorm(x, g, b):
        mu = jnp.mean(x, axis=-1, keepdims=True)
        var = jnp.mean(jnp.square(x - mu), axis=-1, keepdims=True)
        return (x - mu) * jax.lax.rsqrt(var + LN_EPS) * g + b

    # ---- patch embedding (Conv2d k=s=P as a matmul over im2col'd patches) ----
    emb = mm(patches_ref[...], patch_w_ref[...]) + patch_b_ref[...]    # (NL, E)

    # ---- decoder token assembly: mask-token insertion + ids_restore un-shuffle ----
    # Exact one-hot row-gather via a tiny f32 matmul (0/1 selectors are exact);
    # rows with src == -1 get the mask token instead.
    src = src_ref[...]                                                 # (NT, 1) i32
    cols = jax.lax.broadcasted_iota(jnp.int32, (NT, NL), 1)
    onehot = (cols == src).astype(f32)                                 # (NT, NL)
    x = jnp.dot(onehot, emb, preferred_element_type=f32)               # (NT, E)
    is_mask = (src < 0).astype(f32)                                    # (NT, 1)
    x = x + is_mask * mask_tok_ref[...]
    h = x + pos_ref[...]                                               # + learned position embeds

    attn_bias = bias_ref[...]                                          # (NT, NT)

    # ---- GPT-2 backbone (pre-LN blocks, causal attention, gelu_new MLP) ----
    for l in range(N_LAYER):
        # attention
        a_in = layernorm(h, ln1_g_ref[l], ln1_b_ref[l])
        qkv = mm(a_in, attn_w_ref[l]) + attn_b_ref[l]                  # (NT, 3E)
        # fold the 1/sqrt(dh) scale into Q once; cast Q/K/V to bf16 once for all heads
        q_all = (qkv[:, :E] * scale).astype(bf16)
        k_all = qkv[:, E:2 * E].astype(bf16)
        v_all = qkv[:, 2 * E:].astype(bf16)
        proj_w = proj_w_ref[l]                                         # (E, E)
        attn_acc = jnp.zeros((NT, E), f32)
        for hd in range(N_HEAD):                                       # unrolled head loop
            sl = slice(hd * dh, (hd + 1) * dh)
            s = jax.lax.dot_general(q_all[:, sl], k_all[:, sl],
                                    (((1,), (1,)), ((), ())),
                                    preferred_element_type=f32)        # (NT, NT)
            s = s + attn_bias                                          # causal + per-batch block mask
            s = s - jnp.max(s, axis=-1, keepdims=True)
            p = jnp.exp(s)
            p = p * pl.reciprocal(jnp.sum(p, axis=-1, keepdims=True), approx=True)
            o_h = jnp.dot(p.astype(bf16), v_all[:, sl],
                          preferred_element_type=f32)                  # (NT, dh)
            # concat(heads) @ Wproj  ==  sum_h head_h @ Wproj[h*dh:(h+1)*dh, :]
            attn_acc = attn_acc + mm(o_h, proj_w[sl, :])
        h = h + attn_acc + proj_b_ref[l]

        # MLP
        m_in = layernorm(h, ln2_g_ref[l], ln2_b_ref[l])
        m = mm(m_in, fc_w_ref[l]) + fc_b_ref[l]                        # (NT, 4E) lane-dense (128)
        m = jax.nn.gelu(m, approximate=True)                           # gelu_new (tanh approx)
        h = h + mm(m, mproj_w_ref[l]) + mproj_b_ref[l]

    h = layernorm(h, lnf_g_ref[...], lnf_b_ref[...])
    pred_full = mm(h, out_w_ref[...]) + out_b_ref[...]                 # (NT, PV)

    # ---- drop the prepended token per batch (exact selection matmul) ----
    pred = jnp.dot(sel_ref[...], pred_full, preferred_element_type=f32)   # (NL, PV)
    pred_ref[...] = pred.astype(pred_ref.dtype)

    # ---- masked MSE loss (norm_pix_loss=False) ----
    d = pred - target_ref[...]
    per_patch = jnp.mean(d * d, axis=-1, keepdims=True)                # (NL, 1)
    msk = mask_ref[...]
    num = jnp.sum(per_patch * msk)
    den = jnp.sum(msk)
    loss_ref[...] = (num / den) * jnp.ones((1, 1), f32)


def _fused_forward(params, patches, src_flat, pos_slab, attn_bias, sel, target, mask):
    NL, PV = target.shape
    n_inputs = 7 + 19
    pred, loss = pl.pallas_call(
        _fused_forward_kernel,
        out_shape=(jax.ShapeDtypeStruct((NL, PV), jnp.float32),
                   jax.ShapeDtypeStruct((1, 1), jnp.float32)),
        in_specs=[pl.BlockSpec(memory_space=VMEM)] * n_inputs,
        out_specs=(pl.BlockSpec(memory_space=VMEM),
                   pl.BlockSpec(memory_space=VMEM)),
        compiler_params=pltpu.CompilerParams(vmem_limit_bytes=32 * 1024 * 1024),
    )(patches, src_flat, pos_slab, attn_bias, sel, target, mask,
      params["patch_w"], params["patch_b"], params["mask_token"],
      params["ln1_g"], params["ln1_b"],
      params["attn_w"], params["attn_b"],
      params["proj_w"], params["proj_b"],
      params["ln2_g"], params["ln2_b"],
      params["fc_w"], params["fc_b"],
      params["mproj_w"], params["mproj_b"],
      params["lnf_g"], params["lnf_b"],
      params["out_w"], params["out_b"])
    return pred, loss


# ------------------------------ constant helpers ------------------------------

def _build_attn_bias(n_batch, seq_len):
    """Additive bias: 0 where (same batch & causal), -1e30 elsewhere."""
    nt = n_batch * seq_len
    r = np.arange(nt)
    same = (r[:, None] // seq_len) == (r[None, :] // seq_len)
    causal = (r[None, :] % seq_len) <= (r[:, None] % seq_len)
    return jnp.asarray(np.where(same & causal, 0.0, -1e30).astype(np.float32))


def _build_token_select(n_batch, num_patches, seq_len):
    """sel @ hidden(N*T, .) picks decoder tokens 1..T-1 of each batch (drops token 0)."""
    rows = np.arange(n_batch * num_patches)
    cols = (rows // num_patches) * seq_len + (rows % num_patches) + 1
    sel = np.zeros((n_batch * num_patches, n_batch * seq_len), np.float32)
    sel[rows, cols] = 1.0
    return jnp.asarray(sel)


# ------------------------------ params ------------------------------

def init_params(key):
    E = EMBED_DIM
    patch_dim = IN_CHANS * PATCH_SIZE * PATCH_SIZE
    k = jax.random.split(key, 8)

    def nrm(kk, shape):
        return 0.02 * jax.random.normal(kk, shape, jnp.float32)

    # xavier_uniform on the flattened conv weight, stored transposed (C*P*P, E)
    a = (6.0 / (patch_dim + E)) ** 0.5
    return {
        "patch_w": jax.random.uniform(k[0], (patch_dim, E), jnp.float32, -a, a),
        "patch_b": jnp.zeros((1, E), jnp.float32),
        "mask_token": jnp.zeros((1, E), jnp.float32),
        "wpe": nrm(k[1], (N_POSITIONS, E)),
        # per-layer params stacked along a leading N_LAYER axis (single VMEM load each)
        "ln1_g": jnp.ones((N_LAYER, 1, E), jnp.float32),
        "ln1_b": jnp.zeros((N_LAYER, 1, E), jnp.float32),
        "attn_w": nrm(k[2], (N_LAYER, E, 3 * E)),
        "attn_b": jnp.zeros((N_LAYER, 1, 3 * E), jnp.float32),
        "proj_w": nrm(k[3], (N_LAYER, E, E)),
        "proj_b": jnp.zeros((N_LAYER, 1, E), jnp.float32),
        "ln2_g": jnp.ones((N_LAYER, 1, E), jnp.float32),
        "ln2_b": jnp.zeros((N_LAYER, 1, E), jnp.float32),
        "fc_w": nrm(k[4], (N_LAYER, E, 4 * E)),
        "fc_b": jnp.zeros((N_LAYER, 1, 4 * E), jnp.float32),
        "mproj_w": nrm(k[5], (N_LAYER, 4 * E, E)),
        "mproj_b": jnp.zeros((N_LAYER, 1, E), jnp.float32),
        "lnf_g": jnp.ones((1, E), jnp.float32),
        "lnf_b": jnp.zeros((1, E), jnp.float32),
        "out_w": nrm(k[6], (E, PATCH_VOCAB)),
        "out_b": jnp.zeros((1, PATCH_VOCAB), jnp.float32),
    }


# ------------------------------ forward (wrapper) ------------------------------

def forward(params, imgs, mask_key, mask_ratio=MASK_RATIO):
    N, C, H, W = imgs.shape
    P = PATCH_SIZE
    gh, gw = H // P, W // P
    L = gh * gw
    T = L + 1
    len_keep = int(L * (1 - mask_ratio))

    # im2col in (c, p, q) order -> Conv2d-equivalent patch-embedding input;
    # patchify in (p, q, c) order -> loss target (exactly as the PyTorch module).
    x6 = imgs.reshape(N, C, gh, P, gw, P)
    patches = x6.transpose(0, 2, 4, 1, 3, 5).reshape(N * L, C * P * P)
    target = x6.transpose(0, 2, 4, 3, 5, 1).reshape(N * L, P * P * C)

    # ---- random masking bookkeeping ----
    # TODO(synk): per-sample argsort random shuffle has no clean Pallas equivalent; plain JAX.
    noise = jax.random.uniform(mask_key, (N, L))
    ids_shuffle = jnp.argsort(noise, axis=1)
    ids_restore = jnp.argsort(ids_shuffle, axis=1)
    ids_keep = ids_shuffle[:, :len_keep]
    mask = jnp.ones((N, L), jnp.float32).at[:, :len_keep].set(0.0)
    mask = jnp.take_along_axis(mask, ids_restore, axis=1)

    # Decoder token -> source patch index (-1 => mask token).  Reproduces the
    # reference forward_decoder exactly (including treating x_masked[:, 0] as a
    # prepended token):
    #   x_ = cat([x_masked[:, 1:], mask_tokens]); x_ = gather(x_, ids_restore)
    #   xdec = cat([x_masked[:, :1], x_])
    r = ids_restore
    keep_src = jnp.take_along_axis(ids_keep, jnp.clip(r + 1, 0, len_keep - 1), axis=1)
    src_rest = jnp.where(r <= len_keep - 2, keep_src, -1)
    src_idx = jnp.concatenate([ids_keep[:, :1], src_rest], axis=1).astype(jnp.int32)  # (N, T)
    batch_off = (jnp.arange(N, dtype=jnp.int32) * L)[:, None]
    src_flat = jnp.where(src_idx >= 0, src_idx + batch_off, -1).reshape(N * T, 1)

    # Position-embedding slab (wpe[:T] per batch) and constant masks.
    pos_slab = jnp.tile(params["wpe"][:T], (N, 1))                 # (N*T, E)
    attn_bias = _build_attn_bias(N, T)                             # (N*T, N*T)
    sel = _build_token_select(N, L, T)                             # (N*L, N*T)

    pred2, loss = _fused_forward(
        params, patches, src_flat, pos_slab, attn_bias, sel,
        target, mask.reshape(N * L, 1))

    pred = pred2.reshape(N, L, P * P * C)
    return loss[0, 0], pred, mask


# ----------------------------------- main -----------------------------------

if __name__ == "__main__":
    key = jax.random.PRNGKey(0)
    k_img, k_mask, k_param = jax.random.split(key, 3)

    params = init_params(k_param)
    imgs = jax.random.normal(k_img, (2, IN_CHANS, IMG_SIZE, IMG_SIZE), jnp.float32)

    loss, pred, mask = jax.jit(forward)(params, imgs, k_mask)
    jax.block_until_ready((loss, pred, mask))

    assert loss.shape == ()
    assert pred.shape == (2, NUM_PATCHES, PATCH_VOCAB)
    assert mask.shape == (2, NUM_PATCHES)
    assert bool(jnp.isfinite(loss))
    print("KERNEL_OK")
</pallas_src>

<mosaic_0001>
module attributes {stable_mosaic.version = 11 : i64} {
  func.func @_fused_forward_kernel(%arg0: memref<32x48xf32, #tpu.memory_space<vmem>>, %arg1: memref<34x1xi32, #tpu.memory_space<vmem>>, %arg2: memref<34x32xf32, #tpu.memory_space<vmem>>, %arg3: memref<34x34xf32, #tpu.memory_space<vmem>>, %arg4: memref<32x34xf32, #tpu.memory_space<vmem>>, %arg5: memref<32x48xf32, #tpu.memory_space<vmem>>, %arg6: memref<32x1xf32, #tpu.memory_space<vmem>>, %arg7: memref<48x32xf32, #tpu.memory_space<vmem>>, %arg8: memref<1x32xf32, #tpu.memory_space<vmem>>, %arg9: memref<1x32xf32, #tpu.memory_space<vmem>>, %arg10: memref<2x1x32xf32, #tpu.memory_space<vmem>>, %arg11: memref<2x1x32xf32, #tpu.memory_space<vmem>>, %arg12: memref<2x32x96xf32, #tpu.memory_space<vmem>>, %arg13: memref<2x1x96xf32, #tpu.memory_space<vmem>>, %arg14: memref<2x32x32xf32, #tpu.memory_space<vmem>>, %arg15: memref<2x1x32xf32, #tpu.memory_space<vmem>>, %arg16: memref<2x1x32xf32, #tpu.memory_space<vmem>>, %arg17: memref<2x1x32xf32, #tpu.memory_space<vmem>>, %arg18: memref<2x32x128xf32, #tpu.memory_space<vmem>>, %arg19: memref<2x1x128xf32, #tpu.memory_space<vmem>>, %arg20: memref<2x128x32xf32, #tpu.memory_space<vmem>>, %arg21: memref<2x1x32xf32, #tpu.memory_space<vmem>>, %arg22: memref<1x32xf32, #tpu.memory_space<vmem>>, %arg23: memref<1x32xf32, #tpu.memory_space<vmem>>, %arg24: memref<32x48xf32, #tpu.memory_space<vmem>>, %arg25: memref<1x48xf32, #tpu.memory_space<vmem>>, %arg26: memref<32x48xf32, #tpu.memory_space<vmem>>, %arg27: memref<1x1xf32, #tpu.memory_space<vmem>>) attributes {dimension_semantics = [], scalar_prefetch = 0 : i64, scratch_operands = 0 : i64, tpu.core_type = #tpu.core_type<tc>} {
    %c0 = arith.constant 0 : index
    %c0_0 = arith.constant 0 : index
    %0 = vector.load %arg0[%c0, %c0_0] : memref<32x48xf32, #tpu.memory_space<vmem>>, vector<32x48xf32>
    %c0_1 = arith.constant 0 : index
    %c0_2 = arith.constant 0 : index
    %1 = vector.load %arg7[%c0_1, %c0_2] : memref<48x32xf32, #tpu.memory_space<vmem>>, vector<48x32xf32>
    %2 = arith.truncf %0 : vector<32x48xf32> to vector<32x48xbf16>
    %3 = arith.truncf %1 : vector<48x32xf32> to vector<48x32xbf16>
    %cst = arith.constant dense<0.000000e+00> : vector<32x32xf32>
    %4 = tpu.matmul %2, %3, %cst {dimension_numbers = #tpu.dot_dimension_numbers<[1], [0], [0], [1], [0, 0, 1, 1], [], []>} : vector<32x48xbf16>, vector<48x32xbf16>, vector<32x32xf32> -> vector<32x32xf32>
    %c0_3 = arith.constant 0 : index
    %c0_4 = arith.constant 0 : index
    %5 = vector.load %arg8[%c0_3, %c0_4] : memref<1x32xf32, #tpu.memory_space<vmem>>, vector<1x32xf32>
    %6 = vector.broadcast %5 : vector<1x32xf32> to vector<32x32xf32>
    %7 = arith.addf %4, %6 : vector<32x32xf32>
    %c0_5 = arith.constant 0 : index
    %c0_6 = arith.constant 0 : index
    %8 = vector.load %arg1[%c0_5, %c0_6] : memref<34x1xi32, #tpu.memory_space<vmem>>, vector<34x1xi32>
    %9 = tpu.iota {dimensions = array<i32: 1>} : vector<34x32xi32>
    %10 = vector.broadcast %8 : vector<34x1xi32> to vector<34x32xi32>
    %11 = arith.cmpi eq, %9, %10 : vector<34x32xi32>
    %12 = arith.extui %11 : vector<34x32xi1> to vector<34x32xi32>
    %13 = arith.sitofp %12 : vector<34x32xi32> to vector<34x32xf32>
    %cst_7 = arith.constant dense<0.000000e+00> : vector<34x32xf32>
    %14 = tpu.matmul %13, %7, %cst_7 {dimension_numbers = #tpu.dot_dimension_numbers<[1], [0], [0], [1], [0, 0, 1, 1], [], []>} : vector<34x32xf32>, vector<32x32xf32>, vector<34x32xf32> -> vector<34x32xf32>
    %c0_i32 = arith.constant 0 : i32
    %15 = vector.broadcast %c0_i32 : i32 to vector<34x1xi32>
    %16 = arith.cmpi slt, %8, %15 : vector<34x1xi32>
    %17 = arith.extui %16 : vector<34x1xi1> to vector<34x1xi32>
    %18 = arith.sitofp %17 : vector<34x1xi32> to vector<34x1xf32>
    %c0_8 = arith.constant 0 : index
    %c0_9 = arith.constant 0 : index
    %19 = vector.load %arg9[%c0_8, %c0_9] : memref<1x32xf32, #tpu.memory_space<vmem>>, vector<1x32xf32>
    %20 = vector.broadcast %18 : vector<34x1xf32> to vector<34x32xf32>
    %21 = vector.broadcast %19 : vector<1x32xf32> to vector<34x32xf32>
    %22 = arith.mulf %20, %21 : vector<34x32xf32>
    %23 = arith.addf %14, %22 : vector<34x32xf32>
    %c0_10 = arith.constant 0 : index
    %c0_11 = arith.constant 0 : index
    %24 = vector.load %arg2[%c0_10, %c0_11] : memref<34x32xf32, #tpu.memory_space<vmem>>, vector<34x32xf32>
    %25 = arith.addf %23, %24 : vector<34x32xf32>
    %c0_12 = arith.constant 0 : index
    %c0_13 = arith.constant 0 : index
    %26 = vector.load %arg3[%c0_12, %c0_13] : memref<34x34xf32, #tpu.memory_space<vmem>>, vector<34x34xf32>
    %c0_14 = arith.constant 0 : index
    %c0_15 = arith.constant 0 : index
    %c0_16 = arith.constant 0 : index
    %27 = vector.load %arg10[%c0_14, %c0_15, %c0_16] : memref<2x1x32xf32, #tpu.memory_space<vmem>>, vector<1x1x32xf32>
    %28 = vector.shape_cast %27 : vector<1x1x32xf32> to vector<1x32xf32>
    %c0_17 = arith.constant 0 : index
    %c0_18 = arith.constant 0 : index
    %c0_19 = arith.constant 0 : index
    %29 = vector.load %arg11[%c0_17, %c0_18, %c0_19] : memref<2x1x32xf32, #tpu.memory_space<vmem>>, vector<1x1x32xf32>
    %30 = vector.shape_cast %29 : vector<1x1x32xf32> to vector<1x32xf32>
    %cst_20 = arith.constant dense<0.000000e+00> : vector<34xf32>
    %31 = vector.multi_reduction <add>, %25, %cst_20 [1] : vector<34x32xf32> to vector<34xf32>
    %32 = vector.shape_cast %31 : vector<34xf32> to vector<34x1xf32>
    %cst_21 = arith.constant 3.200000e+01 : f32
    %33 = vector.broadcast %cst_21 : f32 to vector<34x1xf32>
    %34 = arith.divf %32, %33 : vector<34x1xf32>
    %35 = vector.broadcast %34 : vector<34x1xf32> to vector<34x32xf32>
    %36 = arith.subf %25, %35 : vector<34x32xf32>
    %37 = arith.mulf %36, %36 : vector<34x32xf32>
    %cst_22 = arith.constant dense<0.000000e+00> : vector<34xf32>
    %38 = vector.multi_reduction <add>, %37, %cst_22 [1] : vector<34x32xf32> to vector<34xf32>
    %39 = vector.shape_cast %38 : vector<34xf32> to vector<34x1xf32>
    %cst_23 = arith.constant 3.200000e+01 : f32
    %40 = vector.broadcast %cst_23 : f32 to vector<34x1xf32>
    %41 = arith.divf %39, %40 : vector<34x1xf32>
    %42 = vector.broadcast %34 : vector<34x1xf32> to vector<34x32xf32>
    %43 = arith.subf %25, %42 : vector<34x32xf32>
    %cst_24 = arith.constant 9.99999974E-6 : f32
    %44 = vector.broadcast %cst_24 : f32 to vector<34x1xf32>
    %45 = arith.addf %41, %44 : vector<34x1xf32>
    %46 = math.rsqrt %45 : vector<34x1xf32>
    %47 = vector.broadcast %46 : vector<34x1xf32> to vector<34x32xf32>
    %48 = arith.mulf %43, %47 : vector<34x32xf32>
    %49 = vector.broadcast %28 : vector<1x32xf32> to vector<34x32xf32>
    %50 = arith.mulf %48, %49 : vector<34x32xf32>
    %51 = vector.broadcast %30 : vector<1x32xf32> to vector<34x32xf32>
    %52 = arith.addf %50, %51 : vector<34x32xf32>
    %c0_25 = arith.constant 0 : index
    %c0_26 = arith.constant 0 : index
    %c0_27 = arith.constant 0 : index
    %53 = vector.load %arg12[%c0_25, %c0_26, %c0_27] : memref<2x32x96xf32, #tpu.memory_space<vmem>>, vector<1x32x96xf32>
    %54 = vector.shape_cast %53 : vector<1x32x96xf32> to vector<32x96xf32>
    %55 = arith.truncf %52 : vector<34x32xf32> to vector<34x32xbf16>
    %56 = arith.truncf %54 : vector<32x96xf32> to vector<32x96xbf16>
    %cst_28 = arith.constant dense<0.000000e+00> : vector<34x96xf32>
    %57 = tpu.matmul %55, %56, %cst_28 {dimension_numbers = #tpu.dot_dimension_numbers<[1], [0], [0], [1], [0, 0, 1, 1], [], []>} : vector<34x32xbf16>, vector<32x96xbf16>, vector<34x96xf32> -> vector<34x96xf32>
    %c0_29 = arith.constant 0 : index
    %c0_30 = arith.constant 0 : index
    %c0_31 = arith.constant 0 : index
    %58 = vector.load %arg13[%c0_29, %c0_30, %c0_31] : memref<2x1x96xf32, #tpu.memory_space<vmem>>, vector<1x1x96xf32>
    %59 = vector.shape_cast %58 : vector<1x1x96xf32> to vector<1x96xf32>
    %60 = vector.broadcast %59 : vector<1x96xf32> to vector<34x96xf32>
    %61 = arith.addf %57, %60 : vector<34x96xf32>
    %62 = vector.extract_strided_slice %61 {offsets = [0, 0], sizes = [34, 32], strides = [1, 1]} : vector<34x96xf32> to vector<34x32xf32>
    %cst_32 = arith.constant 0.353553385 : f32
    %63 = vector.broadcast %cst_32 : f32 to vector<34x32xf32>
    %64 = arith.mulf %62, %63 : vector<34x32xf32>
    %65 = arith.truncf %64 : vector<34x32xf32> to vector<34x32xbf16>
    %66 = vector.extract_strided_slice %61 {offsets = [0, 32], sizes = [34, 32], strides = [1, 1]} : vector<34x96xf32> to vector<34x32xf32>
    %67 = arith.truncf %66 : vector<34x32xf32> to vector<34x32xbf16>
    %68 = vector.extract_strided_slice %61 {offsets = [0, 64], sizes = [34, 32], strides = [1, 1]} : vector<34x96xf32> to vector<34x32xf32>
    %69 = arith.truncf %68 : vector<34x32xf32> to vector<34x32xbf16>
    %c0_33 = arith.constant 0 : index
    %c0_34 = arith.constant 0 : index
    %c0_35 = arith.constant 0 : index
    %70 = vector.load %arg14[%c0_33, %c0_34, %c0_35] : memref<2x32x32xf32, #tpu.memory_space<vmem>>, vector<1x32x32xf32>
    %71 = vector.shape_cast %70 : vector<1x32x32xf32> to vector<32x32xf32>
    %cst_36 = arith.constant 0.000000e+00 : f32
    %72 = vector.broadcast %cst_36 : f32 to vector<34x32xf32>
    %73 = vector.extract_strided_slice %65 {offsets = [0, 0], sizes = [34, 8], strides = [1, 1]} : vector<34x32xbf16> to vector<34x8xbf16>
    %74 = vector.extract_strided_slice %67 {offsets = [0, 0], sizes = [34, 8], strides = [1, 1]} : vector<34x32xbf16> to vector<34x8xbf16>
    %cst_37 = arith.constant dense<0.000000e+00> : vector<34x34xf32>
    %75 = tpu.matmul %73, %74, %cst_37 {dimension_numbers = #tpu.dot_dimension_numbers<[1], [1], [0], [0], [0, 0, 1, 0], [], []>} : vector<34x8xbf16>, vector<34x8xbf16>, vector<34x34xf32> -> vector<34x34xf32>
    %76 = arith.addf %75, %26 : vector<34x34xf32>
    %cst_38 = arith.constant dense<0xFF800000> : vector<34xf32>
    %77 = vector.multi_reduction <maximumf>, %76, %cst_38 [1] : vector<34x34xf32> to vector<34xf32>
    %78 = vector.shape_cast %77 : vector<34xf32> to vector<34x1xf32>
    %79 = vector.broadcast %78 : vector<34x1xf32> to vector<34x34xf32>
    %80 = arith.subf %76, %79 : vector<34x34xf32>
    %81 = math.exp %80 : vector<34x34xf32>
    %cst_39 = arith.constant dense<0.000000e+00> : vector<34xf32>
    %82 = vector.multi_reduction <add>, %81, %cst_39 [1] : vector<34x34xf32> to vector<34xf32>
    %83 = vector.shape_cast %82 : vector<34xf32> to vector<34x1xf32>
    %84 = tpu.reciprocal %83 {approx = true} : vector<34x1xf32> -> vector<34x1xf32>
    %85 = vector.broadcast %84 : vector<34x1xf32> to vector<34x34xf32>
    %86 = arith.mulf %81, %85 : vector<34x34xf32>
    %87 = arith.truncf %86 : vector<34x34xf32> to vector<34x34xbf16>
    %88 = vector.extract_strided_slice %69 {offsets = [0, 0], sizes = [34, 8], strides = [1, 1]} : vector<34x32xbf16> to vector<34x8xbf16>
    %cst_40 = arith.constant dense<0.000000e+00> : vector<34x8xf32>
    %89 = tpu.matmul %87, %88, %cst_40 {dimension_numbers = #tpu.dot_dimension_numbers<[1], [0], [0], [1], [0, 0, 1, 1], [], []>} : vector<34x34xbf16>, vector<34x8xbf16>, vector<34x8xf32> -> vector<34x8xf32>
    %90 = vector.extract_strided_slice %71 {offsets = [0, 0], sizes = [8, 32], strides = [1, 1]} : vector<32x32xf32> to vector<8x32xf32>
    %91 = arith.truncf %89 : vector<34x8xf32> to vector<34x8xbf16>
    %92 = arith.truncf %90 : vector<8x32xf32> to vector<8x32xbf16>
    %cst_41 = arith.constant dense<0.000000e+00> : vector<34x32xf32>
    %93 = tpu.matmul %91, %92, %cst_41 {dimension_numbers = #tpu.dot_dimension_numbers<[1], [0], [0], [1], [0, 0, 1, 1], [], []>} : vector<34x8xbf16>, vector<8x32xbf16>, vector<34x32xf32> -> vector<34x32xf32>
    %94 = arith.addf %72, %93 : vector<34x32xf32>
    %95 = vector.extract_strided_slice %65 {offsets = [0, 8], sizes = [34, 8], strides = [1, 1]} : vector<34x32xbf16> to vector<34x8xbf16>
    %96 = vector.extract_strided_slice %67 {offsets = [0, 8], sizes = [34, 8], strides = [1, 1]} : vector<34x32xbf16> to vector<34x8xbf16>
    %cst_42 = arith.constant dense<0.000000e+00> : vector<34x34xf32>
    %97 = tpu.matmul %95, %96, %cst_42 {dimension_numbers = #tpu.dot_dimension_numbers<[1], [1], [0], [0], [0, 0, 1, 0], [], []>} : vector<34x8xbf16>, vector<34x8xbf16>, vector<34x34xf32> -> vector<34x34xf32>
    %98 = arith.addf %97, %26 : vector<34x34xf32>
    %cst_43 = arith.constant dense<0xFF800000> : vector<34xf32>
    %99 = vector.multi_reduction <maximumf>, %98, %cst_43 [1] : vector<34x34xf32> to vector<34xf32>
    %100 = vector.shape_cast %99 : vector<34xf32> to vector<34x1xf32>
    %101 = vector.broadcast %100 : vector<34x1xf32> to vector<34x34xf32>
    %102 = arith.subf %98, %101 : vector<34x34xf32>
    %103 = math.exp %102 : vector<34x34xf32>
    %cst_44 = arith.constant dense<0.000000e+00> : vector<34xf32>
    %104 = vector.multi_reduction <add>, %103, %cst_44 [1] : vector<34x34xf32> to vector<34xf32>
    %105 = vector.shape_cast %104 : vector<34xf32> to vector<34x1xf32>
    %106 = tpu.reciprocal %105 {approx = true} : vector<34x1xf32> -> vector<34x1xf32>
    %107 = vector.broadcast %106 : vector<34x1xf32> to vector<34x34xf32>
    %108 = arith.mulf %103, %107 : vector<34x34xf32>
    %109 = arith.truncf %108 : vector<34x34xf32> to vector<34x34xbf16>
    %110 = vector.extract_strided_slice %69 {offsets = [0, 8], sizes = [34, 8], strides = [1, 1]} : vector<34x32xbf16> to vector<34x8xbf16>
    %cst_45 = arith.constant dense<0.000000e+00> : vector<34x8xf32>
    %111 = tpu.matmul %109, %110, %cst_45 {dimension_numbers = #tpu.dot_dimension_numbers<[1], [0], [0], [1], [0, 0, 1, 1], [], []>} : vector<34x34xbf16>, vector<34x8xbf16>, vector<34x8xf32> -> vector<34x8xf32>
    %112 = vector.extract_strided_slice %71 {offsets = [8, 0], sizes = [8, 32], strides = [1, 1]} : vector<32x32xf32> to vector<8x32xf32>
    %113 = arith.truncf %111 : vector<34x8xf32> to vector<34x8xbf16>
    %114 = arith.truncf %112 : vector<8x32xf32> to vector<8x32xbf16>
    %cst_46 = arith.constant dense<0.000000e+00> : vector<34x32xf32>
    %115 = tpu.matmul %113, %114, %cst_46 {dimension_numbers = #tpu.dot_dimension_numbers<[1], [0], [0], [1], [0, 0, 1, 1], [], []>} : vector<34x8xbf16>, vector<8x32xbf16>, vector<34x32xf32> -> vector<34x32xf32>
    %116 = arith.addf %94, %115 : vector<34x32xf32>
    %117 = vector.extract_strided_slice %65 {offsets = [0, 16], sizes = [34, 8], strides = [1, 1]} : vector<34x32xbf16> to vector<34x8xbf16>
    %118 = vector.extract_strided_slice %67 {offsets = [0, 16], sizes = [34, 8], strides = [1, 1]} : vector<34x32xbf16> to vector<34x8xbf16>
    %cst_47 = arith.constant dense<0.000000e+00> : vector<34x34xf32>
    %119 = tpu.matmul %117, %118, %cst_47 {dimension_numbers = #tpu.dot_dimension_numbers<[1], [1], [0], [0], [0, 0, 1, 0], [], []>} : vector<34x8xbf16>, vector<34x8xbf16>, vector<34x34xf32> -> vector<34x34xf32>
    %120 = arith.addf %119, %26 : vector<34x34xf32>
    %cst_48 = arith.constant dense<0xFF800000> : vector<34xf32>
    %121 = vector.multi_reduction <maximumf>, %120, %cst_48 [1] : vector<34x34xf32> to vector<34xf32>
    %122 = vector.shape_cast %121 : vector<34xf32> to vector<34x1xf32>
    %123 = vector.broadcast %122 : vector<34x1xf32> to vector<34x34xf32>
    %124 = arith.subf %120, %123 : vector<34x34xf32>
    %125 = math.exp %124 : vector<34x34xf32>
    %cst_49 = arith.constant dense<0.000000e+00> : vector<34xf32>
    %126 = vector.multi_reduction <add>, %125, %cst_49 [1] : vector<34x34xf32> to vector<34xf32>
    %127 = vector.shape_cast %126 : vector<34xf32> to vector<34x1xf32>
    %128 = tpu.reciprocal %127 {approx = true} : vector<34x1xf32> -> vector<34x1xf32>
    %129 = vector.broadcast %128 : vector<34x1xf32> to vector<34x34xf32>
    %130 = arith.mulf %125, %129 : vector<34x34xf32>
    %131 = arith.truncf %130 : vector<34x34xf32> to vector<34x34xbf16>
    %132 = vector.extract_strided_slice %69 {offsets = [0, 16], sizes = [34, 8], strides = [1, 1]} : vector<34x32xbf16> to vector<34x8xbf16>
    %cst_50 = arith.constant dense<0.000000e+00> : vector<34x8xf32>
    %133 = tpu.matmul %131, %132, %cst_50 {dimension_numbers = #tpu.dot_dimension_numbers<[1], [0], [0], [1], [0, 0, 1, 1], [], []>} : vector<34x34xbf16>, vector<34x8xbf16>, vector<34x8xf32> -> vector<34x8xf32>
    %134 = vector.extract_strided_slice %71 {offsets = [16, 0], sizes = [8, 32], strides = [1, 1]} : vector<32x32xf32> to vector<8x32xf32>
    %135 = arith.truncf %133 : vector<34x8xf32> to vector<34x8xbf16>
    %136 = arith.truncf %134 : vector<8x32xf32> to vector<8x32xbf16>
    %cst_51 = arith.constant dense<0.000000e+00> : vector<34x32xf32>
    %137 = tpu.matmul %135, %136, %cst_51 {dimension_numbers = #tpu.dot_dimension_numbers<[1], [0], [0], [1], [0, 0, 1, 1], [], []>} : vector<34x8xbf16>, vector<8x32xbf16>, vector<34x32xf32> -> vector<34x32xf32>
    %138 = arith.addf %116, %137 : vector<34x32xf32>
    %139 = vector.extract_strided_slice %65 {offsets = [0, 24], sizes = [34, 8], strides = [1, 1]} : vector<34x32xbf16> to vector<34x8xbf16>
    %140 = vector.extract_strided_slice %67 {offsets = [0, 24], sizes = [34, 8], strides = [1, 1]} : vector<34x32xbf16> to vector<34x8xbf16>
    %cst_52 = arith.constant dense<0.000000e+00> : vector<34x34xf32>
    %141 = tpu.matmul %139, %140, %cst_52 {dimension_numbers = #tpu.dot_dimension_numbers<[1], [1], [0], [0], [0, 0, 1, 0], [], []>} : vector<34x8xbf16>, vector<34x8xbf16>, vector<34x34xf32> -> vector<34x34xf32>
    %142 = arith.addf %141, %26 : vector<34x34xf32>
    %cst_53 = arith.constant dense<0xFF800000> : vector<34xf32>
    %143 = vector.multi_reduction <maximumf>, %142, %cst_53 [1] : vector<34x34xf32> to vector<34xf32>
    %144 = vector.shape_cast %143 : vector<34xf32> to vector<34x1xf32>
    %145 = vector.broadcast %144 : vector<34x1xf32> to vector<34x34xf32>
    %146 = arith.subf %142, %145 : vector<34x34xf32>
    %147 = math.exp %146 : vector<34x34xf32>
    %cst_54 = arith.constant dense<0.000000e+00> : vector<34xf32>
    %148 = vector.multi_reduction <add>, %147, %cst_54 [1] : vector<34x34xf32> to vector<34xf32>
    %149 = vector.shape_cast %148 : vector<34xf32> to vector<34x1xf32>
    %150 = tpu.reciprocal %149 {approx = true} : vector<34x1xf32> -> vector<34x1xf32>
    %151 = vector.broadcast %150 : vector<34x1xf32> to vector<34x34xf32>
    %152 = arith.mulf %147, %151 : vector<34x34xf32>
    %153 = arith.truncf %152 : vector<34x34xf32> to vector<34x34xbf16>
    %154 = vector.extract_strided_slice %69 {offsets = [0, 24], sizes = [34, 8], strides = [1, 1]} : vector<34x32xbf16> to vector<34x8xbf16>
    %cst_55 = arith.constant dense<0.000000e+00> : vector<34x8xf32>
    %155 = tpu.matmul %153, %154, %cst_55 {dimension_numbers = #tpu.dot_dimension_numbers<[1], [0], [0], [1], [0, 0, 1, 1], [], []>} : vector<34x34xbf16>, vector<34x8xbf16>, vector<34x8xf32> -> vector<34x8xf32>
    %156 = vector.extract_strided_slice %71 {offsets = [24, 0], sizes = [8, 32], strides = [1, 1]} : vector<32x32xf32> to vector<8x32xf32>
    %157 = arith.truncf %155 : vector<34x8xf32> to vector<34x8xbf16>
    %158 = arith.truncf %156 : vector<8x32xf32> to vector<8x32xbf16>
    %cst_56 = arith.constant dense<0.000000e+00> : vector<34x32xf32>
    %159 = tpu.matmul %157, %158, %cst_56 {dimension_numbers = #tpu.dot_dimension_numbers<[1], [0], [0], [1], [0, 0, 1, 1], [], []>} : vector<34x8xbf16>, vector<8x32xbf16>, vector<34x32xf32> -> vector<34x32xf32>
    %160 = arith.addf %138, %159 : vector<34x32xf32>
    %161 = arith.addf %25, %160 : vector<34x32xf32>
    %c0_57 = arith.constant 0 : index
    %c0_58 = arith.constant 0 : index
    %c0_59 = arith.constant 0 : index
    %162 = vector.load %arg15[%c0_57, %c0_58, %c0_59] : memref<2x1x32xf32, #tpu.memory_space<vmem>>, vector<1x1x32xf32>
    %163 = vector.shape_cast %162 : vector<1x1x32xf32> to vector<1x32xf32>
    %164 = vector.broadcast %163 : vector<1x32xf32> to vector<34x32xf32>
    %165 = arith.addf %161, %164 : vector<34x32xf32>
    %c0_60 = arith.constant 0 : index
    %c0_61 = arith.constant 0 : index
    %c0_62 = arith.constant 0 : index
    %166 = vector.load %arg16[%c0_60, %c0_61, %c0_62] : memref<2x1x32xf32, #tpu.memory_space<vmem>>, vector<1x1x32xf32>
    %167 = vector.shape_cast %166 : vector<1x1x32xf32> to vector<1x32xf32>
    %c0_63 = arith.constant 0 : index
    %c0_64 = arith.constant 0 : index
    %c0_65 = arith.constant 0 : index
    %168 = vector.load %arg17[%c0_63, %c0_64, %c0_65] : memref<2x1x32xf32, #tpu.memory_space<vmem>>, vector<1x1x32xf32>
    %169 = vector.shape_cast %168 : vector<1x1x32xf32> to vector<1x32xf32>
    %cst_66 = arith.constant dense<0.000000e+00> : vector<34xf32>
    %170 = vector.multi_reduction <add>, %165, %cst_66 [1] : vector<34x32xf32> to vector<34xf32>
    %171 = vector.shape_cast %170 : vector<34xf32> to vector<34x1xf32>
    %cst_67 = arith.constant 3.200000e+01 : f32
    %172 = vector.broadcast %cst_67 : f32 to vector<34x1xf32>
    %173 = arith.divf %171, %172 : vector<34x1xf32>
    %174 = vector.broadcast %173 : vector<34x1xf32> to vector<34x32xf32>
    %175 = arith.subf %165, %174 : vector<34x32xf32>
    %176 = arith.mulf %175, %175 : vector<34x32xf32>
    %cst_68 = arith.constant dense<0.000000e+00> : vector<34xf32>
    %177 = vector.multi_reduction <add>, %176, %cst_68 [1] : vector<34x32xf32> to vector<34xf32>
    %178 = vector.shape_cast %177 : vector<34xf32> to vector<34x1xf32>
    %cst_69 = arith.constant 3.200000e+01 : f32
    %179 = vector.broadcast %cst_69 : f32 to vector<34x1xf32>
    %180 = arith.divf %178, %179 : vector<34x1xf32>
    %181 = vector.broadcast %173 : vector<34x1xf32> to vector<34x32xf32>
    %182 = arith.subf %165, %181 : vector<34x32xf32>
    %cst_70 = arith.constant 9.99999974E-6 : f32
    %183 = vector.broadcast %cst_70 : f32 to vector<34x1xf32>
    %184 = arith.addf %180, %183 : vector<34x1xf32>
    %185 = math.rsqrt %184 : vector<34x1xf32>
    %186 = vector.broadcast %185 : vector<34x1xf32> to vector<34x32xf32>
    %187 = arith.mulf %182, %186 : vector<34x32xf32>
    %188 = vector.broadcast %167 : vector<1x32xf32> to vector<34x32xf32>
    %189 = arith.mulf %187, %188 : vector<34x32xf32>
    %190 = vector.broadcast %169 : vector<1x32xf32> to vector<34x32xf32>
    %191 = arith.addf %189, %190 : vector<34x32xf32>
    %c0_71 = arith.constant 0 : index
    %c0_72 = arith.constant 0 : index
    %c0_73 = arith.constant 0 : index
    %192 = vector.load %arg18[%c0_71, %c0_72, %c0_73] : memref<2x32x128xf32, #tpu.memory_space<vmem>>, vector<1x32x128xf32>
    %193 = vector.shape_cast %192 : vector<1x32x128xf32> to vector<32x128xf32>
    %194 = arith.truncf %191 : vector<34x32xf32> to vector<34x32xbf16>
    %195 = arith.truncf %193 : vector<32x128xf32> to vector<32x128xbf16>
    %cst_74 = arith.constant dense<0.000000e+00> : vector<34x128xf32>
    %196 = tpu.matmul %194, %195, %cst_74 {dimension_numbers = #tpu.dot_dimension_numbers<[1], [0], [0], [1], [0, 0, 1, 1], [], []>} : vector<34x32xbf16>, vector<32x128xbf16>, vector<34x128xf32> -> vector<34x128xf32>
    %c0_75 = arith.constant 0 : index
    %c0_76 = arith.constant 0 : index
    %c0_77 = arith.constant 0 : index
    %197 = vector.load %arg19[%c0_75, %c0_76, %c0_77] : memref<2x1x128xf32, #tpu.memory_space<vmem>>, vector<1x1x128xf32>
    %198 = vector.shape_cast %197 : vector<1x1x128xf32> to vector<1x128xf32>
    %199 = vector.broadcast %198 : vector<1x128xf32> to vector<34x128xf32>
    %200 = arith.addf %196, %199 : vector<34x128xf32>
    %201 = arith.mulf %200, %200 : vector<34x128xf32>
    %202 = arith.mulf %200, %201 : vector<34x128xf32>
    %cst_78 = arith.constant 4.471500e-02 : f32
    %203 = vector.broadcast %cst_78 : f32 to vector<34x128xf32>
    %204 = arith.mulf %203, %202 : vector<34x128xf32>
    %205 = arith.addf %200, %204 : vector<34x128xf32>
    %cst_79 = arith.constant 0.797884583 : f32
    %206 = vector.broadcast %cst_79 : f32 to vector<34x128xf32>
    %207 = arith.mulf %206, %205 : vector<34x128xf32>
    %208 = math.tanh %207 : vector<34x128xf32>
    %cst_80 = arith.constant 1.000000e+00 : f32
    %209 = vector.broadcast %cst_80 : f32 to vector<34x128xf32>
    %210 = arith.addf %209, %208 : vector<34x128xf32>
    %cst_81 = arith.constant 5.000000e-01 : f32
    %211 = vector.broadcast %cst_81 : f32 to vector<34x128xf32>
    %212 = arith.mulf %211, %210 : vector<34x128xf32>
    %213 = arith.mulf %200, %212 : vector<34x128xf32>
    %c0_82 = arith.constant 0 : index
    %c0_83 = arith.constant 0 : index
    %c0_84 = arith.constant 0 : index
    %214 = vector.load %arg20[%c0_82, %c0_83, %c0_84] : memref<2x128x32xf32, #tpu.memory_space<vmem>>, vector<1x128x32xf32>
    %215 = vector.shape_cast %214 : vector<1x128x32xf32> to vector<128x32xf32>
    %216 = arith.truncf %213 : vector<34x128xf32> to vector<34x128xbf16>
    %217 = arith.truncf %215 : vector<128x32xf32> to vector<128x32xbf16>
    %cst_85 = arith.constant dense<0.000000e+00> : vector<34x32xf32>
    %218 = tpu.matmul %216, %217, %cst_85 {dimension_numbers = #tpu.dot_dimension_numbers<[1], [0], [0], [1], [0, 0, 1, 1], [], []>} : vector<34x128xbf16>, vector<128x32xbf16>, vector<34x32xf32> -> vector<34x32xf32>
    %219 = arith.addf %165, %218 : vector<34x32xf32>
    %c0_86 = arith.constant 0 : index
    %c0_87 = arith.constant 0 : index
    %c0_88 = arith.constant 0 : index
    %220 = vector.load %arg21[%c0_86, %c0_87, %c0_88] : memref<2x1x32xf32, #tpu.memory_space<vmem>>, vector<1x1x32xf32>
    %221 = vector.shape_cast %220 : vector<1x1x32xf32> to vector<1x32xf32>
    %222 = vector.broadcast %221 : vector<1x32xf32> to vector<34x32xf32>
    %223 = arith.addf %219, %222 : vector<34x32xf32>
    %c1 = arith.constant 1 : index
    %c0_89 = arith.constant 0 : index
    %c0_90 = arith.constant 0 : index
    %224 = vector.load %arg10[%c1, %c0_89, %c0_90] : memref<2x1x32xf32, #tpu.memory_space<vmem>>, vector<1x1x32xf32>
    %225 = vector.shape_cast %224 : vector<1x1x32xf32> to vector<1x32xf32>
    %c1_91 = arith.constant 1 : index
    %c0_92 = arith.constant 0 : index
    %c0_93 = arith.constant 0 : index
    %226 = vector.load %arg11[%c1_91, %c0_92, %c0_93] : memref<2x1x32xf32, #tpu.memory_space<vmem>>, vector<1x1x32xf32>
    %227 = vector.shape_cast %226 : vector<1x1x32xf32> to vector<1x32xf32>
    %cst_94 = arith.constant dense<0.000000e+00> : vector<34xf32>
    %228 = vector.multi_reduction <add>, %223, %cst_94 [1] : vector<34x32xf32> to vector<34xf32>
    %229 = vector.shape_cast %228 : vector<34xf32> to vector<34x1xf32>
    %cst_95 = arith.constant 3.200000e+01 : f32
    %230 = vector.broadcast %cst_95 : f32 to vector<34x1xf32>
    %231 = arith.divf %229, %230 : vector<34x1xf32>
    %232 = vector.broadcast %231 : vector<34x1xf32> to vector<34x32xf32>
    %233 = arith.subf %223, %232 : vector<34x32xf32>
    %234 = arith.mulf %233, %233 : vector<34x32xf32>
    %cst_96 = arith.constant dense<0.000000e+00> : vector<34xf32>
    %235 = vector.multi_reduction <add>, %234, %cst_96 [1] : vector<34x32xf32> to vector<34xf32>
    %236 = vector.shape_cast %235 : vector<34xf32> to vector<34x1xf32>
    %cst_97 = arith.constant 3.200000e+01 : f32
    %237 = vector.broadcast %cst_97 : f32 to vector<34x1xf32>
    %238 = arith.divf %236, %237 : vector<34x1xf32>
    %239 = vector.broadcast %231 : vector<34x1xf32> to vector<34x32xf32>
    %240 = arith.subf %223, %239 : vector<34x32xf32>
    %cst_98 = arith.constant 9.99999974E-6 : f32
    %241 = vector.broadcast %cst_98 : f32 to vector<34x1xf32>
    %242 = arith.addf %238, %241 : vector<34x1xf32>
    %243 = math.rsqrt %242 : vector<34x1xf32>
    %244 = vector.broadcast %243 : vector<34x1xf32> to vector<34x32xf32>
    %245 = arith.mulf %240, %244 : vector<34x32xf32>
    %246 = vector.broadcast %225 : vector<1x32xf32> to vector<34x32xf32>
    %247 = arith.mulf %245, %246 : vector<34x32xf32>
    %248 = vector.broadcast %227 : vector<1x32xf32> to vector<34x32xf32>
    %249 = arith.addf %247, %248 : vector<34x32xf32>
    %c1_99 = arith.constant 1 : index
    %c0_100 = arith.constant 0 : index
    %c0_101 = arith.constant 0 : index
    %250 = vector.load %arg12[%c1_99, %c0_100, %c0_101] : memref<2x32x96xf32, #tpu.memory_space<vmem>>, vector<1x32x96xf32>
    %251 = vector.shape_cast %250 : vector<1x32x96xf32> to vector<32x96xf32>
    %252 = arith.truncf %249 : vector<34x32xf32> to vector<34x32xbf16>
    %253 = arith.truncf %251 : vector<32x96xf32> to vector<32x96xbf16>
    %cst_102 = arith.constant dense<0.000000e+00> : vector<34x96xf32>
    %254 = tpu.matmul %252, %253, %cst_102 {dimension_numbers = #tpu.dot_dimension_numbers<[1], [0], [0], [1], [0, 0, 1, 1], [], []>} : vector<34x32xbf16>, vector<32x96xbf16>, vector<34x96xf32> -> vector<34x96xf32>
    %c1_103 = arith.constant 1 : index
    %c0_104 = arith.constant 0 : index
    %c0_105 = arith.constant 0 : index
    %255 = vector.load %arg13[%c1_103, %c0_104, %c0_105] : memref<2x1x96xf32, #tpu.memory_space<vmem>>, vector<1x1x96xf32>
    %256 = vector.shape_cast %255 : vector<1x1x96xf32> to vector<1x96xf32>
    %257 = vector.broadcast %256 : vector<1x96xf32> to vector<34x96xf32>
    %258 = arith.addf %254, %257 : vector<34x96xf32>
    %259 = vector.extract_strided_slice %258 {offsets = [0, 0], sizes = [34, 32], strides = [1, 1]} : vector<34x96xf32> to vector<34x32xf32>
    %cst_106 = arith.constant 0.353553385 : f32
    %260 = vector.broadcast %cst_106 : f32 to vector<34x32xf32>
    %261 = arith.mulf %259, %260 : vector<34x32xf32>
    %262 = arith.truncf %261 : vector<34x32xf32> to vector<34x32xbf16>
    %263 = vector.extract_strided_slice %258 {offsets = [0, 32], sizes = [34, 32], strides = [1, 1]} : vector<34x96xf32> to vector<34x32xf32>
    %264 = arith.truncf %263 : vector<34x32xf32> to vector<34x32xbf16>
    %265 = vector.extract_strided_slice %258 {offsets = [0, 64], sizes = [34, 32], strides = [1, 1]} : vector<34x96xf32> to vector<34x32xf32>
    %266 = arith.truncf %265 : vector<34x32xf32> to vector<34x32xbf16>
    %c1_107 = arith.constant 1 : index
    %c0_108 = arith.constant 0 : index
    %c0_109 = arith.constant 0 : index
    %267 = vector.load %arg14[%c1_107, %c0_108, %c0_109] : memref<2x32x32xf32, #tpu.memory_space<vmem>>, vector<1x32x32xf32>
    %268 = vector.shape_cast %267 : vector<1x32x32xf32> to vector<32x32xf32>
    %cst_110 = arith.constant 0.000000e+00 : f32
    %269 = vector.broadcast %cst_110 : f32 to vector<34x32xf32>
    %270 = vector.extract_strided_slice %262 {offsets = [0, 0], sizes = [34, 8], strides = [1, 1]} : vector<34x32xbf16> to vector<34x8xbf16>
    %271 = vector.extract_strided_slice %264 {offsets = [0, 0], sizes = [34, 8], strides = [1, 1]} : vector<34x32xbf16> to vector<34x8xbf16>
    %cst_111 = arith.constant dense<0.000000e+00> : vector<34x34xf32>
    %272 = tpu.matmul %270, %271, %cst_111 {dimension_numbers = #tpu.dot_dimension_numbers<[1], [1], [0], [0], [0, 0, 1, 0], [], []>} : vector<34x8xbf16>, vector<34x8xbf16>, vector<34x34xf32> -> vector<34x34xf32>
    %273 = arith.addf %272, %26 : vector<34x34xf32>
    %cst_112 = arith.constant dense<0xFF800000> : vector<34xf32>
    %274 = vector.multi_reduction <maximumf>, %273, %cst_112 [1] : vector<34x34xf32> to vector<34xf32>
    %275 = vector.shape_cast %274 : vector<34xf32> to vector<34x1xf32>
    %276 = vector.broadcast %275 : vector<34x1xf32> to vector<34x34xf32>
    %277 = arith.subf %273, %276 : vector<34x34xf32>
    %278 = math.exp %277 : vector<34x34xf32>
    %cst_113 = arith.constant dense<0.000000e+00> : vector<34xf32>
    %279 = vector.multi_reduction <add>, %278, %cst_113 [1] : vector<34x34xf32> to vector<34xf32>
    %280 = vector.shape_cast %279 : vector<34xf32> to vector<34x1xf32>
    %281 = tpu.reciprocal %280 {approx = true} : vector<34x1xf32> -> vector<34x1xf32>
    %282 = vector.broadcast %281 : vector<34x1xf32> to vector<34x34xf32>
    %283 = arith.mulf %278, %282 : vector<34x34xf32>
    %284 = arith.truncf %283 : vector<34x34xf32> to vector<34x34xbf16>
    %285 = vector.extract_strided_slice %266 {offsets = [0, 0], sizes = [34, 8], strides = [1, 1]} : vector<34x32xbf16> to vector<34x8xbf16>
    %cst_114 = arith.constant dense<0.000000e+00> : vector<34x8xf32>
    %286 = tpu.matmul %284, %285, %cst_114 {dimension_numbers = #tpu.dot_dimension_numbers<[1], [0], [0], [1], [0, 0, 1, 1], [], []>} : vector<34x34xbf16>, vector<34x8xbf16>, vector<34x8xf32> -> vector<34x8xf32>
    %287 = vector.extract_strided_slice %268 {offsets = [0, 0], sizes = [8, 32], strides = [1, 1]} : vector<32x32xf32> to vector<8x32xf32>
    %288 = arith.truncf %286 : vector<34x8xf32> to vector<34x8xbf16>
    %289 = arith.truncf %287 : vector<8x32xf32> to vector<8x32xbf16>
    %cst_115 = arith.constant dense<0.000000e+00> : vector<34x32xf32>
    %290 = tpu.matmul %288, %289, %cst_115 {dimension_numbers = #tpu.dot_dimension_numbers<[1], [0], [0], [1], [0, 0, 1, 1], [], []>} : vector<34x8xbf16>, vector<8x32xbf16>, vector<34x32xf32> -> vector<34x32xf32>
    %291 = arith.addf %269, %290 : vector<34x32xf32>
    %292 = vector.extract_strided_slice %262 {offsets = [0, 8], sizes = [34, 8], strides = [1, 1]} : vector<34x32xbf16> to vector<34x8xbf16>
    %293 = vector.extract_strided_slice %264 {offsets = [0, 8], sizes = [34, 8], strides = [1, 1]} : vector<34x32xbf16> to vector<34x8xbf16>
    %cst_116 = arith.constant dense<0.000000e+00> : vector<34x34xf32>
    %294 = tpu.matmul %292, %293, %cst_116 {dimension_numbers = #tpu.dot_dimension_numbers<[1], [1], [0], [0], [0, 0, 1, 0], [], []>} : vector<34x8xbf16>, vector<34x8xbf16>, vector<34x34xf32> -> vector<34x34xf32>
    %295 = arith.addf %294, %26 : vector<34x34xf32>
    %cst_117 = arith.constant dense<0xFF800000> : vector<34xf32>
    %296 = vector.multi_reduction <maximumf>, %295, %cst_117 [1] : vector<34x34xf32> to vector<34xf32>
    %297 = vector.shape_cast %296 : vector<34xf32> to vector<34x1xf32>
    %298 = vector.broadcast %297 : vector<34x1xf32> to vector<34x34xf32>
    %299 = arith.subf %295, %298 : vector<34x34xf32>
    %300 = math.exp %299 : vector<34x34xf32>
    %cst_118 = arith.constant dense<0.000000e+00> : vector<34xf32>
    %301 = vector.multi_reduction <add>, %300, %cst_118 [1] : vector<34x34xf32> to vector<34xf32>
    %302 = vector.shape_cast %301 : vector<34xf32> to vector<34x1xf32>
    %303 = tpu.reciprocal %302 {approx = true} : vector<34x1xf32> -> vector<34x1xf32>
    %304 = vector.broadcast %303 : vector<34x1xf32> to vector<34x34xf32>
    %305 = arith.mulf %300, %304 : vector<34x34xf32>
    %306 = arith.truncf %305 : vector<34x34xf32> to vector<34x34xbf16>
    %307 = vector.extract_strided_slice %266 {offsets = [0, 8], sizes = [34, 8], strides = [1, 1]} : vector<34x32xbf16> to vector<34x8xbf16>
    %cst_119 = arith.constant dense<0.000000e+00> : vector<34x8xf32>
    %308 = tpu.matmul %306, %307, %cst_119 {dimension_numbers = #tpu.dot_dimension_numbers<[1], [0], [0], [1], [0, 0, 1, 1], [], []>} : vector<34x34xbf16>, vector<34x8xbf16>, vector<34x8xf32> -> vector<34x8xf32>
    %309 = vector.extract_strided_slice %268 {offsets = [8, 0], sizes = [8, 32], strides = [1, 1]} : vector<32x32xf32> to vector<8x32xf32>
    %310 = arith.truncf %308 : vector<34x8xf32> to vector<34x8xbf16>
    %311 = arith.truncf %309 : vector<8x32xf32> to vector<8x32xbf16>
    %cst_120 = arith.constant dense<0.000000e+00> : vector<34x32xf32>
    %312 = tpu.matmul %310, %311, %cst_120 {dimension_numbers = #tpu.dot_dimension_numbers<[1], [0], [0], [1], [0, 0, 1, 1], [], []>} : vector<34x8xbf16>, vector<8x32xbf16>, vector<34x32xf32> -> vector<34x32xf32>
    %313 = arith.addf %291, %312 : vector<34x32xf32>
    %314 = vector.extract_strided_slice %262 {offsets = [0, 16], sizes = [34, 8], strides = [1, 1]} : vector<34x32xbf16> to vector<34x8xbf16>
    %315 = vector.extract_strided_slice %264 {offsets = [0, 16], sizes = [34, 8], strides = [1, 1]} : vector<34x32xbf16> to vector<34x8xbf16>
    %cst_121 = arith.constant dense<0.000000e+00> : vector<34x34xf32>
    %316 = tpu.matmul %314, %315, %cst_121 {dimension_numbers = #tpu.dot_dimension_numbers<[1], [1], [0], [0], [0, 0, 1, 0], [], []>} : vector<34x8xbf16>, vector<34x8xbf16>, vector<34x34xf32> -> vector<34x34xf32>
    %317 = arith.addf %316, %26 : vector<34x34xf32>
    %cst_122 = arith.constant dense<0xFF800000> : vector<34xf32>
    %318 = vector.multi_reduction <maximumf>, %317, %cst_122 [1] : vector<34x34xf32> to vector<34xf32>
    %319 = vector.shape_cast %318 : vector<34xf32> to vector<34x1xf32>
    %320 = vector.broadcast %319 : vector<34x1xf32> to vector<34x34xf32>
    %321 = arith.subf %317, %320 : vector<34x34xf32>
    %322 = math.exp %321 : vector<34x34xf32>
    %cst_123 = arith.constant dense<0.000000e+00> : vector<34xf32>
    %323 = vector.multi_reduction <add>, %322, %cst_123 [1] : vector<34x34xf32> to vector<34xf32>
    %324 = vector.shape_cast %323 : vector<34xf32> to vector<34x1xf32>
    %325 = tpu.reciprocal %324 {approx = true} : vector<34x1xf32> -> vector<34x1xf32>
    %326 = vector.broadcast %325 : vector<34x1xf32> to vector<34x34xf32>
    %327 = arith.mulf %322, %326 : vector<34x34xf32>
    %328 = arith.truncf %327 : vector<34x34xf32> to vector<34x34xbf16>
    %329 = vector.extract_strided_slice %266 {offsets = [0, 16], sizes = [34, 8], strides = [1, 1]} : vector<34x32xbf16> to vector<34x8xbf16>
    %cst_124 = arith.constant dense<0.000000e+00> : vector<34x8xf32>
    %330 = tpu.matmul %328, %329, %cst_124 {dimension_numbers = #tpu.dot_dimension_numbers<[1], [0], [0], [1], [0, 0, 1, 1], [], []>} : vector<34x34xbf16>, vector<34x8xbf16>, vector<34x8xf32> -> vector<34x8xf32>
    %331 = vector.extract_strided_slice %268 {offsets = [16, 0], sizes = [8, 32], strides = [1, 1]} : vector<32x32xf32> to vector<8x32xf32>
    %332 = arith.truncf %330 : vector<34x8xf32> to vector<34x8xbf16>
    %333 = arith.truncf %331 : vector<8x32xf32> to vector<8x32xbf16>
    %cst_125 = arith.constant dense<0.000000e+00> : vector<34x32xf32>
    %334 = tpu.matmul %332, %333, %cst_125 {dimension_numbers = #tpu.dot_dimension_numbers<[1], [0], [0], [1], [0, 0, 1, 1], [], []>} : vector<34x8xbf16>, vector<8x32xbf16>, vector<34x32xf32> -> vector<34x32xf32>
    %335 = arith.addf %313, %334 : vector<34x32xf32>
    %336 = vector.extract_strided_slice %262 {offsets = [0, 24], sizes = [34, 8], strides = [1, 1]} : vector<34x32xbf16> to vector<34x8xbf16>
    %337 = vector.extract_strided_slice %264 {offsets = [0, 24], sizes = [34, 8], strides = [1, 1]} : vector<34x32xbf16> to vector<34x8xbf16>
    %cst_126 = arith.constant dense<0.000000e+00> : vector<34x34xf32>
    %338 = tpu.matmul %336, %337, %cst_126 {dimension_numbers = #tpu.dot_dimension_numbers<[1], [1], [0], [0], [0, 0, 1, 0], [], []>} : vector<34x8xbf16>, vector<34x8xbf16>, vector<34x34xf32> -> vector<34x34xf32>
    %339 = arith.addf %338, %26 : vector<34x34xf32>
    %cst_127 = arith.constant dense<0xFF800000> : vector<34xf32>
    %340 = vector.multi_reduction <maximumf>, %339, %cst_127 [1] : vector<34x34xf32> to vector<34xf32>
    %341 = vector.shape_cast %340 : vector<34xf32> to vector<34x1xf32>
    %342 = vector.broadcast %341 : vector<34x1xf32> to vector<34x34xf32>
    %343 = arith.subf %339, %342 : vector<34x34xf32>
    %344 = math.exp %343 : vector<34x34xf32>
    %cst_128 = arith.constant dense<0.000000e+00> : vector<34xf32>
    %345 = vector.multi_reduction <add>, %344, %cst_128 [1] : vector<34x34xf32> to vector<34xf32>
    %346 = vector.shape_cast %345 : vector<34xf32> to vector<34x1xf32>
    %347 = tpu.reciprocal %346 {approx = true} : vector<34x1xf32> -> vector<34x1xf32>
    %348 = vector.broadcast %347 : vector<34x1xf32> to vector<34x34xf32>
    %349 = arith.mulf %344, %348 : vector<34x34xf32>
    %350 = arith.truncf %349 : vector<34x34xf32> to vector<34x34xbf16>
    %351 = vector.extract_strided_slice %266 {offsets = [0, 24], sizes = [34, 8], strides = [1, 1]} : vector<34x32xbf16> to vector<34x8xbf16>
    %cst_129 = arith.constant dense<0.000000e+00> : vector<34x8xf32>
    %352 = tpu.matmul %350, %351, %cst_129 {dimension_numbers = #tpu.dot_dimension_numbers<[1], [0], [0], [1], [0, 0, 1, 1], [], []>} : vector<34x34xbf16>, vector<34x8xbf16>, vector<34x8xf32> -> vector<34x8xf32>
    %353 = vector.extract_strided_slice %268 {offsets = [24, 0], sizes = [8, 32], strides = [1, 1]} : vector<32x32xf32> to vector<8x32xf32>
    %354 = arith.truncf %352 : vector<34x8xf32> to vector<34x8xbf16>
    %355 = arith.truncf %353 : vector<8x32xf32> to vector<8x32xbf16>
    %cst_130 = arith.constant dense<0.000000e+00> : vector<34x32xf32>
    %356 = tpu.matmul %354, %355, %cst_130 {dimension_numbers = #tpu.dot_dimension_numbers<[1], [0], [0], [1], [0, 0, 1, 1], [], []>} : vector<34x8xbf16>, vector<8x32xbf16>, vector<34x32xf32> -> vector<34x32xf32>
    %357 = arith.addf %335, %356 : vector<34x32xf32>
    %358 = arith.addf %223, %357 : vector<34x32xf32>
    %c1_131 = arith.constant 1 : index
    %c0_132 = arith.constant 0 : index
    %c0_133 = arith.constant 0 : index
    %359 = vector.load %arg15[%c1_131, %c0_132, %c0_133] : memref<2x1x32xf32, #tpu.memory_space<vmem>>, vector<1x1x32xf32>
    %360 = vector.shape_cast %359 : vector<1x1x32xf32> to vector<1x32xf32>
    %361 = vector.broadcast %360 : vector<1x32xf32> to vector<34x32xf32>
    %362 = arith.addf %358, %361 : vector<34x32xf32>
    %c1_134 = arith.constant 1 : index
    %c0_135 = arith.constant 0 : index
    %c0_136 = arith.constant 0 : index
    %363 = vector.load %arg16[%c1_134, %c0_135, %c0_136] : memref<2x1x32xf32, #tpu.memory_space<vmem>>, vector<1x1x32xf32>
    %364 = vector.shape_cast %363 : vector<1x1x32xf32> to vector<1x32xf32>
    %c1_137 = arith.constant 1 : index
    %c0_138 = arith.constant 0 : index
    %c0_139 = arith.constant 0 : index
    %365 = vector.load %arg17[%c1_137, %c0_138, %c0_139] : memref<2x1x32xf32, #tpu.memory_space<vmem>>, vector<1x1x32xf32>
    %366 = vector.shape_cast %365 : vector<1x1x32xf32> to vector<1x32xf32>
    %cst_140 = arith.constant dense<0.000000e+00> : vector<34xf32>
    %367 = vector.multi_reduction <add>, %362, %cst_140 [1] : vector<34x32xf32> to vector<34xf32>
    %368 = vector.shape_cast %367 : vector<34xf32> to vector<34x1xf32>
    %cst_141 = arith.constant 3.200000e+01 : f32
    %369 = vector.broadcast %cst_141 : f32 to vector<34x1xf32>
    %370 = arith.divf %368, %369 : vector<34x1xf32>
    %371 = vector.broadcast %370 : vector<34x1xf32> to vector<34x32xf32>
    %372 = arith.subf %362, %371 : vector<34x32xf32>
    %373 = arith.mulf %372, %372 : vector<34x32xf32>
    %cst_142 = arith.constant dense<0.000000e+00> : vector<34xf32>
    %374 = vector.multi_reduction <add>, %373, %cst_142 [1] : vector<34x32xf32> to vector<34xf32>
    %375 = vector.shape_cast %374 : vector<34xf32> to vector<34x1xf32>
    %cst_143 = arith.constant 3.200000e+01 : f32
    %376 = vector.broadcast %cst_143 : f32 to vector<34x1xf32>
    %377 = arith.divf %375, %376 : vector<34x1xf32>
    %378 = vector.broadcast %370 : vector<34x1xf32> to vector<34x32xf32>
    %379 = arith.subf %362, %378 : vector<34x32xf32>
    %cst_144 = arith.constant 9.99999974E-6 : f32
    %380 = vector.broadcast %cst_144 : f32 to vector<34x1xf32>
    %381 = arith.addf %377, %380 : vector<34x1xf32>
    %382 = math.rsqrt %381 : vector<34x1xf32>
    %383 = vector.broadcast %382 : vector<34x1xf32> to vector<34x32xf32>
    %384 = arith.mulf %379, %383 : vector<34x32xf32>
    %385 = vector.broadcast %364 : vector<1x32xf32> to vector<34x32xf32>
    %386 = arith.mulf %384, %385 : vector<34x32xf32>
    %387 = vector.broadcast %366 : vector<1x32xf32> to vector<34x32xf32>
    %388 = arith.addf %386, %387 : vector<34x32xf32>
    %c1_145 = arith.constant 1 : index
    %c0_146 = arith.constant 0 : index
    %c0_147 = arith.constant 0 : index
    %389 = vector.load %arg18[%c1_145, %c0_146, %c0_147] : memref<2x32x128xf32, #tpu.memory_space<vmem>>, vector<1x32x128xf32>
    %390 = vector.shape_cast %389 : vector<1x32x128xf32> to vector<32x128xf32>
    %391 = arith.truncf %388 : vector<34x32xf32> to vector<34x32xbf16>
    %392 = arith.truncf %390 : vector<32x128xf32> to vector<32x128xbf16>
    %cst_148 = arith.constant dense<0.000000e+00> : vector<34x128xf32>
    %393 = tpu.matmul %391, %392, %cst_148 {dimension_numbers = #tpu.dot_dimension_numbers<[1], [0], [0], [1], [0, 0, 1, 1], [], []>} : vector<34x32xbf16>, vector<32x128xbf16>, vector<34x128xf32> -> vector<34x128xf32>
    %c1_149 = arith.constant 1 : index
    %c0_150 = arith.constant 0 : index
    %c0_151 = arith.constant 0 : index
    %394 = vector.load %arg19[%c1_149, %c0_150, %c0_151] : memref<2x1x128xf32, #tpu.memory_space<vmem>>, vector<1x1x128xf32>
    %395 = vector.shape_cast %394 : vector<1x1x128xf32> to vector<1x128xf32>
    %396 = vector.broadcast %395 : vector<1x128xf32> to vector<34x128xf32>
    %397 = arith.addf %393, %396 : vector<34x128xf32>
    %398 = arith.mulf %397, %397 : vector<34x128xf32>
    %399 = arith.mulf %397, %398 : vector<34x128xf32>
    %cst_152 = arith.constant 4.471500e-02 : f32
    %400 = vector.broadcast %cst_152 : f32 to vector<34x128xf32>
    %401 = arith.mulf %400, %399 : vector<34x128xf32>
    %402 = arith.addf %397, %401 : vector<34x128xf32>
    %cst_153 = arith.constant 0.797884583 : f32
    %403 = vector.broadcast %cst_153 : f32 to vector<34x128xf32>
    %404 = arith.mulf %403, %402 : vector<34x128xf32>
    %405 = math.tanh %404 : vector<34x128xf32>
    %cst_154 = arith.constant 1.000000e+00 : f32
    %406 = vector.broadcast %cst_154 : f32 to vector<34x128xf32>
    %407 = arith.addf %406, %405 : vector<34x128xf32>
    %cst_155 = arith.constant 5.000000e-01 : f32
    %408 = vector.broadcast %cst_155 : f32 to vector<34x128xf32>
    %409 = arith.mulf %408, %407 : vector<34x128xf32>
    %410 = arith.mulf %397, %409 : vector<34x128xf32>
    %c1_156 = arith.constant 1 : index
    %c0_157 = arith.constant 0 : index
    %c0_158 = arith.constant 0 : index
    %411 = vector.load %arg20[%c1_156, %c0_157, %c0_158] : memref<2x128x32xf32, #tpu.memory_space<vmem>>, vector<1x128x32xf32>
    %412 = vector.shape_cast %411 : vector<1x128x32xf32> to vector<128x32xf32>
    %413 = arith.truncf %410 : vector<34x128xf32> to vector<34x128xbf16>
    %414 = arith.truncf %412 : vector<128x32xf32> to vector<128x32xbf16>
    %cst_159 = arith.constant dense<0.000000e+00> : vector<34x32xf32>
    %415 = tpu.matmul %413, %414, %cst_159 {dimension_numbers = #tpu.dot_dimension_numbers<[1], [0], [0], [1], [0, 0, 1, 1], [], []>} : vector<34x128xbf16>, vector<128x32xbf16>, vector<34x32xf32> -> vector<34x32xf32>
    %416 = arith.addf %362, %415 : vector<34x32xf32>
    %c1_160 = arith.constant 1 : index
    %c0_161 = arith.constant 0 : index
    %c0_162 = arith.constant 0 : index
    %417 = vector.load %arg21[%c1_160, %c0_161, %c0_162] : memref<2x1x32xf32, #tpu.memory_space<vmem>>, vector<1x1x32xf32>
    %418 = vector.shape_cast %417 : vector<1x1x32xf32> to vector<1x32xf32>
    %419 = vector.broadcast %418 : vector<1x32xf32> to vector<34x32xf32>
    %420 = arith.addf %416, %419 : vector<34x32xf32>
    %c0_163 = arith.constant 0 : index
    %c0_164 = arith.constant 0 : index
    %421 = vector.load %arg22[%c0_163, %c0_164] : memref<1x32xf32, #tpu.memory_space<vmem>>, vector<1x32xf32>
    %c0_165 = arith.constant 0 : index
    %c0_166 = arith.constant 0 : index
    %422 = vector.load %arg23[%c0_165, %c0_166] : memref<1x32xf32, #tpu.memory_space<vmem>>, vector<1x32xf32>
    %cst_167 = arith.constant dense<0.000000e+00> : vector<34xf32>
    %423 = vector.multi_reduction <add>, %420, %cst_167 [1] : vector<34x32xf32> to vector<34xf32>
    %424 = vector.shape_cast %423 : vector<34xf32> to vector<34x1xf32>
    %cst_168 = arith.constant 3.200000e+01 : f32
    %425 = vector.broadcast %cst_168 : f32 to vector<34x1xf32>
    %426 = arith.divf %424, %425 : vector<34x1xf32>
    %427 = vector.broadcast %426 : vector<34x1xf32> to vector<34x32xf32>
    %428 = arith.subf %420, %427 : vector<34x32xf32>
    %429 = arith.mulf %428, %428 : vector<34x32xf32>
    %cst_169 = arith.constant dense<0.000000e+00> : vector<34xf32>
    %430 = vector.multi_reduction <add>, %429, %cst_169 [1] : vector<34x32xf32> to vector<34xf32>
    %431 = vector.shape_cast %430 : vector<34xf32> to vector<34x1xf32>
    %cst_170 = arith.constant 3.200000e+01 : f32
    %432 = vector.broadcast %cst_170 : f32 to vector<34x1xf32>
    %433 = arith.divf %431, %432 : vector<34x1xf32>
    %434 = vector.broadcast %426 : vector<34x1xf32> to vector<34x32xf32>
    %435 = arith.subf %420, %434 : vector<34x32xf32>
    %cst_171 = arith.constant 9.99999974E-6 : f32
    %436 = vector.broadcast %cst_171 : f32 to vector<34x1xf32>
    %437 = arith.addf %433, %436 : vector<34x1xf32>
    %438 = math.rsqrt %437 : vector<34x1xf32>
    %439 = vector.broadcast %438 : vector<34x1xf32> to vector<34x32xf32>
    %440 = arith.mulf %435, %439 : vector<34x32xf32>
    %441 = vector.broadcast %421 : vector<1x32xf32> to vector<34x32xf32>
    %442 = arith.mulf %440, %441 : vector<34x32xf32>
    %443 = vector.broadcast %422 : vector<1x32xf32> to vector<34x32xf32>
    %444 = arith.addf %442, %443 : vector<34x32xf32>
    %c0_172 = arith.constant 0 : index
    %c0_173 = arith.constant 0 : index
    %445 = vector.load %arg24[%c0_172, %c0_173] : memref<32x48xf32, #tpu.memory_space<vmem>>, vector<32x48xf32>
    %446 = arith.truncf %444 : vector<34x32xf32> to vector<34x32xbf16>
    %447 = arith.truncf %445 : vector<32x48xf32> to vector<32x48xbf16>
    %cst_174 = arith.constant dense<0.000000e+00> : vector<34x48xf32>
    %448 = tpu.matmul %446, %447, %cst_174 {dimension_numbers = #tpu.dot_dimension_numbers<[1], [0], [0], [1], [0, 0, 1, 1], [], []>} : vector<34x32xbf16>, vector<32x48xbf16>, vector<34x48xf32> -> vector<34x48xf32>
    %c0_175 = arith.constant 0 : index
    %c0_176 = arith.constant 0 : index
    %449 = vector.load %arg25[%c0_175, %c0_176] : memref<1x48xf32, #tpu.memory_space<vmem>>, vector<1x48xf32>
    %450 = vector.broadcast %449 : vector<1x48xf32> to vector<34x48xf32>
    %451 = arith.addf %448, %450 : vector<34x48xf32>
    %c0_177 = arith.constant 0 : index
    %c0_178 = arith.constant 0 : index
    %452 = vector.load %arg4[%c0_177, %c0_178] : memref<32x34xf32, #tpu.memory_space<vmem>>, vector<32x34xf32>
    %cst_179 = arith.constant dense<0.000000e+00> : vector<32x48xf32>
    %453 = tpu.matmul %452, %451, %cst_179 {dimension_numbers = #tpu.dot_dimension_numbers<[1], [0], [0], [1], [0, 0, 1, 1], [], []>} : vector<32x34xf32>, vector<34x48xf32>, vector<32x48xf32> -> vector<32x48xf32>
    %c0_180 = arith.constant 0 : index
    %c0_181 = arith.constant 0 : index
    %454 = vector.load %arg26[%c0_180, %c0_181] : memref<32x48xf32, #tpu.memory_space<vmem>>, vector<32x48xf32>
    tpu.vector_store %arg26[%c0_180, %c0_181], %453 {strides = array<i32>} : memref<32x48xf32, #tpu.memory_space<vmem>>, vector<32x48xf32>,
    %c0_182 = arith.constant 0 : index
    %c0_183 = arith.constant 0 : index
    %455 = vector.load %arg5[%c0_182, %c0_183] : memref<32x48xf32, #tpu.memory_space<vmem>>, vector<32x48xf32>
    %456 = arith.subf %453, %455 : vector<32x48xf32>
    %457 = arith.mulf %456, %456 : vector<32x48xf32>
    %cst_184 = arith.constant dense<0.000000e+00> : vector<32xf32>
    %458 = vector.multi_reduction <add>, %457, %cst_184 [1] : vector<32x48xf32> to vector<32xf32>
    %459 = vector.shape_cast %458 : vector<32xf32> to vector<32x1xf32>
    %cst_185 = arith.constant 4.800000e+01 : f32
    %460 = vector.broadcast %cst_185 : f32 to vector<32x1xf32>
    %461 = arith.divf %459, %460 : vector<32x1xf32>
    %c0_186 = arith.constant 0 : index
    %c0_187 = arith.constant 0 : index
    %462 = vector.load %arg6[%c0_186, %c0_187] : memref<32x1xf32, #tpu.memory_space<vmem>>, vector<32x1xf32>
    %463 = arith.mulf %461, %462 : vector<32x1xf32>
    %464 = vector.shape_cast %463 : vector<32x1xf32> to vector<1x32x1xf32>
    %cst_188 = arith.constant dense<0.000000e+00> : vector<1xf32>
    %465 = vector.multi_reduction <add>, %464, %cst_188 [1, 2] : vector<1x32x1xf32> to vector<1xf32>
    %466 = vector.shape_cast %465 : vector<1xf32> to vector<1x1x1xf32>
    %467 = vector.extract %466[0, 0, 0] : f32 from vector<1x1x1xf32>
    %468 = vector.shape_cast %462 : vector<32x1xf32> to vector<1x32x1xf32>
    %cst_189 = arith.constant dense<0.000000e+00> : vector<1xf32>
    %469 = vector.multi_reduction <add>, %468, %cst_189 [1, 2] : vector<1x32x1xf32> to vector<1xf32>
    %470 = vector.shape_cast %469 : vector<1xf32> to vector<1x1x1xf32>
    %471 = vector.extract %470[0, 0, 0] : f32 from vector<1x1x1xf32>
    %472 = arith.divf %467, %471 : f32
    %cst_190 = arith.constant 1.000000e+00 : f32
    %473 = vector.broadcast %cst_190 : f32 to vector<1x1xf32>
    %474 = vector.broadcast %472 : f32 to vector<1x1xf32>
    %475 = arith.mulf %474, %473 : vector<1x1xf32>
    %c0_191 = arith.constant 0 : index
    %c0_192 = arith.constant 0 : index
    %476 = vector.load %arg27[%c0_191, %c0_192] : memref<1x1xf32, #tpu.memory_space<vmem>>, vector<1x1xf32>
    tpu.vector_store %arg27[%c0_191, %c0_192], %475 {strides = array<i32>} : memref<1x1xf32, #tpu.memory_space<vmem>>, vector<1x1xf32>,
    return
  }
}

</mosaic_0001>

<llo_original>
// kernel: tile.9
$region0: #{tile.9}
  %s0 = inlined_call_operand.vmem [shape: f32[2,17,32], index: 0, kind: input, shape index: {}]
  %s1 = inlined_call_operand.vmem [shape: f32[34,32], index: 1, kind: output, shape index: {}]
  %v2 = vld [vmem:[%s0] sm:$0xff]
  %vm3 = vcmask 261120
  %4 = vst.msk [vmem:[%s1] sm:$0xff] %vm3, %v2
  %s5 = scalar_lea.vmem %s0, 8
  %v6 = vld [vmem:[%s5] sm:$0xff]
  %vm7 = vcmask 261120
  %s8 = scalar_lea.vmem %s1, 8
  %9 = vst.msk [vmem:[%s8] sm:$0xff] %vm7, %v6
  %s10 = scalar_lea.vmem %s0, 16
  %s11 = smov 3
  %v12 = vld [vmem:[%s10] ss:$8 sm:%s11]
  %vm13 = vcmask 261120
  %s14 = scalar_lea.vmem %s1, 16
  %15 = vst.msk [vmem:[%s14] sm:$0x3] %vm13, %v12
  %s16 = scalar_lea.vmem %s0, 25
  %v17 = vld [vmem:[%s16] sm:$0xff]
  %vm18 = vcmask 261120
  %s19 = scalar_lea.vmem %s1, 18
  %20 = vst.msk [vmem:[%s19] sm:$0xff] %vm18, %v17
  %s21 = scalar_lea.vmem %s0, 33
  %v22 = vld [vmem:[%s21] sm:$0xff]
  %vm23 = vcmask 261120
  %s24 = scalar_lea.vmem %s1, 26
  %25 = vst.msk [vmem:[%s24] sm:$0xff] %vm23, %v22

// kernel: forward.1
$region0: #{forward.1}
  #allocation0 [shape = 'u32[]', space=smem, size = 0x4, offset = 0x4, fixed_abs, tag = 'smem constant byte address 0x4 - core index']
  #allocation1 [shape = 'u32[144,128]{1,0:T(1,128)}', space=vmem, size = 0x12000, scoped, tag = 'internal scratch']
  %s0 = inlined_call_operand.vmem [shape: f32[32,48], index: 0, kind: input, shape index: {}]
  %s1 = inlined_call_operand.vmem [shape: s32[34,1], index: 1, kind: input, shape index: {}]
  %s2 = inlined_call_operand.vmem [shape: f32[34,32], index: 2, kind: input, shape index: {}]
  %s3 = inlined_call_operand.vmem [shape: f32[34,34], index: 3, kind: input, shape index: {}]
  %s4 = inlined_call_operand.vmem [shape: f32[32,34], index: 4, kind: input, shape index: {}]
  %s5 = inlined_call_operand.vmem [shape: f32[32,48], index: 5, kind: input, shape index: {}]
  %s6 = inlined_call_operand.vmem [shape: f32[32,1], index: 6, kind: input, shape index: {}]
  %s7 = inlined_call_operand.vmem [shape: f32[48,32], index: 7, kind: input, shape index: {}]
  %s8 = inlined_call_operand.vmem [shape: f32[1,32], index: 8, kind: input, shape index: {}]
  %s9 = inlined_call_operand.vmem [shape: f32[1,32], index: 9, kind: input, shape index: {}]
  %s10 = inlined_call_operand.vmem [shape: f32[2,1,32], index: 10, kind: input, shape index: {}]
  %s11 = inlined_call_operand.vmem [shape: f32[2,1,32], index: 11, kind: input, shape index: {}]
  %s12 = inlined_call_operand.vmem [shape: f32[2,32,96], index: 12, kind: input, shape index: {}]
  %s13 = inlined_call_operand.vmem [shape: f32[2,1,96], index: 13, kind: input, shape index: {}]
  %s14 = inlined_call_operand.vmem [shape: f32[2,32,32], index: 14, kind: input, shape index: {}]
  %s15 = inlined_call_operand.vmem [shape: f32[2,1,32], index: 15, kind: input, shape index: {}]
  %s16 = inlined_call_operand.vmem [shape: f32[2,1,32], index: 16, kind: input, shape index: {}]
  %s17 = inlined_call_operand.vmem [shape: f32[2,1,32], index: 17, kind: input, shape index: {}]
  %s18 = inlined_call_operand.vmem [shape: f32[2,32,128], index: 18, kind: input, shape index: {}]
  %s19 = inlined_call_operand.vmem [shape: f32[2,1,128], index: 19, kind: input, shape index: {}]
  %s20 = inlined_call_operand.vmem [shape: f32[2,128,32], index: 20, kind: input, shape index: {}]
  %s21 = inlined_call_operand.vmem [shape: f32[2,1,32], index: 21, kind: input, shape index: {}]
  %s22 = inlined_call_operand.vmem [shape: f32[1,32], index: 22, kind: input, shape index: {}]
  %s23 = inlined_call_operand.vmem [shape: f32[1,32], index: 23, kind: input, shape index: {}]
  %s24 = inlined_call_operand.vmem [shape: f32[32,48], index: 24, kind: input, shape index: {}]
  %s25 = inlined_call_operand.vmem [shape: f32[1,48], index: 25, kind: input, shape index: {}]
  %s26 = inlined_call_operand.hbm [shape: f32[32,48], index: 26, kind: output, shape index: {0}]
  %s27 = inlined_call_operand.hbm [shape: f32[1,1], index: 27, kind: output, shape index: {1}]
  %28 = xla_tuple %s26, %s27
  %s29 = sld [smem:[#allocation0]]
  $region122: #{forward.1} parent=0
    _
  %s31 = ssub.s32 1, %s29
  %s32 = scalar_select 0, %s31, %s29
  $region1: #{forward.1} parent=0
    #allocation2 [shape = 'u8[16384]{0}', space=vmem, size = 0x4000, scoped, tag = 'output window, operand 0, single buffered']
    #allocation3 [shape = 's32[1]{0}', space=sflag, size = 0x4, scoped, tag = 'scoped memory for forward.1']
    #allocation4 [shape = 'u8[512]{0}', space=vmem, size = 0x400, scoped, tag = 'output window, operand 1, single buffered']
    #allocation5 [shape = 's32[1]{0}', space=sflag, size = 0x4, scoped, tag = 'scoped memory for forward.1']
    %33 = vsyncpa [#allocation3], 0
    %34 = vsyncpa [#allocation5], 0
    // Predicated region
    $region2: #{forward.1} parent=1 // pred_check
      _
    $region3: #{forward.1} parent=1 // pred_check_branch
      %36 = sbr.rel (0) target = $region5
    $region4: #{forward.1} parent=1 // pred_region
      _
    $region5: #{forward.1} parent=1 // pred_fallthru
      _
    // Predicated region
    $region6: #{forward.1} parent=1 // pred_check
      _
    $region7: #{forward.1} parent=1 // pred_check_branch
      %38 = sbr.rel (0) target = $region9
    $region8: #{forward.1} parent=1 // pred_region
      _
    $region9: #{forward.1} parent=1 // pred_fallthru
      _
    // Predicated region
    $region10: #{forward.1} parent=1 // pred_check
      _
    $region11: #{forward.1} parent=1 // pred_check_branch
      %40 = sbr.rel (0) target = $region13
    $region12: #{forward.1} parent=1 // pred_region
      _
    $region13: #{forward.1} parent=1 // pred_fallthru
      _
    // Predicated region
    $region14: #{forward.1} parent=1 // pred_check
      _
    $region15: #{forward.1} parent=1 // pred_check_branch
      %42 = sbr.rel (0) target = $region17
    $region16: #{forward.1} parent=1 // pred_region
      _
    $region17: #{forward.1} parent=1 // pred_fallthru
      _
    // Predicated region
    $region18: #{forward.1} parent=1 // pred_check
      _
    $region19: #{forward.1} parent=1 // pred_check_branch
      %44 = sbr.rel (0) target = $region21
    $region20: #{forward.1} parent=1 // pred_region
      _
    $region21: #{forward.1} parent=1 // pred_fallthru
      _
    // Predicated region
    $region22: #{forward.1} parent=1 // pred_check
      _
    $region23: #{forward.1} parent=1 // pred_check_branch
      %46 = sbr.rel (0) target = $region25
    $region24: #{forward.1} parent=1 // pred_region
      _
    $region25: #{forward.1} parent=1 // pred_fallthru
      _
    // Predicated region
    $region26: #{forward.1} parent=1 // pred_check
      _
    $region27: #{forward.1} parent=1 // pred_check_branch
      %48 = sbr.rel (0) target = $region29
    $region28: #{forward.1} parent=1 // pred_region
      _
    $region29: #{forward.1} parent=1 // pred_fallthru
      _
    // Predicated region
    $region30: #{forward.1} parent=1 // pred_check
      _
    $region31: #{forward.1} parent=1 // pred_check_branch
      %50 = sbr.rel (0) target = $region33
    $region32: #{forward.1} parent=1 // pred_region
      _
    $region33: #{forward.1} parent=1 // pred_fallthru
      _
    // Predicated region
    $region34: #{forward.1} parent=1 // pred_check
      _
    $region35: #{forward.1} parent=1 // pred_check_branch
      %52 = sbr.rel (0) target = $region37
    $region36: #{forward.1} parent=1 // pred_region
      _
    $region37: #{forward.1} parent=1 // pred_fallthru
      _
    // Predicated region
    $region38: #{forward.1} parent=1 // pred_check
      _
    $region39: #{forward.1} parent=1 // pred_check_branch
      %54 = sbr.rel (0) target = $region41
    $region40: #{forward.1} parent=1 // pred_region
      _
    $region41: #{forward.1} parent=1 // pred_fallthru
      _
    // Predicated region
    $region42: #{forward.1} parent=1 // pred_check
      _
    $region43: #{forward.1} parent=1 // pred_check_branch
      %56 = sbr.rel (0) target = $region45
    $region44: #{forward.1} parent=1 // pred_region
      _
    $region45: #{forward.1} parent=1 // pred_fallthru
      _
    // Predicated region
    $region46: #{forward.1} parent=1 // pred_check
      _
    $region47: #{forward.1} parent=1 // pred_check_branch
      %58 = sbr.rel (0) target = $region49
    $region48: #{forward.1} parent=1 // pred_region
      _
    $region49: #{forward.1} parent=1 // pred_fallthru
      _
    // Predicated region
    $region50: #{forward.1} parent=1 // pred_check
      _
    $region51: #{forward.1} parent=1 // pred_check_branch
      %60 = sbr.rel (0) target = $region53
    $region52: #{forward.1} parent=1 // pred_region
      _
    $region53: #{forward.1} parent=1 // pred_fallthru
      _
    // Predicated region
    $region54: #{forward.1} parent=1 // pred_check
      _
    $region55: #{forward.1} parent=1 // pred_check_branch
      %62 = sbr.rel (0) target = $region57
    $region56: #{forward.1} parent=1 // pred_region
      _
    $region57: #{forward.1} parent=1 // pred_fallthru
      _
    // Predicated region
    $region58: #{forward.1} parent=1 // pred_check
      _
    $region59: #{forward.1} parent=1 // pred_check_branch
      %64 = sbr.rel (0) target = $region61
    $region60: #{forward.1} parent=1 // pred_region
      _
    $region61: #{forward.1} parent=1 // pred_fallthru
      _
    // Predicated region
    $region62: #{forward.1} parent=1 // pred_check
      _
    $region63: #{forward.1} parent=1 // pred_check_branch
      %66 = sbr.rel (0) target = $region65
    $region64: #{forward.1} parent=1 // pred_region
      _
    $region65: #{forward.1} parent=1 // pred_fallthru
      _
    // Predicated region
    $region66: #{forward.1} parent=1 // pred_check
      _
    $region67: #{forward.1} parent=1 // pred_check_branch
      %68 = sbr.rel (0) target = $region69
    $region68: #{forward.1} parent=1 // pred_region
      _
    $region69: #{forward.1} parent=1 // pred_fallthru
      _
    // Predicated region
    $region70: #{forward.1} parent=1 // pred_check
      _
    $region71: #{forward.1} parent=1 // pred_check_branch
      %70 = sbr.rel (0) target = $region73
    $region72: #{forward.1} parent=1 // pred_region
      _
    $region73: #{forward.1} parent=1 // pred_fallthru
      _
    // Predicated region
    $region74: #{forward.1} parent=1 // pred_check
      _
    $region75: #{forward.1} parent=1 // pred_check_branch
      %72 = sbr.rel (0) target = $region77
    $region76: #{forward.1} parent=1 // pred_region
      _
    $region77: #{forward.1} parent=1 // pred_fallthru
      _
    // Predicated region
    $region78: #{forward.1} parent=1 // pred_check
      _
    $region79: #{forward.1} parent=1 // pred_check_branch
      %74 = sbr.rel (0) target = $region81
    $region80: #{forward.1} parent=1 // pred_region
      _
    $region81: #{forward.1} parent=1 // pred_fallthru
      _
    // Predicated region
    $region82: #{forward.1} parent=1 // pred_check
      _
    $region83: #{forward.1} parent=1 // pred_check_branch
      %76 = sbr.rel (0) target = $region85
    $region84: #{forward.1} parent=1 // pred_region
      _
    $region85: #{forward.1} parent=1 // pred_fallthru
      _
    // Predicated region
    $region86: #{forward.1} parent=1 // pred_check
      _
    $region87: #{forward.1} parent=1 // pred_check_branch
      %78 = sbr.rel (0) target = $region89
    $region88: #{forward.1} parent=1 // pred_region
      _
    $region89: #{forward.1} parent=1 // pred_fallthru
      _
    // Predicated region
    $region90: #{forward.1} parent=1 // pred_check
      _
    $region91: #{forward.1} parent=1 // pred_check_branch
      %80 = sbr.rel (0) target = $region93
    $region92: #{forward.1} parent=1 // pred_region
      _
    $region93: #{forward.1} parent=1 // pred_fallthru
      _
    // Predicated region
    $region94: #{forward.1} parent=1 // pred_check
      _
    $region95: #{forward.1} parent=1 // pred_check_branch
      %82 = sbr.rel (0) target = $region97
    $region96: #{forward.1} parent=1 // pred_region
      _
    $region97: #{forward.1} parent=1 // pred_fallthru
      _
    // Predicated region
    $region98: #{forward.1} parent=1 // pred_check
      _
    $region99: #{forward.1} parent=1 // pred_check_branch
      %84 = sbr.rel (0) target = $region101
    $region100: #{forward.1} parent=1 // pred_region
      _
    $region101: #{forward.1} parent=1 // pred_fallthru
      _
    // Predicated region
    $region102: #{forward.1} parent=1 // pred_check
      _
    $region103: #{forward.1} parent=1 // pred_check_branch
      %86 = sbr.rel (0) target = $region105
    $region104: #{forward.1} parent=1 // pred_region
      _
    $region105: #{forward.1} parent=1 // pred_fallthru
      _
    %v88 = vld [vmem:[%s0] sm:$0xff]
    %v89 = vld [vmem:[%s0 + $0x8] sm:$0xff]
    %v90 = vld [vmem:[%s0 + $0x10] sm:$0xff]
    %v91 = vld [vmem:[%s0 + $0x18] sm:$0xff]
    %v92 = vld [vmem:[%s7] sm:$0xff]
    %v93 = vld [vmem:[%s7 + $0x8] sm:$0xff]
    %v94 = vld [vmem:[%s7 + $0x10] sm:$0xff]
    %v95 = vld [vmem:[%s7 + $0x18] sm:$0xff]
    %v96 = vld [vmem:[%s7 + $0x20] sm:$0xff]
    %v97 = vld [vmem:[%s7 + $0x28] sm:$0xff]
    %v98 = vpack.c.bf16 %v89, %v88
    %v99 = vpack.c.bf16 %v91, %v90
    %v100 = vpack.c.bf16 %v93, %v92
    %v101 = vpack.c.bf16 %v95, %v94
    %v102 = vpack.c.bf16 %v97, %v96
    %v103 = vld [vmem:[%s8] sm:$0x1]
    %v105 = vlaneseq
    %v106 = vshrl.u32 %v105, 7
    %v107 = vsub.s32 0, %v106
    %v108 = vrot.slane %v103, %v107
    %vm110 = vcmask 392192
    %v112 = vsel %vm110, %v98, 0
    %v115 = vsel %vm110, %v99, 0
    %117 = vmatprep.subr.bf16.mxu0 0
    %118 = vmatpush1.bf16.msra.mxu0 %v100
    %119 = vmatprep.subr.bf16.mxu0 0
    %120 = vmatpush1.bf16.msra.mxu0 %v101
    %121 = vmatprep.subr.bf16.mxu0 0
    %122 = vmatpush1.bf16.msra.mxu0 %v102
    %123 = vmatprep.subr.bf16.mxu0 0
    %124 = vmatpush1.bf16.msra.mxu0 0
    %125 = vmatprep.subr.bf16.mxu0 0
    %126 = vmatpush1.bf16.msra.mxu0 0
    %127 = vmatprep.subr.bf16.mxu0 0
    %128 = vmatpush1.bf16.msra.mxu0 0
    %129 = vmatprep.subr.bf16.mxu0 0
    %130 = vmatpush1.bf16.msra.mxu0 0
    %131 = vmatprep.subr.bf16.mxu0 0
    %132 = vmatpush1.bf16.msra.mxu0 0
    %133 = vmatprep.subr.bf16.mxu0 0
    %134 = vmatpush1.bf16.msra.mxu0 0
    %135 = vmatprep.subr.bf16.mxu0 0
    %136 = vmatpush1.bf16.msra.mxu0 0
    %137 = vmatprep.subr.bf16.mxu0 0
    %138 = vmatpush1.bf16.msra.mxu0 0
    %139 = vmatprep.subr.bf16.mxu0 0
    %140 = vmatpush1.bf16.msra.mxu0 0
    %141 = vmatprep.subr.bf16.mxu0 0
    %142 = vmatpush1.bf16.msra.mxu0 0
    %143 = vmatprep.subr.bf16.mxu0 0
    %144 = vmatpush1.bf16.msra.mxu0 0
    %145 = vmatprep.subr.bf16.mxu0 0
    %146 = vmatpush1.bf16.msra.mxu0 0
    %147 = vmatprep.subr.bf16.mxu0 0
    %148 = vmatpush1.bf16.msra.mxu0 0
    %149 = vmatprep.mubr.bf16.mxu0 0
    %150 = vmatmul.mubr.bf16.gmra.mrb[0].mxu0 %v112
    %v151 = vpop.f32.mrb[0].mxu0
    %v152 = vadd.f32 %v108, %v151
    %v153 = vpop.f32.mrb[0].mxu0
    %v154 = vpop.f32.mrb[0].mxu0
    %v155 = vadd.f32 %v108, %v154
    %v156 = vpop.f32.mrb[0].mxu0
    %157 = vmatprep.mubr.bf16.mxu0 0
    %158 = vmatmul.mubr.bf16.gmra.mrb[0].mxu0 %v115
    %v159 = vpop.f32.mrb[0].mxu0
    %v160 = vadd.f32 %v108, %v159
    %v161 = vpop.f32.mrb[0].mxu0
    %v162 = vpop.f32.mrb[0].mxu0
    %v163 = vadd.f32 %v108, %v162
    %v164 = vpop.f32.mrb[0].mxu0
    %165 = vdwg.mxu0
    %v166 = vld [vmem:[%s1] sm:$0xff]
    %v167 = vld [vmem:[%s1 + $0x8] sm:$0xff]
    %v168 = vld [vmem:[%s1 + $0x10] sm:$0xff]
    %v169 = vld [vmem:[%s1 + $0x18] sm:$0xff]
    %v170 = vld [vmem:[%s1 + $0x20] sm:$0x3]
    %v171 = vlaneseq
    %v172 = vand.u32 %v171, 127
    %173 = vset.pattern.permute.xlu0 0
    %174 = vperm.xlu0 %173, %v166
    %v175 = vpop.permute.xlu0 %174
    %176 = vset.pattern.permute.xlu0 0
    %177 = vperm.xlu0 %176, %v167
    %v178 = vpop.permute.xlu0 %177
    %179 = vset.pattern.permute.xlu0 0
    %180 = vperm.xlu0 %179, %v168
    %v181 = vpop.permute.xlu0 %180
    %182 = vset.pattern.permute.xlu0 0
    %183 = vperm.xlu0 %182, %v169
    %v184 = vpop.permute.xlu0 %183
    %185 = vset.pattern.permute.xlu0 0
    %186 = vperm.xlu0 %185, %v170
    %v187 = vpop.permute.xlu0 %186
    %vm188 = vcmp.eq.s32.totalorder %v172, %v175
    %vm189 = vcmp.eq.s32.totalorder %v172, %v178
    %vm190 = vcmp.eq.s32.totalorder %v172, %v181
    %vm191 = vcmp.eq.s32.totalorder %v172, %v184
    %vm192 = vcmp.eq.s32.totalorder %v172, %v187
    %v193 = vsel %vm188, 1, 0
    %v194 = vsel %vm189, 1, 0
    %v195 = vsel %vm190, 1, 0
    %v196 = vsel %vm191, 1, 0
    %v197 = vsel %vm192, 1, 0
    %v198 = vcvt.s32.f32 %v193
    %v199 = vcvt.s32.f32 %v194
    %v200 = vcvt.s32.f32 %v195
    %v201 = vcvt.s32.f32 %v196
    %v202 = vcvt.s32.f32 %v197
    %vm203 = vcmp.lt.s32.totalorder %v166, 0
    %vm204 = vcmp.lt.s32.totalorder %v167, 0
    %vm205 = vcmp.lt.s32.totalorder %v168, 0
    %vm206 = vcmp.lt.s32.totalorder %v169, 0
    %vm207 = vcmp.lt.s32.totalorder %v170, 0
    %v208 = vsel %vm203, 1, 0
    %v209 = vsel %vm204, 1, 0
    %v210 = vsel %vm205, 1, 0
    %v211 = vsel %vm206, 1, 0
    %v212 = vsel %vm207, 1, 0
    %v213 = vcvt.s32.f32 %v208
    %v214 = vcvt.s32.f32 %v209
    %v215 = vcvt.s32.f32 %v210
    %v216 = vcvt.s32.f32 %v211
    %v217 = vcvt.s32.f32 %v212
    %v218 = vld [vmem:[%s9] sm:$0x1]
    %220 = vset.pattern.permute.xlu0 0
    %221 = vperm.xlu0 %220, %v213
    %v222 = vpop.permute.xlu0 %221
    %225 = vset.pattern.permute.xlu0 0
    %226 = vperm.xlu0 %225, %v214
    %v227 = vpop.permute.xlu0 %226
    %230 = vset.pattern.permute.xlu0 0
    %231 = vperm.xlu0 %230, %v215
    %v232 = vpop.permute.xlu0 %231
    %235 = vset.pattern.permute.xlu0 0
    %236 = vperm.xlu0 %235, %v216
    %v237 = vpop.permute.xlu0 %236
    %240 = vset.pattern.permute.xlu0 0
    %241 = vperm.xlu0 %240, %v217
    %v242 = vpop.permute.xlu0 %241
    %v245 = vlaneseq
    %v246 = vshrl.u32 %v245, 7
    %v247 = vsub.s32 0, %v246
    %v248 = vrot.slane %v218, %v247
    %v250 = vmul.f32 %v222, %v248
    %v251 = vmul.f32 %v227, %v248
    %v252 = vmul.f32 %v232, %v248
    %v253 = vmul.f32 %v237, %v248
    %v254 = vmul.f32 %v242, %v248
    %vm255 = vcmask 261120
    %v257 = vsel %vm255, %v198, 0
    %v260 = vsel %vm255, %v199, 0
    %v263 = vsel %vm255, %v200, 0
    %v266 = vsel %vm255, %v201, 0
    %v269 = vsel %vm255, %v202, 0
    %271 = vmatprep.subr.mxu0 0.0
    %272 = vmatpush1.msra.mxu0 %v152
    %273 = vmatprep.subr.mxu0 0.0
    %274 = vmatpush1.msra.mxu0 %v155
    %275 = vmatprep.subr.mxu0 0.0
    %276 = vmatpush1.msra.mxu0 %v160
    %277 = vmatprep.subr.mxu0 0.0
    %278 = vmatpush1.msra.mxu0 %v163
    %279 = vmatprep.subr.mxu0 0.0
    %280 = vmatpush1.msra.mxu0 0.0
    %281 = vmatprep.subr.mxu0 0.0
    %282 = vmatpush1.msra.mxu0 0.0
    %283 = vmatprep.subr.mxu0 0.0
    %284 = vmatpush1.msra.mxu0 0.0
    %285 = vmatprep.subr.mxu0 0.0
    %286 = vmatpush1.msra.mxu0 0.0
    %287 = vmatprep.subr.mxu0 0.0
    %288 = vmatpush1.msra.mxu0 0.0
    %289 = vmatprep.subr.mxu0 0.0
    %290 = vmatpush1.msra.mxu0 0.0
    %291 = vmatprep.subr.mxu0 0.0
    %292 = vmatpush1.msra.mxu0 0.0
    %293 = vmatprep.subr.mxu0 0.0
    %294 = vmatpush1.msra.mxu0 0.0
    %295 = vmatprep.subr.mxu0 0.0
    %296 = vmatpush1.msra.mxu0 0.0
    %297 = vmatprep.subr.mxu0 0.0
    %298 = vmatpush1.msra.mxu0 0.0
    %299 = vmatprep.subr.mxu0 0.0
    %300 = vmatpush1.msra.mxu0 0.0
    %301 = vmatprep.subr.mxu0 0.0
    %302 = vmatpush1.msra.mxu0 0.0
    %303 = vmatprep.subr.mxu0 0.0
    %304 = vmatpush1.msra.mxu0 0.0
    %305 = vmatprep.subr.mxu0 0.0
    %306 = vmatpush1.msra.mxu0 0.0
    %307 = vmatprep.subr.mxu0 0.0
    %308 = vmatpush1.msra.mxu0 0.0
    %309 = vmatprep.subr.mxu0 0.0
    %310 = vmatpush1.msra.mxu0 0.0
    %311 = vmatprep.subr.mxu0 0.0
    %312 = vmatpush1.msra.mxu0 0.0
    %313 = vmatprep.subr.mxu0 0.0
    %314 = vmatpush1.msra.mxu0 0.0
    %315 = vmatprep.subr.mxu0 0.0
    %316 = vmatpush1.msra.mxu0 0.0
    %317 = vmatprep.subr.mxu0 0.0
    %318 = vmatpush1.msra.mxu0 0.0
    %319 = vmatprep.subr.mxu0 0.0
    %320 = vmatpush1.msra.mxu0 0.0
    %321 = vmatprep.subr.mxu0 0.0
    %322 = vmatpush1.msra.mxu0 0.0
    %323 = vmatprep.subr.mxu0 0.0
    %324 = vmatpush1.msra.mxu0 0.0
    %325 = vmatprep.subr.mxu0 0.0
    %326 = vmatpush1.msra.mxu0 0.0
    %327 = vmatprep.subr.mxu0 0.0
    %328 = vmatpush1.msra.mxu0 0.0
    %329 = vmatprep.subr.mxu0 0.0
    %330 = vmatpush1.msra.mxu0 0.0
    %331 = vmatprep.subr.mxu0 0.0
    %332 = vmatpush1.msra.mxu0 0.0
    %333 = vmatprep.subr.mxu0 0.0
    %334 = vmatpush1.msra.mxu0 0.0
    %335 = vmatprep.mubr.f32.mxu0 0.0
    %336 = vmatmul.mubr.f32.gmra.mrb[0].mxu0 %v257
    %v337 = vpop.f32.mrb[0].mxu0
    %v338 = vadd.f32 %v250, %v337
    %v339 = vpop.f32.mrb[0].mxu0
    %340 = vmatprep.mubr.f32.mxu0 0.0
    %341 = vmatmul.mubr.f32.gmra.mrb[0].mxu0 %v260
    %v342 = vpop.f32.mrb[0].mxu0
    %v343 = vadd.f32 %v251, %v342
    %v344 = vpop.f32.mrb[0].mxu0
    %345 = vmatprep.mubr.f32.mxu0 0.0
    %346 = vmatmul.mubr.f32.gmra.mrb[0].mxu0 %v263
    %v347 = vpop.f32.mrb[0].mxu0
    %v348 = vadd.f32 %v252, %v347
    %v349 = vpop.f32.mrb[0].mxu0
    %350 = vmatprep.mubr.f32.mxu0 0.0
    %351 = vmatmul.mubr.f32.gmra.mrb[0].mxu0 %v266
    %v352 = vpop.f32.mrb[0].mxu0
    %v353 = vadd.f32 %v253, %v352
    %v354 = vpop.f32.mrb[0].mxu0
    %355 = vmatprep.mubr.f32.mxu0 0.0
    %356 = vmatmul.mubr.f32.gmra.mrb[0].mxu0 %v269
    %v357 = vpop.f32.mrb[0].mxu0
    %v358 = vadd.f32 %v254, %v357
    %v359 = vpop.f32.mrb[0].mxu0
    %360 = vdwg.mxu0
    %v361 = vld [vmem:[%s2] sm:$0xff]
    %v362 = vld [vmem:[%s2 + $0x8] sm:$0xff]
    %v363 = vld [vmem:[%s2 + $0x10] sm:$0xff]
    %v364 = vld [vmem:[%s2 + $0x18] sm:$0xff]
    %v365 = vld [vmem:[%s2 + $0x20] sm:$0x3]
    %v366 = vadd.f32 %v338, %v361
    %v367 = vadd.f32 %v343, %v362
    %v368 = vadd.f32 %v348, %v363
    %v369 = vadd.f32 %v353, %v364
    %v370 = vadd.f32 %v358, %v365
    %v371 = vld [vmem:[%s3] sm:$0xff]
    %v372 = vld [vmem:[%s3 + $0x8] sm:$0xff]
    %v373 = vld [vmem:[%s3 + $0x10] sm:$0xff]
    %v374 = vld [vmem:[%s3 + $0x18] sm:$0xff]
    %v375 = vld [vmem:[%s3 + $0x20] sm:$0x3]
    %v376 = vld [vmem:[%s10] sm:$0x1]
    %v377 = vld [vmem:[%s11] sm:$0x1]
    %v378 = vsel %vm255, %v366, 0.0
    %379 = vadd.xlane.f32.xlu0 %v378
    %v380 = vpop.xlane.xlu0 %379
    %v381 = vsel %vm255, %v367, 0.0
    %382 = vadd.xlane.f32.xlu0 %v381
    %v383 = vpop.xlane.xlu0 %382
    %v384 = vsel %vm255, %v368, 0.0
    %385 = vadd.xlane.f32.xlu0 %v384
    %v386 = vpop.xlane.xlu0 %385
    %v387 = vsel %vm255, %v369, 0.0
    %388 = vadd.xlane.f32.xlu0 %v387
    %v389 = vpop.xlane.xlu0 %388
    %vm390 = vcmask 254976
    %v391 = vsel %vm390, %v370, 0.0
    %392 = vadd.xlane.f32.xlu0 %v391
    %v393 = vpop.xlane.xlu0 %392
    %v394 = vrcp.pop 32.0
    %v395 = vmul.f32 %v380, %v394
    %v396 = vmul.f32 %v383, %v394
    %v397 = vmul.f32 %v386, %v394
    %v398 = vmul.f32 %v389, %v394
    %v399 = vmul.f32 %v393, %v394
    %v400 = vsub.f32 %v366, %v395
    %v401 = vsub.f32 %v367, %v396
    %v402 = vsub.f32 %v368, %v397
    %v403 = vsub.f32 %v369, %v398
    %v404 = vsub.f32 %v370, %v399
    %v405 = vmul.f32 %v400, %v400
    %v406 = vmul.f32 %v401, %v401
    %v407 = vmul.f32 %v402, %v402
    %v408 = vmul.f32 %v403, %v403
    %v409 = vmul.f32 %v404, %v404
    %v410 = vsel %vm255, %v405, 0.0
    %411 = vadd.xlane.f32.xlu0 %v410
    %v412 = vpop.xlane.xlu0 %411
    %v413 = vsel %vm255, %v406, 0.0
    %414 = vadd.xlane.f32.xlu0 %v413
    %v415 = vpop.xlane.xlu0 %414
    %v416 = vsel %vm255, %v407, 0.0
    %417 = vadd.xlane.f32.xlu0 %v416
    %v418 = vpop.xlane.xlu0 %417
    %v419 = vsel %vm255, %v408, 0.0
    %420 = vadd.xlane.f32.xlu0 %v419
    %v421 = vpop.xlane.xlu0 %420
    %v422 = vsel %vm390, %v409, 0.0
    %423 = vadd.xlane.f32.xlu0 %v422
    %v424 = vpop.xlane.xlu0 %423
    %v425 = vmul.f32 %v412, %v394
    %v426 = vmul.f32 %v415, %v394
    %v427 = vmul.f32 %v418, %v394
    %v428 = vmul.f32 %v421, %v394
    %v429 = vmul.f32 %v424, %v394
    %v430 = vadd.f32 %v425, 1e-05
    %v431 = vadd.f32 %v426, 1e-05
    %v432 = vadd.f32 %v427, 1e-05
    %v433 = vadd.f32 %v428, 1e-05
    %v434 = vadd.f32 %v429, 1e-05
    %v435 = vrsqrt.pop %v430
    %v436 = vrsqrt.pop %v431
    %v437 = vrsqrt.pop %v432
    %v438 = vrsqrt.pop %v433
    %v439 = vrsqrt.pop %v434
    %v440 = vmul.f32 %v400, %v435
    %v441 = vmul.f32 %v401, %v436
    %v442 = vmul.f32 %v402, %v437
    %v443 = vmul.f32 %v403, %v438
    %v444 = vmul.f32 %v404, %v439
    %v446 = vlaneseq
    %v447 = vshrl.u32 %v446, 7
    %v448 = vsub.s32 0, %v447
    %v449 = vrot.slane %v376, %v448
    %v451 = vmul.f32 %v440, %v449
    %v452 = vmul.f32 %v441, %v449
    %v453 = vmul.f32 %v442, %v449
    %v454 = vmul.f32 %v443, %v449
    %v455 = vmul.f32 %v444, %v449
    %v457 = vlaneseq
    %v458 = vshrl.u32 %v457, 7
    %v459 = vsub.s32 0, %v458
    %v460 = vrot.slane %v377, %v459
    %v462 = vadd.f32 %v451, %v460
    %v463 = vadd.f32 %v452, %v460
    %v464 = vadd.f32 %v453, %v460
    %v465 = vadd.f32 %v454, %v460
    %v466 = vadd.f32 %v455, %v460
    %v467 = vld [vmem:[%s12] sm:$0xff]
    %v468 = vld [vmem:[%s12 + $0x8] sm:$0xff]
    %v469 = vld [vmem:[%s12 + $0x10] sm:$0xff]
    %v470 = vld [vmem:[%s12 + $0x18] sm:$0xff]
    %v471 = vpack.c.bf16 %v463, %v462
    %v472 = vpack.c.bf16 %v465, %v464
    %v473 = vpack.c.bf16 %v466, %v466
    %v474 = vpack.c.bf16 %v468, %v467
    %v475 = vpack.c.bf16 %v470, %v469
    %v476 = vld [vmem:[%s13] sm:$0x1]
    %v478 = vlaneseq
    %v479 = vshrl.u32 %v478, 7
    %v480 = vsub.s32 0, %v479
    %v481 = vrot.slane %v476, %v480
    %v484 = vsel %vm255, %v471, 0
    %v487 = vsel %vm255, %v472, 0
    %v490 = vsel %vm255, %v473, 0
    %492 = vmatprep.subr.bf16.mxu0 0
    %493 = vmatpush1.bf16.msra.mxu0 %v474
    %494 = vmatprep.subr.bf16.mxu0 0
    %495 = vmatpush1.bf16.msra.mxu0 %v475
    %496 = vmatprep.subr.bf16.mxu0 0
    %497 = vmatpush1.bf16.msra.mxu0 0
    %498 = vmatprep.subr.bf16.mxu0 0
    %499 = vmatpush1.bf16.msra.mxu0 0
    %500 = vmatprep.subr.bf16.mxu0 0
    %501 = vmatpush1.bf16.msra.mxu0 0
    %502 = vmatprep.subr.bf16.mxu0 0
    %503 = vmatpush1.bf16.msra.mxu0 0
    %504 = vmatprep.subr.bf16.mxu0 0
    %505 = vmatpush1.bf16.msra.mxu0 0
    %506 = vmatprep.subr.bf16.mxu0 0
    %507 = vmatpush1.bf16.msra.mxu0 0
    %508 = vmatprep.subr.bf16.mxu0 0
    %509 = vmatpush1.bf16.msra.mxu0 0
    %510 = vmatprep.subr.bf16.mxu0 0
    %511 = vmatpush1.bf16.msra.mxu0 0
    %512 = vmatprep.subr.bf16.mxu0 0
    %513 = vmatpush1.bf16.msra.mxu0 0
    %514 = vmatprep.subr.bf16.mxu0 0
    %515 = vmatpush1.bf16.msra.mxu0 0
    %516 = vmatprep.subr.bf16.mxu0 0
    %517 = vmatpush1.bf16.msra.mxu0 0
    %518 = vmatprep.subr.bf16.mxu0 0
    %519 = vmatpush1.bf16.msra.mxu0 0
    %520 = vmatprep.subr.bf16.mxu0 0
    %521 = vmatpush1.bf16.msra.mxu0 0
    %522 = vmatprep.subr.bf16.mxu0 0
    %523 = vmatpush1.bf16.msra.mxu0 0
    %524 = vmatprep.mubr.bf16.mxu0 0
    %525 = vmatmul.mubr.bf16.gmra.mrb[0].mxu0 %v484
    %v526 = vpop.f32.mrb[0].mxu0
    %v527 = vadd.f32 %v481, %v526
    %v528 = vpop.f32.mrb[0].mxu0
    %v529 = vpop.f32.mrb[0].mxu0
    %v530 = vadd.f32 %v481, %v529
    %v531 = vpop.f32.mrb[0].mxu0
    %532 = vmatprep.mubr.bf16.mxu0 0
    %533 = vmatmul.mubr.bf16.gmra.mrb[0].mxu0 %v487
    %v534 = vpop.f32.mrb[0].mxu0
    %v535 = vadd.f32 %v481, %v534
    %v536 = vpop.f32.mrb[0].mxu0
    %v537 = vpop.f32.mrb[0].mxu0
    %v538 = vadd.f32 %v481, %v537
    %v539 = vpop.f32.mrb[0].mxu0
    %540 = vmatprep.mubr.bf16.mxu0 0
    %541 = vmatmul.mubr.bf16.gmra.mrb[0].mxu0 %v490
    %v542 = vpop.f32.mrb[0].mxu0
    %v543 = vadd.f32 %v481, %v542
    %v544 = vpop.f32.mrb[0].mxu0
    %v545 = vpop.f32.mrb[0].mxu0
    %v546 = vpop.f32.mrb[0].mxu0
    %547 = vdwg.mxu0
    %v548 = vmul.f32 %v527, 0.35355338
    %v549 = vmul.f32 %v530, 0.35355338
    %v550 = vmul.f32 %v535, 0.35355338
    %v551 = vmul.f32 %v538, 0.35355338
    %v552 = vmul.f32 %v543, 0.35355338
    %v553 = vpack.c.bf16 %v549, %v548
    %v554 = vpack.c.bf16 %v551, %v550
    %v555 = vpack.c.bf16 %v552, %v552
    %v556 = vpack.c.bf16 %v530, %v527
    %v557 = vpack.c.bf16 %v538, %v535
    %v558 = vpack.c.bf16 %v543, %v543
    %v559 = vld [vmem:[%s14] sm:$0xff]
    %v560 = vld [vmem:[%s14 + $0x8] sm:$0xff]
    %v561 = vld [vmem:[%s14 + $0x10] sm:$0xff]
    %v562 = vld [vmem:[%s14 + $0x18] sm:$0xff]
    %566 = vrot.lane.b32.xlu0 %v556, 96
    %v567 = vpop.permute.xlu0 %566
    %568 = vrot.lane.b32.xlu0 %v557, 96
    %v569 = vpop.permute.xlu0 %568
    %570 = vrot.lane.b32.xlu0 %v558, 96
    %v571 = vpop.permute.xlu0 %570
    %vm572 = vcmask 64512
    %v574 = vsel %vm572, %v553, 0
    %v577 = vsel %vm572, %v554, 0
    %v580 = vsel %vm572, %v555, 0
    %v583 = vsel %vm572, %v567, 0
    %v586 = vsel %vm572, %v569, 0
    %v589 = vsel %vm572, %v571, 0
    %591 = vmatprep.subr.bf16.mxu0 0
    %592 = vmatpush1.bf16.xpose.msra.mxu0 %v583
    %593 = vmatprep.subr.bf16.mxu0 0
    %594 = vmatpush1.bf16.xpose.msra.mxu0 %v586
    %595 = vmatprep.subr.bf16.mxu0 0
    %596 = vmatpush1.bf16.xpose.msra.mxu0 %v589
    %597 = vmatprep.subr.bf16.mxu0 0
    %598 = vmatpush1.bf16.xpose.msra.mxu0 0
    %599 = vmatprep.subr.bf16.mxu0 0
    %600 = vmatpush1.bf16.xpose.msra.mxu0 0
    %601 = vmatprep.subr.bf16.mxu0 0
    %602 = vmatpush1.bf16.xpose.msra.mxu0 0
    %603 = vmatprep.subr.bf16.mxu0 0
    %604 = vmatpush1.bf16.xpose.msra.mxu0 0
    %605 = vmatprep.subr.bf16.mxu0 0
    %606 = vmatpush1.bf16.xpose.msra.mxu0 0
    %607 = vmatprep.subr.bf16.mxu0 0
    %608 = vmatpush1.bf16.xpose.msra.mxu0 0
    %609 = vmatprep.subr.bf16.mxu0 0
    %610 = vmatpush1.bf16.xpose.msra.mxu0 0
    %611 = vmatprep.subr.bf16.mxu0 0
    %612 = vmatpush1.bf16.xpose.msra.mxu0 0
    %613 = vmatprep.subr.bf16.mxu0 0
    %614 = vmatpush1.bf16.xpose.msra.mxu0 0
    %615 = vmatprep.subr.bf16.mxu0 0
    %616 = vmatpush1.bf16.xpose.msra.mxu0 0
    %617 = vmatprep.subr.bf16.mxu0 0
    %618 = vmatpush1.bf16.xpose.msra.mxu0 0
    %619 = vmatprep.subr.bf16.mxu0 0
    %620 = vmatpush1.bf16.xpose.msra.mxu0 0
    %621 = vmatprep.subr.bf16.mxu0 0
    %622 = vmatpush1.bf16.xpose.msra.mxu0 0
    %623 = vmatprep.mubr.bf16.mxu0 0
    %624 = vmatmul.mubr.bf16.gmra.mrb[0].mxu0 %v574
    %v625 = vpop.f32.mrb[0].mxu0
    %v626 = vadd.f32 %v371, %v625
    %v627 = vpop.f32.mrb[0].mxu0
    %v628 = vpop.f32.mrb[0].mxu0
    %v629 = vadd.f32 %v372, %v628
    %v630 = vpop.f32.mrb[0].mxu0
    %631 = vmatprep.mubr.bf16.mxu0 0
    %632 = vmatmul.mubr.bf16.gmra.mrb[0].mxu0 %v577
    %v633 = vpop.f32.mrb[0].mxu0
    %v634 = vadd.f32 %v373, %v633
    %v635 = vpop.f32.mrb[0].mxu0
    %v636 = vpop.f32.mrb[0].mxu0
    %v637 = vadd.f32 %v374, %v636
    %v638 = vpop.f32.mrb[0].mxu0
    %639 = vmatprep.mubr.bf16.mxu0 0
    %640 = vmatmul.mubr.bf16.gmra.mrb[0].mxu0 %v580
    %v641 = vpop.f32.mrb[0].mxu0
    %v642 = vadd.f32 %v375, %v641
    %v643 = vpop.f32.mrb[0].mxu0
    %v644 = vpop.f32.mrb[0].mxu0
    %v645 = vpop.f32.mrb[0].mxu0
    %646 = vdwg.mxu0
    %vm647 = vcmask 277504
    %v648 = vsel %vm647, %v626, -inf
    %649 = vmax.xlane.f32.xlu0 %v648
    %v650 = vpop.xlane.xlu0 %649
    %v651 = vsel %vm647, %v629, -inf
    %652 = vmax.xlane.f32.xlu0 %v651
    %v653 = vpop.xlane.xlu0 %652
    %v654 = vsel %vm647, %v634, -inf
    %655 = vmax.xlane.f32.xlu0 %v654
    %v656 = vpop.xlane.xlu0 %655
    %v657 = vsel %vm647, %v637, -inf
    %658 = vmax.xlane.f32.xlu0 %v657
    %v659 = vpop.xlane.xlu0 %658
    %vm660 = vcmask 271360
    %v661 = vsel %vm660, %v642, -inf
    %662 = vmax.xlane.f32.xlu0 %v661
    %v663 = vpop.xlane.xlu0 %662
    %v664 = vsub.f32 %v626, %v650
    %v665 = vsub.f32 %v629, %v653
    %v666 = vsub.f32 %v634, %v656
    %v667 = vsub.f32 %v637, %v659
    %v668 = vsub.f32 %v642, %v663
    %v669 = vmul.f32 %v664, 1.442695
    %v670 = vpow.pop %v669
    %v671 = vmul.f32 %v665, 1.442695
    %v672 = vpow.pop %v671
    %v673 = vmul.f32 %v666, 1.442695
    %v674 = vpow.pop %v673
    %v675 = vmul.f32 %v667, 1.442695
    %v676 = vpow.pop %v675
    %v677 = vmul.f32 %v668, 1.442695
    %v678 = vpow.pop %v677
    %v679 = vsel %vm647, %v670, 0.0
    %680 = vadd.xlane.f32.xlu0 %v679
    %v681 = vpop.xlane.xlu0 %680
    %v682 = vsel %vm647, %v672, 0.0
    %683 = vadd.xlane.f32.xlu0 %v682
    %v684 = vpop.xlane.xlu0 %683
    %v685 = vsel %vm647, %v674, 0.0
    %686 = vadd.xlane.f32.xlu0 %v685
    %v687 = vpop.xlane.xlu0 %686
    %v688 = vsel %vm647, %v676, 0.0
    %689 = vadd.xlane.f32.xlu0 %v688
    %v690 = vpop.xlane.xlu0 %689
    %v691 = vsel %vm660, %v678, 0.0
    %692 = vadd.xlane.f32.xlu0 %v691
    %v693 = vpop.xlane.xlu0 %692
    %v694 = vrcp.pop %v681
    %v695 = vrcp.pop %v684
    %v696 = vrcp.pop %v687
    %v697 = vrcp.pop %v690
    %v698 = vrcp.pop %v693
    %v699 = vmul.f32 %v670, %v694
    %v700 = vmul.f32 %v672, %v695
    %v701 = vmul.f32 %v674, %v696
    %v702 = vmul.f32 %v676, %v697
    %v703 = vmul.f32 %v678, %v698
    %v704 = vpack.c.bf16 %v700, %v699
    %v705 = vpack.c.bf16 %v702, %v701
    %v706 = vpack.c.bf16 %v703, %v703
    %707 = vrot.lane.b32.xlu0 %v556, 64
    %v708 = vpop.permute.xlu0 %707
    %709 = vrot.lane.b32.xlu0 %v557, 64
    %v710 = vpop.permute.xlu0 %709
    %711 = vrot.lane.b32.xlu0 %v558, 64
    %v712 = vpop.permute.xlu0 %711
    %v716 = vsel %vm647, %v704, 0
    %v719 = vsel %vm647, %v705, 0
    %v722 = vsel %vm647, %v706, 0
    %vm724 = vcmask 1040384
    %v726 = vsel %vm724, %v712, 0
    %728 = vmatprep.subr.bf16.mxu0 0
    %729 = vmatpush1.bf16.msra.mxu0 %v708
    %730 = vmatprep.subr.bf16.mxu0 0
    %731 = vmatpush1.bf16.msra.mxu0 %v710
    %732 = vmatprep.subr.bf16.mxu0 0
    %733 = vmatpush1.bf16.msra.mxu0 %v726
    %734 = vmatprep.subr.bf16.mxu0 0
    %735 = vmatpush1.bf16.msra.mxu0 0
    %736 = vmatprep.subr.bf16.mxu0 0
    %737 = vmatpush1.bf16.msra.mxu0 0
    %738 = vmatprep.subr.bf16.mxu0 0
    %739 = vmatpush1.bf16.msra.mxu0 0
    %740 = vmatprep.subr.bf16.mxu0 0
    %741 = vmatpush1.bf16.msra.mxu0 0
    %742 = vmatprep.subr.bf16.mxu0 0
    %743 = vmatpush1.bf16.msra.mxu0 0
    %744 = vmatprep.subr.bf16.mxu0 0
    %745 = vmatpush1.bf16.msra.mxu0 0
    %746 = vmatprep.subr.bf16.mxu0 0
    %747 = vmatpush1.bf16.msra.mxu0 0
    %748 = vmatprep.subr.bf16.mxu0 0
    %749 = vmatpush1.bf16.msra.mxu0 0
    %750 = vmatprep.subr.bf16.mxu0 0
    %751 = vmatpush1.bf16.msra.mxu0 0
    %752 = vmatprep.subr.bf16.mxu0 0
    %753 = vmatpush1.bf16.msra.mxu0 0
    %754 = vmatprep.subr.bf16.mxu0 0
    %755 = vmatpush1.bf16.msra.mxu0 0
    %756 = vmatprep.subr.bf16.mxu0 0
    %757 = vmatpush1.bf16.msra.mxu0 0
    %758 = vmatprep.subr.bf16.mxu0 0
    %759 = vmatpush1.bf16.msra.mxu0 0
    %760 = vmatprep.mubr.bf16.mxu0 0
    %761 = vmatmul.mubr.bf16.gmra.mrb[0].mxu0 %v716
    %v762 = vpop.f32.mrb[0].mxu0
    %v763 = vadd.f32 0.0, %v762
    %v764 = vpop.f32.mrb[0].mxu0
    %v765 = vpop.f32.mrb[0].mxu0
    %v766 = vadd.f32 0.0, %v765
    %v767 = vpop.f32.mrb[0].mxu0
    %768 = vmatprep.mubr.bf16.mxu0 0
    %769 = vmatmul.mubr.bf16.gmra.mrb[0].mxu0 %v719
    %v770 = vpop.f32.mrb[0].mxu0
    %v771 = vadd.f32 0.0, %v770
    %v772 = vpop.f32.mrb[0].mxu0
    %v773 = vpop.f32.mrb[0].mxu0
    %v774 = vadd.f32 0.0, %v773
    %v775 = vpop.f32.mrb[0].mxu0
    %776 = vmatprep.mubr.bf16.mxu0 0
    %777 = vmatmul.mubr.bf16.gmra.mrb[0].mxu0 %v722
    %v778 = vpop.f32.mrb[0].mxu0
    %v779 = vadd.f32 0.0, %v778
    %v780 = vpop.f32.mrb[0].mxu0
    %v781 = vpop.f32.mrb[0].mxu0
    %v782 = vpop.f32.mrb[0].mxu0
    %783 = vdwg.mxu0
    %v784 = vpack.c.bf16 %v766, %v763
    %v785 = vpack.c.bf16 %v774, %v771
    %v786 = vpack.c.bf16 %v779, %v779
    %v787 = vpack.c.bf16 %v559, %v559
    %791 = vrot.lane.b32.xlu0 %v553, 120
    %v792 = vpop.permute.xlu0 %791
    %793 = vrot.lane.b32.xlu0 %v554, 120
    %v794 = vpop.permute.xlu0 %793
    %795 = vrot.lane.b32.xlu0 %v555, 120
    %v796 = vpop.permute.xlu0 %795
    %797 = vrot.lane.b32.xlu0 %v556, 88
    %v798 = vpop.permute.xlu0 %797
    %799 = vrot.lane.b32.xlu0 %v557, 88
    %v800 = vpop.permute.xlu0 %799
    %801 = vrot.lane.b32.xlu0 %v558, 88
    %v802 = vpop.permute.xlu0 %801
    %v804 = vsel %vm572, %v792, 0
    %v807 = vsel %vm572, %v794, 0
    %v810 = vsel %vm572, %v796, 0
    %v813 = vsel %vm572, %v798, 0
    %v816 = vsel %vm572, %v800, 0
    %v819 = vsel %vm572, %v802, 0
    %821 = vmatprep.subr.bf16.mxu0 0
    %822 = vmatpush1.bf16.xpose.msra.mxu0 %v813
    %823 = vmatprep.subr.bf16.mxu0 0
    %824 = vmatpush1.bf16.xpose.msra.mxu0 %v816
    %825 = vmatprep.subr.bf16.mxu0 0
    %826 = vmatpush1.bf16.xpose.msra.mxu0 %v819
    %827 = vmatprep.subr.bf16.mxu0 0
    %828 = vmatpush1.bf16.xpose.msra.mxu0 0
    %829 = vmatprep.subr.bf16.mxu0 0
    %830 = vmatpush1.bf16.xpose.msra.mxu0 0
    %831 = vmatprep.subr.bf16.mxu0 0
    %832 = vmatpush1.bf16.xpose.msra.mxu0 0
    %833 = vmatprep.subr.bf16.mxu0 0
    %834 = vmatpush1.bf16.xpose.msra.mxu0 0
    %835 = vmatprep.subr.bf16.mxu0 0
    %836 = vmatpush1.bf16.xpose.msra.mxu0 0
    %837 = vmatprep.subr.bf16.mxu0 0
    %838 = vmatpush1.bf16.xpose.msra.mxu0 0
    %839 = vmatprep.subr.bf16.mxu0 0
    %840 = vmatpush1.bf16.xpose.msra.mxu0 0
    %841 = vmatprep.subr.bf16.mxu0 0
    %842 = vmatpush1.bf16.xpose.msra.mxu0 0
    %843 = vmatprep.subr.bf16.mxu0 0
    %844 = vmatpush1.bf16.xpose.msra.mxu0 0
    %845 = vmatprep.subr.bf16.mxu0 0
    %846 = vmatpush1.bf16.xpose.msra.mxu0 0
    %847 = vmatprep.subr.bf16.mxu0 0
    %848 = vmatpush1.bf16.xpose.msra.mxu0 0
    %849 = vmatprep.subr.bf16.mxu0 0
    %850 = vmatpush1.bf16.xpose.msra.mxu0 0
    %851 = vmatprep.subr.bf16.mxu0 0
    %852 = vmatpush1.bf16.xpose.msra.mxu0 0
    %853 = vmatprep.mubr.bf16.mxu0 0
    %854 = vmatmul.mubr.bf16.gmra.mrb[0].mxu0 %v804
    %v855 = vpop.f32.mrb[0].mxu0
    %v856 = vadd.f32 %v371, %v855
    %v857 = vpop.f32.mrb[0].mxu0
    %v858 = vpop.f32.mrb[0].mxu0
    %v859 = vadd.f32 %v372, %v858
    %v860 = vpop.f32.mrb[0].mxu0
    %861 = vmatprep.mubr.bf16.mxu0 0
    %862 = vmatmul.mubr.bf16.gmra.mrb[0].mxu0 %v807
    %v863 = vpop.f32.mrb[0].mxu0
    %v864 = vadd.f32 %v373, %v863
    %v865 = vpop.f32.mrb[0].mxu0
    %v866 = vpop.f32.mrb[0].mxu0
    %v867 = vadd.f32 %v374, %v866
    %v868 = vpop.f32.mrb[0].mxu0
    %869 = vmatprep.mubr.bf16.mxu0 0
    %870 = vmatmul.mubr.bf16.gmra.mrb[0].mxu0 %v810
    %v871 = vpop.f32.mrb[0].mxu0
    %v872 = vadd.f32 %v375, %v871
    %v873 = vpop.f32.mrb[0].mxu0
    %v874 = vpop.f32.mrb[0].mxu0
    %v875 = vpop.f32.mrb[0].mxu0
    %876 = vdwg.mxu0
    %v877 = vsel %vm647, %v856, -inf
    %878 = vmax.xlane.f32.xlu0 %v877
    %v879 = vpop.xlane.xlu0 %878
    %v880 = vsel %vm647, %v859, -inf
    %881 = vmax.xlane.f32.xlu0 %v880
    %v882 = vpop.xlane.xlu0 %881
    %v883 = vsel %vm647, %v864, -inf
    %884 = vmax.xlane.f32.xlu0 %v883
    %v885 = vpop.xlane.xlu0 %884
    %v886 = vsel %vm647, %v867, -inf
    %887 = vmax.xlane.f32.xlu0 %v886
    %v888 = vpop.xlane.xlu0 %887
    %v889 = vsel %vm660, %v872, -inf
    %890 = vmax.xlane.f32.xlu0 %v889
    %v891 = vpop.xlane.xlu0 %890
    %v892 = vsub.f32 %v856, %v879
    %v893 = vsub.f32 %v859, %v882
    %v894 = vsub.f32 %v864, %v885
    %v895 = vsub.f32 %v867, %v888
    %v896 = vsub.f32 %v872, %v891
    %v897 = vmul.f32 %v892, 1.442695
    %v898 = vpow.pop %v897
    %v899 = vmul.f32 %v893, 1.442695
    %v900 = vpow.pop %v899
    %v901 = vmul.f32 %v894, 1.442695
    %v902 = vpow.pop %v901
    %v903 = vmul.f32 %v895, 1.442695
    %v904 = vpow.pop %v903
    %v905 = vmul.f32 %v896, 1.442695
    %v906 = vpow.pop %v905
    %v907 = vsel %vm647, %v898, 0.0
    %908 = vadd.xlane.f32.xlu0 %v907
    %v909 = vpop.xlane.xlu0 %908
    %v910 = vsel %vm647, %v900, 0.0
    %911 = vadd.xlane.f32.xlu0 %v910
    %v912 = vpop.xlane.xlu0 %911
    %v913 = vsel %vm647, %v902, 0.0
    %914 = vadd.xlane.f32.xlu0 %v913
    %v915 = vpop.xlane.xlu0 %914
    %v916 = vsel %vm647, %v904, 0.0
    %917 = vadd.xlane.f32.xlu0 %v916
    %v918 = vpop.xlane.xlu0 %917
    %v919 = vsel %vm660, %v906, 0.0
    %920 = vadd.xlane.f32.xlu0 %v919
    %v921 = vpop.xlane.xlu0 %920
    %v922 = vrcp.pop %v909
    %v923 = vrcp.pop %v912
    %v924 = vrcp.pop %v915
    %v925 = vrcp.pop %v918
    %v926 = vrcp.pop %v921
    %v927 = vmul.f32 %v898, %v922
    %v928 = vmul.f32 %v900, %v923
    %v929 = vmul.f32 %v902, %v924
    %v930 = vmul.f32 %v904, %v925
    %v931 = vmul.f32 %v906, %v926
    %v932 = vpack.c.bf16 %v928, %v927
    %v933 = vpack.c.bf16 %v930, %v929
    %v934 = vpack.c.bf16 %v931, %v931
    %935 = vrot.lane.b32.xlu0 %v556, 56
    %v936 = vpop.permute.xlu0 %935
    %937 = vrot.lane.b32.xlu0 %v557, 56
    %v938 = vpop.permute.xlu0 %937
    %939 = vrot.lane.b32.xlu0 %v558, 56
    %v940 = vpop.permute.xlu0 %939
    %v944 = vsel %vm647, %v932, 0
    %v947 = vsel %vm647, %v933, 0
    %v950 = vsel %vm647, %v934, 0
    %v953 = vsel %vm724, %v940, 0
    %955 = vmatprep.subr.bf16.mxu0 0
    %956 = vmatpush1.bf16.msra.mxu0 %v936
    %957 = vmatprep.subr.bf16.mxu0 0
    %958 = vmatpush1.bf16.msra.mxu0 %v938
    %959 = vmatprep.subr.bf16.mxu0 0
    %960 = vmatpush1.bf16.msra.mxu0 %v953
    %961 = vmatprep.subr.bf16.mxu0 0
    %962 = vmatpush1.bf16.msra.mxu0 0
    %963 = vmatprep.subr.bf16.mxu0 0
    %964 = vmatpush1.bf16.msra.mxu0 0
    %965 = vmatprep.subr.bf16.mxu0 0
    %966 = vmatpush1.bf16.msra.mxu0 0
    %967 = vmatprep.subr.bf16.mxu0 0
    %968 = vmatpush1.bf16.msra.mxu0 0
    %969 = vmatprep.subr.bf16.mxu0 0
    %970 = vmatpush1.bf16.msra.mxu0 0
    %971 = vmatprep.subr.bf16.mxu0 0
    %972 = vmatpush1.bf16.msra.mxu0 0
    %973 = vmatprep.subr.bf16.mxu0 0
    %974 = vmatpush1.bf16.msra.mxu0 0
    %975 = vmatprep.subr.bf16.mxu0 0
    %976 = vmatpush1.bf16.msra.mxu0 0
    %977 = vmatprep.subr.bf16.mxu0 0
    %978 = vmatpush1.bf16.msra.mxu0 0
    %979 = vmatprep.subr.bf16.mxu0 0
    %980 = vmatpush1.bf16.msra.mxu0 0
    %981 = vmatprep.subr.bf16.mxu0 0
    %982 = vmatpush1.bf16.msra.mxu0 0
    %983 = vmatprep.subr.bf16.mxu0 0
    %984 = vmatpush1.bf16.msra.mxu0 0
    %985 = vmatprep.subr.bf16.mxu0 0
    %986 = vmatpush1.bf16.msra.mxu0 0
    %987 = vmatprep.mubr.bf16.mxu0 0
    %988 = vmatmul.mubr.bf16.gmra.mrb[0].mxu0 %v944
    %v989 = vpop.f32.mrb[0].mxu0
    %v990 = vadd.f32 0.0, %v989
    %v991 = vpop.f32.mrb[0].mxu0
    %v992 = vpop.f32.mrb[0].mxu0
    %v993 = vadd.f32 0.0, %v992
    %v994 = vpop.f32.mrb[0].mxu0
    %995 = vmatprep.mubr.bf16.mxu0 0
    %996 = vmatmul.mubr.bf16.gmra.mrb[0].mxu0 %v947
    %v997 = vpop.f32.mrb[0].mxu0
    %v998 = vadd.f32 0.0, %v997
    %v999 = vpop.f32.mrb[0].mxu0
    %v1000 = vpop.f32.mrb[0].mxu0
    %v1001 = vadd.f32 0.0, %v1000
    %v1002 = vpop.f32.mrb[0].mxu0
    %1003 = vmatprep.mubr.bf16.mxu0 0
    %1004 = vmatmul.mubr.bf16.gmra.mrb[0].mxu0 %v950
    %v1005 = vpop.f32.mrb[0].mxu0
    %v1006 = vadd.f32 0.0, %v1005
    %v1007 = vpop.f32.mrb[0].mxu0
    %v1008 = vpop.f32.mrb[0].mxu0
    %v1009 = vpop.f32.mrb[0].mxu0
    %1010 = vdwg.mxu0
    %v1011 = vpack.c.bf16 %v993, %v990
    %v1012 = vpack.c.bf16 %v1001, %v998
    %v1013 = vpack.c.bf16 %v1006, %v1006
    %v1014 = vpack.c.bf16 %v560, %v560
    %v1016 = vsel %vm572, %v1011, 0
    %v1019 = vsel %vm572, %v1012, 0
    %v1022 = vsel %vm572, %v1013, 0
    %vm1024 = vcmask 1043456
    %v1026 = vsel %vm1024, %v1014, 0
    %1028 = vmatprep.subr.bf16.mxu0 0
    %1029 = vmatpush1.bf16.msra.mxu0 %v1026
    %1030 = vmatprep.subr.bf16.mxu0 0
    %1031 = vmatpush1.bf16.msra.mxu0 0
    %1032 = vmatprep.subr.bf16.mxu0 0
    %1033 = vmatpush1.bf16.msra.mxu0 0
    %1034 = vmatprep.subr.bf16.mxu0 0
    %1035 = vmatpush1.bf16.msra.mxu0 0
    %1036 = vmatprep.subr.bf16.mxu0 0
    %1037 = vmatpush1.bf16.msra.mxu0 0
    %1038 = vmatprep.subr.bf16.mxu0 0
    %1039 = vmatpush1.bf16.msra.mxu0 0
    %1040 = vmatprep.subr.bf16.mxu0 0
    %1041 = vmatpush1.bf16.msra.mxu0 0
    %1042 = vmatprep.subr.bf16.mxu0 0
    %1043 = vmatpush1.bf16.msra.mxu0 0
    %1044 = vmatprep.subr.bf16.mxu0 0
    %1045 = vmatpush1.bf16.msra.mxu0 0
    %1046 = vmatprep.subr.bf16.mxu0 0
    %1047 = vmatpush1.bf16.msra.mxu0 0
    %1048 = vmatprep.subr.bf16.mxu0 0
    %1049 = vmatpush1.bf16.msra.mxu0 0
    %1050 = vmatprep.subr.bf16.mxu0 0
    %1051 = vmatpush1.bf16.msra.mxu0 0
    %1052 = vmatprep.subr.bf16.mxu0 0
    %1053 = vmatpush1.bf16.msra.mxu0 0
    %1054 = vmatprep.subr.bf16.mxu0 0
    %1055 = vmatpush1.bf16.msra.mxu0 0
    %1056 = vmatprep.subr.bf16.mxu0 0
    %1057 = vmatpush1.bf16.msra.mxu0 0
    %1058 = vmatprep.subr.bf16.mxu0 0
    %1059 = vmatpush1.bf16.msra.mxu0 0
    %1060 = vmatprep.mubr.bf16.mxu0 0
    %1061 = vmatmul.mubr.bf16.gmra.mrb[0].mxu0 %v1016
    %v1062 = vpop.f32.mrb[0].mxu0
    %v1063 = vadd.f32 0.0, %v1062
    %v1064 = vpop.f32.mrb[0].mxu0
    %v1065 = vpop.f32.mrb[0].mxu0
    %v1066 = vadd.f32 0.0, %v1065
    %v1067 = vpop.f32.mrb[0].mxu0
    %1068 = vmatprep.mubr.bf16.mxu0 0
    %1069 = vmatmul.mubr.bf16.gmra.mrb[0].mxu0 %v1019
    %v1070 = vpop.f32.mrb[0].mxu0
    %v1071 = vadd.f32 0.0, %v1070
    %v1072 = vpop.f32.mrb[0].mxu0
    %v1073 = vpop.f32.mrb[0].mxu0
    %v1074 = vadd.f32 0.0, %v1073
    %v1075 = vpop.f32.mrb[0].mxu0
    %1076 = vmatprep.mubr.bf16.mxu0 0
    %1077 = vmatmul.mubr.bf16.gmra.mrb[0].mxu0 %v1022
    %v1078 = vpop.f32.mrb[0].mxu0
    %v1079 = vadd.f32 0.0, %v1078
    %v1080 = vpop.f32.mrb[0].mxu0
    %v1081 = vpop.f32.mrb[0].mxu0
    %v1082 = vpop.f32.mrb[0].mxu0
    %1083 = vdwg.mxu0
    %v1085 = vsel %vm572, %v784, 0
    %v1088 = vsel %vm572, %v785, 0
    %v1091 = vsel %vm572, %v786, 0
    %v1094 = vsel %vm1024, %v787, 0
    %1096 = vmatprep.subr.bf16.mxu0 0
    %1097 = vmatpush1.bf16.msra.mxu0 %v1094
    %1098 = vmatprep.subr.bf16.mxu0 0
    %1099 = vmatpush1.bf16.msra.mxu0 0
    %1100 = vmatprep.subr.bf16.mxu0 0
    %1101 = vmatpush1.bf16.msra.mxu0 0
    %1102 = vmatprep.subr.bf16.mxu0 0
    %1103 = vmatpush1.bf16.msra.mxu0 0
    %1104 = vmatprep.subr.bf16.mxu0 0
    %1105 = vmatpush1.bf16.msra.mxu0 0
    %1106 = vmatprep.subr.bf16.mxu0 0
    %1107 = vmatpush1.bf16.msra.mxu0 0
    %1108 = vmatprep.subr.bf16.mxu0 0
    %1109 = vmatpush1.bf16.msra.mxu0 0
    %1110 = vmatprep.subr.bf16.mxu0 0
    %1111 = vmatpush1.bf16.msra.mxu0 0
    %1112 = vmatprep.subr.bf16.mxu0 0
    %1113 = vmatpush1.bf16.msra.mxu0 0
    %1114 = vmatprep.subr.bf16.mxu0 0
    %1115 = vmatpush1.bf16.msra.mxu0 0
    %1116 = vmatprep.subr.bf16.mxu0 0
    %1117 = vmatpush1.bf16.msra.mxu0 0
    %1118 = vmatprep.subr.bf16.mxu0 0
    %1119 = vmatpush1.bf16.msra.mxu0 0
    %1120 = vmatprep.subr.bf16.mxu0 0
    %1121 = vmatpush1.bf16.msra.mxu0 0
    %1122 = vmatprep.subr.bf16.mxu0 0
    %1123 = vmatpush1.bf16.msra.mxu0 0
    %1124 = vmatprep.subr.bf16.mxu0 0
    %1125 = vmatpush1.bf16.msra.mxu0 0
    %1126 = vmatprep.subr.bf16.mxu0 0
    %1127 = vmatpush1.bf16.msra.mxu0 0
    %1128 = vmatprep.mubr.bf16.mxu0 0
    %1129 = vmatmul.mubr.bf16.gmra.mrb[0].mxu0 %v1085
    %v1130 = vpop.f32.mrb[0].mxu0
    %v1131 = vadd.f32 %v1063, %v1130
    %v1132 = vpop.f32.mrb[0].mxu0
    %v1133 = vpop.f32.mrb[0].mxu0
    %v1134 = vadd.f32 %v1066, %v1133
    %v1135 = vpop.f32.mrb[0].mxu0
    %1136 = vmatprep.mubr.bf16.mxu0 0
    %1137 = vmatmul.mubr.bf16.gmra.mrb[0].mxu0 %v1088
    %v1138 = vpop.f32.mrb[0].mxu0
    %v1139 = vadd.f32 %v1071, %v1138
    %v1140 = vpop.f32.mrb[0].mxu0
    %v1141 = vpop.f32.mrb[0].mxu0
    %v1142 = vadd.f32 %v1074, %v1141
    %v1143 = vpop.f32.mrb[0].mxu0
    %1144 = vmatprep.mubr.bf16.mxu0 0
    %1145 = vmatmul.mubr.bf16.gmra.mrb[0].mxu0 %v1091
    %v1146 = vpop.f32.mrb[0].mxu0
    %v1147 = vadd.f32 %v1079, %v1146
    %v1148 = vpop.f32.mrb[0].mxu0
    %v1149 = vpop.f32.mrb[0].mxu0
    %v1150 = vpop.f32.mrb[0].mxu0
    %1151 = vdwg.mxu0
    %1152 = vrot.lane.b32.xlu0 %v553, 112
    %v1153 = vpop.permute.xlu0 %1152
    %1154 = vrot.lane.b32.xlu0 %v554, 112
    %v1155 = vpop.permute.xlu0 %1154
    %1156 = vrot.lane.b32.xlu0 %v555, 112
    %v1157 = vpop.permute.xlu0 %1156
    %1158 = vrot.lane.b32.xlu0 %v556, 80
    %v1159 = vpop.permute.xlu0 %1158
    %1160 = vrot.lane.b32.xlu0 %v557, 80
    %v1161 = vpop.permute.xlu0 %1160
    %1162 = vrot.lane.b32.xlu0 %v558, 80
    %v1163 = vpop.permute.xlu0 %1162
    %v1165 = vsel %vm572, %v1153, 0
    %v1168 = vsel %vm572, %v1155, 0
    %v1171 = vsel %vm572, %v1157, 0
    %v1174 = vsel %vm572, %v1159, 0
    %v1177 = vsel %vm572, %v1161, 0
    %v1180 = vsel %vm572, %v1163, 0
    %1182 = vmatprep.subr.bf16.mxu0 0
    %1183 = vmatpush1.bf16.xpose.msra.mxu0 %v1174
    %1184 = vmatprep.subr.bf16.mxu0 0
    %1185 = vmatpush1.bf16.xpose.msra.mxu0 %v1177
    %1186 = vmatprep.subr.bf16.mxu0 0
    %1187 = vmatpush1.bf16.xpose.msra.mxu0 %v1180
    %1188 = vmatprep.subr.bf16.mxu0 0
    %1189 = vmatpush1.bf16.xpose.msra.mxu0 0
    %1190 = vmatprep.subr.bf16.mxu0 0
    %1191 = vmatpush1.bf16.xpose.msra.mxu0 0
    %1192 = vmatprep.subr.bf16.mxu0 0
    %1193 = vmatpush1.bf16.xpose.msra.mxu0 0
    %1194 = vmatprep.subr.bf16.mxu0 0
    %1195 = vmatpush1.bf16.xpose.msra.mxu0 0
    %1196 = vmatprep.subr.bf16.mxu0 0
    %1197 = vmatpush1.bf16.xpose.msra.mxu0 0
    %1198 = vmatprep.subr.bf16.mxu0 0
    %1199 = vmatpush1.bf16.xpose.msra.mxu0 0
    %1200 = vmatprep.subr.bf16.mxu0 0
    %1201 = vmatpush1.bf16.xpose.msra.mxu0 0
    %1202 = vmatprep.subr.bf16.mxu0 0
    %1203 = vmatpush1.bf16.xpose.msra.mxu0 0
    %1204 = vmatprep.subr.bf16.mxu0 0
    %1205 = vmatpush1.bf16.xpose.msra.mxu0 0
    %1206 = vmatprep.subr.bf16.mxu0 0
    %1207 = vmatpush1.bf16.xpose.msra.mxu0 0
    %1208 = vmatprep.subr.bf16.mxu0 0
    %1209 = vmatpush1.bf16.xpose.msra.mxu0 0
    %1210 = vmatprep.subr.bf16.mxu0 0
    %1211 = vmatpush1.bf16.xpose.msra.mxu0 0
    %1212 = vmatprep.subr.bf16.mxu0 0
    %1213 = vmatpush1.bf16.xpose.msra.mxu0 0
    %1214 = vmatprep.mubr.bf16.mxu0 0
    %1215 = vmatmul.mubr.bf16.gmra.mrb[0].mxu0 %v1165
    %v1216 = vpop.f32.mrb[0].mxu0
    %v1217 = vadd.f32 %v371, %v1216
    %v1218 = vpop.f32.mrb[0].mxu0
    %v1219 = vpop.f32.mrb[0].mxu0
    %v1220 = vadd.f32 %v372, %v1219
    %v1221 = vpop.f32.mrb[0].mxu0
    %1222 = vmatprep.mubr.bf16.mxu0 0
    %1223 = vmatmul.mubr.bf16.gmra.mrb[0].mxu0 %v1168
    %v1224 = vpop.f32.mrb[0].mxu0
    %v1225 = vadd.f32 %v373, %v1224
    %v1226 = vpop.f32.mrb[0].mxu0
    %v1227 = vpop.f32.mrb[0].mxu0
    %v1228 = vadd.f32 %v374, %v1227
    %v1229 = vpop.f32.mrb[0].mxu0
    %1230 = vmatprep.mubr.bf16.mxu0 0
    %1231 = vmatmul.mubr.bf16.gmra.mrb[0].mxu0 %v1171
    %v1232 = vpop.f32.mrb[0].mxu0
    %v1233 = vadd.f32 %v375, %v1232
    %v1234 = vpop.f32.mrb[0].mxu0
    %v1235 = vpop.f32.mrb[0].mxu0
    %v1236 = vpop.f32.mrb[0].mxu0
    %1237 = vdwg.mxu0
    %v1238 = vsel %vm647, %v1217, -inf
    %1239 = vmax.xlane.f32.xlu0 %v1238
    %v1240 = vpop.xlane.xlu0 %1239
    %v1241 = vsel %vm647, %v1220, -inf
    %1242 = vmax.xlane.f32.xlu0 %v1241
    %v1243 = vpop.xlane.xlu0 %1242
    %v1244 = vsel %vm647, %v1225, -inf
    %1245 = vmax.xlane.f32.xlu0 %v1244
    %v1246 = vpop.xlane.xlu0 %1245
    %v1247 = vsel %vm647, %v1228, -inf
    %1248 = vmax.xlane.f32.xlu0 %v1247
    %v1249 = vpop.xlane.xlu0 %1248
    %v1250 = vsel %vm660, %v1233, -inf
    %1251 = vmax.xlane.f32.xlu0 %v1250
    %v1252 = vpop.xlane.xlu0 %1251
    %v1253 = vsub.f32 %v1217, %v1240
    %v1254 = vsub.f32 %v1220, %v1243
    %v1255 = vsub.f32 %v1225, %v1246
    %v1256 = vsub.f32 %v1228, %v1249
    %v1257 = vsub.f32 %v1233, %v1252
    %v1258 = vmul.f32 %v1253, 1.442695
    %v1259 = vpow.pop %v1258
    %v1260 = vmul.f32 %v1254, 1.442695
    %v1261 = vpow.pop %v1260
    %v1262 = vmul.f32 %v1255, 1.442695
    %v1263 = vpow.pop %v1262
    %v1264 = vmul.f32 %v1256, 1.442695
    %v1265 = vpow.pop %v1264
    %v1266 = vmul.f32 %v1257, 1.442695
    %v1267 = vpow.pop %v1266
    %v1268 = vsel %vm647, %v1259, 0.0
    %1269 = vadd.xlane.f32.xlu0 %v1268
    %v1270 = vpop.xlane.xlu0 %1269
    %v1271 = vsel %vm647, %v1261, 0.0
    %1272 = vadd.xlane.f32.xlu0 %v1271
    %v1273 = vpop.xlane.xlu0 %1272
    %v1274 = vsel %vm647, %v1263, 0.0
    %1275 = vadd.xlane.f32.xlu0 %v1274
    %v1276 = vpop.xlane.xlu0 %1275
    %v1277 = vsel %vm647, %v1265, 0.0
    %1278 = vadd.xlane.f32.xlu0 %v1277
    %v1279 = vpop.xlane.xlu0 %1278
    %v1280 = vsel %vm660, %v1267, 0.0
    %1281 = vadd.xlane.f32.xlu0 %v1280
    %v1282 = vpop.xlane.xlu0 %1281
    %v1283 = vrcp.pop %v1270
    %v1284 = vrcp.pop %v1273
    %v1285 = vrcp.pop %v1276
    %v1286 = vrcp.pop %v1279
    %v1287 = vrcp.pop %v1282
    %v1288 = vmul.f32 %v1259, %v1283
    %v1289 = vmul.f32 %v1261, %v1284
    %v1290 = vmul.f32 %v1263, %v1285
    %v1291 = vmul.f32 %v1265, %v1286
    %v1292 = vmul.f32 %v1267, %v1287
    %v1293 = vpack.c.bf16 %v1289, %v1288
    %v1294 = vpack.c.bf16 %v1291, %v1290
    %v1295 = vpack.c.bf16 %v1292, %v1292
    %1296 = vrot.lane.b32.xlu0 %v556, 48
    %v1297 = vpop.permute.xlu0 %1296
    %1298 = vrot.lane.b32.xlu0 %v557, 48
    %v1299 = vpop.permute.xlu0 %1298
    %1300 = vrot.lane.b32.xlu0 %v558, 48
    %v1301 = vpop.permute.xlu0 %1300
    %v1305 = vsel %vm647, %v1293, 0
    %v1308 = vsel %vm647, %v1294, 0
    %v1311 = vsel %vm647, %v1295, 0
    %v1314 = vsel %vm724, %v1301, 0
    %1316 = vmatprep.subr.bf16.mxu0 0
    %1317 = vmatpush1.bf16.msra.mxu0 %v1297
    %1318 = vmatprep.subr.bf16.mxu0 0
    %1319 = vmatpush1.bf16.msra.mxu0 %v1299
    %1320 = vmatprep.subr.bf16.mxu0 0
    %1321 = vmatpush1.bf16.msra.mxu0 %v1314
    %1322 = vmatprep.subr.bf16.mxu0 0
    %1323 = vmatpush1.bf16.msra.mxu0 0
    %1324 = vmatprep.subr.bf16.mxu0 0
    %1325 = vmatpush1.bf16.msra.mxu0 0
    %1326 = vmatprep.subr.bf16.mxu0 0
    %1327 = vmatpush1.bf16.msra.mxu0 0
    %1328 = vmatprep.subr.bf16.mxu0 0
    %1329 = vmatpush1.bf16.msra.mxu0 0
    %1330 = vmatprep.subr.bf16.mxu0 0
    %1331 = vmatpush1.bf16.msra.mxu0 0
    %1332 = vmatprep.subr.bf16.mxu0 0
    %1333 = vmatpush1.bf16.msra.mxu0 0
    %1334 = vmatprep.subr.bf16.mxu0 0
    %1335 = vmatpush1.bf16.msra.mxu0 0
    %1336 = vmatprep.subr.bf16.mxu0 0
    %1337 = vmatpush1.bf16.msra.mxu0 0
    %1338 = vmatprep.subr.bf16.mxu0 0
    %1339 = vmatpush1.bf16.msra.mxu0 0
    %1340 = vmatprep.subr.bf16.mxu0 0
    %1341 = vmatpush1.bf16.msra.mxu0 0
    %1342 = vmatprep.subr.bf16.mxu0 0
    %1343 = vmatpush1.bf16.msra.mxu0 0
    %1344 = vmatprep.subr.bf16.mxu0 0
    %1345 = vmatpush1.bf16.msra.mxu0 0
    %1346 = vmatprep.subr.bf16.mxu0 0
    %1347 = vmatpush1.bf16.msra.mxu0 0
    %1348 = vmatprep.mubr.bf16.mxu0 0
    %1349 = vmatmul.mubr.bf16.gmra.mrb[0].mxu0 %v1305
    %v1350 = vpop.f32.mrb[0].mxu0
    %v1351 = vadd.f32 0.0, %v1350
    %v1352 = vpop.f32.mrb[0].mxu0
    %v1353 = vpop.f32.mrb[0].mxu0
    %v1354 = vadd.f32 0.0, %v1353
    %v1355 = vpop.f32.mrb[0].mxu0
    %1356 = vmatprep.mubr.bf16.mxu0 0
    %1357 = vmatmul.mubr.bf16.gmra.mrb[0].mxu0 %v1308
    %v1358 = vpop.f32.mrb[0].mxu0
    %v1359 = vadd.f32 0.0, %v1358
    %v1360 = vpop.f32.mrb[0].mxu0
    %v1361 = vpop.f32.mrb[0].mxu0
    %v1362 = vadd.f32 0.0, %v1361
    %v1363 = vpop.f32.mrb[0].mxu0
    %1364 = vmatprep.mubr.bf16.mxu0 0
    %1365 = vmatmul.mubr.bf16.gmra.mrb[0].mxu0 %v1311
    %v1366 = vpop.f32.mrb[0].mxu0
    %v1367 = vadd.f32 0.0, %v1366
    %v1368 = vpop.f32.mrb[0].mxu0
    %v1369 = vpop.f32.mrb[0].mxu0
    %v1370 = vpop.f32.mrb[0].mxu0
    %1371 = vdwg.mxu0
    %v1372 = vpack.c.bf16 %v1354, %v1351
    %v1373 = vpack.c.bf16 %v1362, %v1359
    %v1374 = vpack.c.bf16 %v1367, %v1367
    %v1375 = vpack.c.bf16 %v561, %v561
    %v1377 = vsel %vm572, %v1372, 0
    %v1380 = vsel %vm572, %v1373, 0
    %v1383 = vsel %vm572, %v1374, 0
    %v1386 = vsel %vm1024, %v1375, 0
    %1388 = vmatprep.subr.bf16.mxu0 0
    %1389 = vmatpush1.bf16.msra.mxu0 %v1386
    %1390 = vmatprep.subr.bf16.mxu0 0
    %1391 = vmatpush1.bf16.msra.mxu0 0
    %1392 = vmatprep.subr.bf16.mxu0 0
    %1393 = vmatpush1.bf16.msra.mxu0 0
    %1394 = vmatprep.subr.bf16.mxu0 0
    %1395 = vmatpush1.bf16.msra.mxu0 0
    %1396 = vmatprep.subr.bf16.mxu0 0
    %1397 = vmatpush1.bf16.msra.mxu0 0
    %1398 = vmatprep.subr.bf16.mxu0 0
    %1399 = vmatpush1.bf16.msra.mxu0 0
    %1400 = vmatprep.subr.bf16.mxu0 0
    %1401 = vmatpush1.bf16.msra.mxu0 0
    %1402 = vmatprep.subr.bf16.mxu0 0
    %1403 = vmatpush1.bf16.msra.mxu0 0
    %1404 = vmatprep.subr.bf16.mxu0 0
    %1405 = vmatpush1.bf16.msra.mxu0 0
    %1406 = vmatprep.subr.bf16.mxu0 0
    %1407 = vmatpush1.bf16.msra.mxu0 0
    %1408 = vmatprep.subr.bf16.mxu0 0
    %1409 = vmatpush1.bf16.msra.mxu0 0
    %1410 = vmatprep.subr.bf16.mxu0 0
    %1411 = vmatpush1.bf16.msra.mxu0 0
    %1412 = vmatprep.subr.bf16.mxu0 0
    %1413 = vmatpush1.bf16.msra.mxu0 0
    %1414 = vmatprep.subr.bf16.mxu0 0
    %1415 = vmatpush1.bf16.msra.mxu0 0
    %1416 = vmatprep.subr.bf16.mxu0 0
    %1417 = vmatpush1.bf16.msra.mxu0 0
    %1418 = vmatprep.subr.bf16.mxu0 0
    %1419 = vmatpush1.bf16.msra.mxu0 0
    %1420 = vmatprep.mubr.bf16.mxu0 0
    %1421 = vmatmul.mubr.bf16.gmra.mrb[0].mxu0 %v1377
    %v1422 = vpop.f32.mrb[0].mxu0
    %v1423 = vadd.f32 0.0, %v1422
    %v1424 = vpop.f32.mrb[0].mxu0
    %v1425 = vpop.f32.mrb[0].mxu0
    %v1426 = vadd.f32 0.0, %v1425
    %v1427 = vpop.f32.mrb[0].mxu0
    %1428 = vmatprep.mubr.bf16.mxu0 0
    %1429 = vmatmul.mubr.bf16.gmra.mrb[0].mxu0 %v1380
    %v1430 = vpop.f32.mrb[0].mxu0
    %v1431 = vadd.f32 0.0, %v1430
    %v1432 = vpop.f32.mrb[0].mxu0
    %v1433 = vpop.f32.mrb[0].mxu0
    %v1434 = vadd.f32 0.0, %v1433
    %v1435 = vpop.f32.mrb[0].mxu0
    %1436 = vmatprep.mubr.bf16.mxu0 0
    %1437 = vmatmul.mubr.bf16.gmra.mrb[0].mxu0 %v1383
    %v1438 = vpop.f32.mrb[0].mxu0
    %v1439 = vadd.f32 0.0, %v1438
    %v1440 = vpop.f32.mrb[0].mxu0
    %v1441 = vpop.f32.mrb[0].mxu0
    %v1442 = vpop.f32.mrb[0].mxu0
    %1443 = vdwg.mxu0
    %v1444 = vadd.f32 %v1131, %v1423
    %v1445 = vadd.f32 %v1134, %v1426
    %v1446 = vadd.f32 %v1139, %v1431
    %v1447 = vadd.f32 %v1142, %v1434
    %v1448 = vadd.f32 %v1147, %v1439
    %1449 = vrot.lane.b32.xlu0 %v553, 104
    %v1450 = vpop.permute.xlu0 %1449
    %1451 = vrot.lane.b32.xlu0 %v554, 104
    %v1452 = vpop.permute.xlu0 %1451
    %1453 = vrot.lane.b32.xlu0 %v555, 104
    %v1454 = vpop.permute.xlu0 %1453
    %1455 = vrot.lane.b32.xlu0 %v556, 72
    %v1456 = vpop.permute.xlu0 %1455
    %1457 = vrot.lane.b32.xlu0 %v557, 72
    %v1458 = vpop.permute.xlu0 %1457
    %1459 = vrot.lane.b32.xlu0 %v558, 72
    %v1460 = vpop.permute.xlu0 %1459
    %v1462 = vsel %vm572, %v1450, 0
    %v1465 = vsel %vm572, %v1452, 0
    %v1468 = vsel %vm572, %v1454, 0
    %v1471 = vsel %vm572, %v1456, 0
    %v1474 = vsel %vm572, %v1458, 0
    %v1477 = vsel %vm572, %v1460, 0
    %1479 = vmatprep.subr.bf16.mxu0 0
    %1480 = vmatpush1.bf16.xpose.msra.mxu0 %v1471
    %1481 = vmatprep.subr.bf16.mxu0 0
    %1482 = vmatpush1.bf16.xpose.msra.mxu0 %v1474
    %1483 = vmatprep.subr.bf16.mxu0 0
    %1484 = vmatpush1.bf16.xpose.msra.mxu0 %v1477
    %1485 = vmatprep.subr.bf16.mxu0 0
    %1486 = vmatpush1.bf16.xpose.msra.mxu0 0
    %1487 = vmatprep.subr.bf16.mxu0 0
    %1488 = vmatpush1.bf16.xpose.msra.mxu0 0
    %1489 = vmatprep.subr.bf16.mxu0 0
    %1490 = vmatpush1.bf16.xpose.msra.mxu0 0
    %1491 = vmatprep.subr.bf16.mxu0 0
    %1492 = vmatpush1.bf16.xpose.msra.mxu0 0
    %1493 = vmatprep.subr.bf16.mxu0 0
    %1494 = vmatpush1.bf16.xpose.msra.mxu0 0
    %1495 = vmatprep.subr.bf16.mxu0 0
    %1496 = vmatpush1.bf16.xpose.msra.mxu0 0
    %1497 = vmatprep.subr.bf16.mxu0 0
    %1498 = vmatpush1.bf16.xpose.msra.mxu0 0
    %1499 = vmatprep.subr.bf16.mxu0 0
    %1500 = vmatpush1.bf16.xpose.msra.mxu0 0
    %1501 = vmatprep.subr.bf16.mxu0 0
    %1502 = vmatpush1.bf16.xpose.msra.mxu0 0
    %1503 = vmatprep.subr.bf16.mxu0 0
    %1504 = vmatpush1.bf16.xpose.msra.mxu0 0
    %1505 = vmatprep.subr.bf16.mxu0 0
    %1506 = vmatpush1.bf16.xpose.msra.mxu0 0
    %1507 = vmatprep.subr.bf16.mxu0 0
    %1508 = vmatpush1.bf16.xpose.msra.mxu0 0
    %1509 = vmatprep.subr.bf16.mxu0 0
    %1510 = vmatpush1.bf16.xpose.msra.mxu0 0
    %1511 = vmatprep.mubr.bf16.mxu0 0
    %1512 = vmatmul.mubr.bf16.gmra.mrb[0].mxu0 %v1462
    %v1513 = vpop.f32.mrb[0].mxu0
    %v1514 = vadd.f32 %v371, %v1513
    %v1515 = vpop.f32.mrb[0].mxu0
    %v1516 = vpop.f32.mrb[0].mxu0
    %v1517 = vadd.f32 %v372, %v1516
    %v1518 = vpop.f32.mrb[0].mxu0
    %1519 = vmatprep.mubr.bf16.mxu0 0
    %1520 = vmatmul.mubr.bf16.gmra.mrb[0].mxu0 %v1465
    %v1521 = vpop.f32.mrb[0].mxu0
    %v1522 = vadd.f32 %v373, %v1521
    %v1523 = vpop.f32.mrb[0].mxu0
    %v1524 = vpop.f32.mrb[0].mxu0
    %v1525 = vadd.f32 %v374, %v1524
    %v1526 = vpop.f32.mrb[0].mxu0
    %1527 = vmatprep.mubr.bf16.mxu0 0
    %1528 = vmatmul.mubr.bf16.gmra.mrb[0].mxu0 %v1468
    %v1529 = vpop.f32.mrb[0].mxu0
    %v1530 = vadd.f32 %v375, %v1529
    %v1531 = vpop.f32.mrb[0].mxu0
    %v1532 = vpop.f32.mrb[0].mxu0
    %v1533 = vpop.f32.mrb[0].mxu0
    %1534 = vdwg.mxu0
    %v1535 = vsel %vm647, %v1514, -inf
    %1536 = vmax.xlane.f32.xlu0 %v1535
    %v1537 = vpop.xlane.xlu0 %1536
    %v1538 = vsel %vm647, %v1517, -inf
    %1539 = vmax.xlane.f32.xlu0 %v1538
    %v1540 = vpop.xlane.xlu0 %1539
    %v1541 = vsel %vm647, %v1522, -inf
    %1542 = vmax.xlane.f32.xlu0 %v1541
    %v1543 = vpop.xlane.xlu0 %1542
    %v1544 = vsel %vm647, %v1525, -inf
    %1545 = vmax.xlane.f32.xlu0 %v1544
    %v1546 = vpop.xlane.xlu0 %1545
    %v1547 = vsel %vm660, %v1530, -inf
    %1548 = vmax.xlane.f32.xlu0 %v1547
    %v1549 = vpop.xlane.xlu0 %1548
    %v1550 = vsub.f32 %v1514, %v1537
    %v1551 = vsub.f32 %v1517, %v1540
    %v1552 = vsub.f32 %v1522, %v1543
    %v1553 = vsub.f32 %v1525, %v1546
    %v1554 = vsub.f32 %v1530, %v1549
    %v1555 = vmul.f32 %v1550, 1.442695
    %v1556 = vpow.pop %v1555
    %v1557 = vmul.f32 %v1551, 1.442695
    %v1558 = vpow.pop %v1557
    %v1559 = vmul.f32 %v1552, 1.442695
    %v1560 = vpow.pop %v1559
    %v1561 = vmul.f32 %v1553, 1.442695
    %v1562 = vpow.pop %v1561
    %v1563 = vmul.f32 %v1554, 1.442695
    %v1564 = vpow.pop %v1563
    %v1565 = vsel %vm647, %v1556, 0.0
    %1566 = vadd.xlane.f32.xlu0 %v1565
    %v1567 = vpop.xlane.xlu0 %1566
    %v1568 = vsel %vm647, %v1558, 0.0
    %1569 = vadd.xlane.f32.xlu0 %v1568
    %v1570 = vpop.xlane.xlu0 %1569
    %v1571 = vsel %vm647, %v1560, 0.0
    %1572 = vadd.xlane.f32.xlu0 %v1571
    %v1573 = vpop.xlane.xlu0 %1572
    %v1574 = vsel %vm647, %v1562, 0.0
    %1575 = vadd.xlane.f32.xlu0 %v1574
    %v1576 = vpop.xlane.xlu0 %1575
    %v1577 = vsel %vm660, %v1564, 0.0
    %1578 = vadd.xlane.f32.xlu0 %v1577
    %v1579 = vpop.xlane.xlu0 %1578
    %v1580 = vrcp.pop %v1567
    %v1581 = vrcp.pop %v1570
    %v1582 = vrcp.pop %v1573
    %v1583 = vrcp.pop %v1576
    %v1584 = vrcp.pop %v1579
    %v1585 = vmul.f32 %v1556, %v1580
    %v1586 = vmul.f32 %v1558, %v1581
    %v1587 = vmul.f32 %v1560, %v1582
    %v1588 = vmul.f32 %v1562, %v1583
    %v1589 = vmul.f32 %v1564, %v1584
    %v1590 = vpack.c.bf16 %v1586, %v1585
    %v1591 = vpack.c.bf16 %v1588, %v1587
    %v1592 = vpack.c.bf16 %v1589, %v1589
    %1593 = vrot.lane.b32.xlu0 %v556, 40
    %v1594 = vpop.permute.xlu0 %1593
    %1595 = vrot.lane.b32.xlu0 %v557, 40
    %v1596 = vpop.permute.xlu0 %1595
    %1597 = vrot.lane.b32.xlu0 %v558, 40
    %v1598 = vpop.permute.xlu0 %1597
    %v1602 = vsel %vm647, %v1590, 0
    %v1605 = vsel %vm647, %v1591, 0
    %v1608 = vsel %vm647, %v1592, 0
    %v1611 = vsel %vm724, %v1598, 0
    %1613 = vmatprep.subr.bf16.mxu0 0
    %1614 = vmatpush1.bf16.msra.mxu0 %v1594
    %1615 = vmatprep.subr.bf16.mxu0 0
    %1616 = vmatpush1.bf16.msra.mxu0 %v1596
    %1617 = vmatprep.subr.bf16.mxu0 0
    %1618 = vmatpush1.bf16.msra.mxu0 %v1611
    %1619 = vmatprep.subr.bf16.mxu0 0
    %1620 = vmatpush1.bf16.msra.mxu0 0
    %1621 = vmatprep.subr.bf16.mxu0 0
    %1622 = vmatpush1.bf16.msra.mxu0 0
    %1623 = vmatprep.subr.bf16.mxu0 0
    %1624 = vmatpush1.bf16.msra.mxu0 0
    %1625 = vmatprep.subr.bf16.mxu0 0
    %1626 = vmatpush1.bf16.msra.mxu0 0
    %1627 = vmatprep.subr.bf16.mxu0 0
    %1628 = vmatpush1.bf16.msra.mxu0 0
    %1629 = vmatprep.subr.bf16.mxu0 0
    %1630 = vmatpush1.bf16.msra.mxu0 0
    %1631 = vmatprep.subr.bf16.mxu0 0
    %1632 = vmatpush1.bf16.msra.mxu0 0
    %1633 = vmatprep.subr.bf16.mxu0 0
    %1634 = vmatpush1.bf16.msra.mxu0 0
    %1635 = vmatprep.subr.bf16.mxu0 0
    %1636 = vmatpush1.bf16.msra.mxu0 0
    %1637 = vmatprep.subr.bf16.mxu0 0
    %1638 = vmatpush1.bf16.msra.mxu0 0
    %1639 = vmatprep.subr.bf16.mxu0 0
    %1640 = vmatpush1.bf16.msra.mxu0 0
    %1641 = vmatprep.subr.bf16.mxu0 0
    %1642 = vmatpush1.bf16.msra.mxu0 0
    %1643 = vmatprep.subr.bf16.mxu0 0
    %1644 = vmatpush1.bf16.msra.mxu0 0
    %1645 = vmatprep.mubr.bf16.mxu0 0
    %1646 = vmatmul.mubr.bf16.gmra.mrb[0].mxu0 %v1602
    %v1647 = vpop.f32.mrb[0].mxu0
    %v1648 = vadd.f32 0.0, %v1647
    %v1649 = vpop.f32.mrb[0].mxu0
    %v1650 = vpop.f32.mrb[0].mxu0
    %v1651 = vadd.f32 0.0, %v1650
    %v1652 = vpop.f32.mrb[0].mxu0
    %1653 = vmatprep.mubr.bf16.mxu0 0
    %1654 = vmatmul.mubr.bf16.gmra.mrb[0].mxu0 %v1605
    %v1655 = vpop.f32.mrb[0].mxu0
    %v1656 = vadd.f32 0.0, %v1655
    %v1657 = vpop.f32.mrb[0].mxu0
    %v1658 = vpop.f32.mrb[0].mxu0
    %v1659 = vadd.f32 0.0, %v1658
    %v1660 = vpop.f32.mrb[0].mxu0
    %1661 = vmatprep.mubr.bf16.mxu0 0
    %1662 = vmatmul.mubr.bf16.gmra.mrb[0].mxu0 %v1608
    %v1663 = vpop.f32.mrb[0].mxu0
    %v1664 = vadd.f32 0.0, %v1663
    %v1665 = vpop.f32.mrb[0].mxu0
    %v1666 = vpop.f32.mrb[0].mxu0
    %v1667 = vpop.f32.mrb[0].mxu0
    %1668 = vdwg.mxu0
    %v1669 = vpack.c.bf16 %v1651, %v1648
    %v1670 = vpack.c.bf16 %v1659, %v1656
    %v1671 = vpack.c.bf16 %v1664, %v1664
    %v1672 = vpack.c.bf16 %v562, %v562
    %v1674 = vsel %vm572, %v1669, 0
    %v1677 = vsel %vm572, %v1670, 0
    %v1680 = vsel %vm572, %v1671, 0
    %v1683 = vsel %vm1024, %v1672, 0
    %1685 = vmatprep.subr.bf16.mxu0 0
    %1686 = vmatpush1.bf16.msra.mxu0 %v1683
    %1687 = vmatprep.subr.bf16.mxu0 0
    %1688 = vmatpush1.bf16.msra.mxu0 0
    %1689 = vmatprep.subr.bf16.mxu0 0
    %1690 = vmatpush1.bf16.msra.mxu0 0
    %1691 = vmatprep.subr.bf16.mxu0 0
    %1692 = vmatpush1.bf16.msra.mxu0 0
    %1693 = vmatprep.subr.bf16.mxu0 0
    %1694 = vmatpush1.bf16.msra.mxu0 0
    %1695 = vmatprep.subr.bf16.mxu0 0
    %1696 = vmatpush1.bf16.msra.mxu0 0
    %1697 = vmatprep.subr.bf16.mxu0 0
    %1698 = vmatpush1.bf16.msra.mxu0 0
    %1699 = vmatprep.subr.bf16.mxu0 0
    %1700 = vmatpush1.bf16.msra.mxu0 0
    %1701 = vmatprep.subr.bf16.mxu0 0
    %1702 = vmatpush1.bf16.msra.mxu0 0
    %1703 = vmatprep.subr.bf16.mxu0 0
    %1704 = vmatpush1.bf16.msra.mxu0 0
    %1705 = vmatprep.subr.bf16.mxu0 0
    %1706 = vmatpush1.bf16.msra.mxu0 0
    %1707 = vmatprep.subr.bf16.mxu0 0
    %1708 = vmatpush1.bf16.msra.mxu0 0
    %1709 = vmatprep.subr.bf16.mxu0 0
    %1710 = vmatpush1.bf16.msra.mxu0 0
    %1711 = vmatprep.subr.bf16.mxu0 0
    %1712 = vmatpush1.bf16.msra.mxu0 0
    %1713 = vmatprep.subr.bf16.mxu0 0
    %1714 = vmatpush1.bf16.msra.mxu0 0
    %1715 = vmatprep.subr.bf16.mxu0 0
    %1716 = vmatpush1.bf16.msra.mxu0 0
    %1717 = vmatprep.mubr.bf16.mxu0 0
    %1718 = vmatmul.mubr.bf16.gmra.mrb[0].mxu0 %v1674
    %v1719 = vpop.f32.mrb[0].mxu0
    %v1720 = vadd.f32 0.0, %v1719
    %v1721 = vpop.f32.mrb[0].mxu0
    %v1722 = vpop.f32.mrb[0].mxu0
    %v1723 = vadd.f32 0.0, %v1722
    %v1724 = vpop.f32.mrb[0].mxu0
    %1725 = vmatprep.mubr.bf16.mxu0 0
    %1726 = vmatmul.mubr.bf16.gmra.mrb[0].mxu0 %v1677
    %v1727 = vpop.f32.mrb[0].mxu0
    %v1728 = vadd.f32 0.0, %v1727
    %v1729 = vpop.f32.mrb[0].mxu0
    %v1730 = vpop.f32.mrb[0].mxu0
    %v1731 = vadd.f32 0.0, %v1730
    %v1732 = vpop.f32.mrb[0].mxu0
    %1733 = vmatprep.mubr.bf16.mxu0 0
    %1734 = vmatmul.mubr.bf16.gmra.mrb[0].mxu0 %v1680
    %v1735 = vpop.f32.mrb[0].mxu0
    %v1736 = vadd.f32 0.0, %v1735
    %v1737 = vpop.f32.mrb[0].mxu0
    %v1738 = vpop.f32.mrb[0].mxu0
    %v1739 = vpop.f32.mrb[0].mxu0
    %1740 = vdwg.mxu0
    %v1741 = vadd.f32 %v1444, %v1720
    %v1742 = vadd.f32 %v1445, %v1723
    %v1743 = vadd.f32 %v1446, %v1728
    %v1744 = vadd.f32 %v1447, %v1731
    %v1745 = vadd.f32 %v1448, %v1736
    %v1746 = vadd.f32 %v366, %v1741
    %v1747 = vadd.f32 %v367, %v1742
    %v1748 = vadd.f32 %v368, %v1743
    %v1749 = vadd.f32 %v369, %v1744
    %v1750 = vadd.f32 %v370, %v1745
    %v1751 = vld [vmem:[%s15] sm:$0x1]
    %v1753 = vlaneseq
    %v1754 = vshrl.u32 %v1753, 7
    %v1755 = vsub.s32 0, %v1754
    %v1756 = vrot.slane %v1751, %v1755
    %v1758 = vadd.f32 %v1746, %v1756
    %v1759 = vadd.f32 %v1747, %v1756
    %v1760 = vadd.f32 %v1748, %v1756
    %v1761 = vadd.f32 %v1749, %v1756
    %v1762 = vadd.f32 %v1750, %v1756
    %v1763 = vld [vmem:[%s16] sm:$0x1]
    %v1764 = vld [vmem:[%s17] sm:$0x1]
    %v1765 = vsel %vm255, %v1758, 0.0
    %1766 = vadd.xlane.f32.xlu0 %v1765
    %v1767 = vpop.xlane.xlu0 %1766
    %v1768 = vsel %vm255, %v1759, 0.0
    %1769 = vadd.xlane.f32.xlu0 %v1768
    %v1770 = vpop.xlane.xlu0 %1769
    %v1771 = vsel %vm255, %v1760, 0.0
    %1772 = vadd.xlane.f32.xlu0 %v1771
    %v1773 = vpop.xlane.xlu0 %1772
    %v1774 = vsel %vm255, %v1761, 0.0
    %1775 = vadd.xlane.f32.xlu0 %v1774
    %v1776 = vpop.xlane.xlu0 %1775
    %v1777 = vsel %vm390, %v1762, 0.0
    %1778 = vadd.xlane.f32.xlu0 %v1777
    %v1779 = vpop.xlane.xlu0 %1778
    %v1780 = vmul.f32 %v1767, %v394
    %v1781 = vmul.f32 %v1770, %v394
    %v1782 = vmul.f32 %v1773, %v394
    %v1783 = vmul.f32 %v1776, %v394
    %v1784 = vmul.f32 %v1779, %v394
    %v1785 = vsub.f32 %v1758, %v1780
    %v1786 = vsub.f32 %v1759, %v1781
    %v1787 = vsub.f32 %v1760, %v1782
    %v1788 = vsub.f32 %v1761, %v1783
    %v1789 = vsub.f32 %v1762, %v1784
    %v1790 = vmul.f32 %v1785, %v1785
    %v1791 = vmul.f32 %v1786, %v1786
    %v1792 = vmul.f32 %v1787, %v1787
    %v1793 = vmul.f32 %v1788, %v1788
    %v1794 = vmul.f32 %v1789, %v1789
    %v1795 = vsel %vm255, %v1790, 0.0
    %1796 = vadd.xlane.f32.xlu0 %v1795
    %v1797 = vpop.xlane.xlu0 %1796
    %v1798 = vsel %vm255, %v1791, 0.0
    %1799 = vadd.xlane.f32.xlu0 %v1798
    %v1800 = vpop.xlane.xlu0 %1799
    %v1801 = vsel %vm255, %v1792, 0.0
    %1802 = vadd.xlane.f32.xlu0 %v1801
    %v1803 = vpop.xlane.xlu0 %1802
    %v1804 = vsel %vm255, %v1793, 0.0
    %1805 = vadd.xlane.f32.xlu0 %v1804
    %v1806 = vpop.xlane.xlu0 %1805
    %v1807 = vsel %vm390, %v1794, 0.0
    %1808 = vadd.xlane.f32.xlu0 %v1807
    %v1809 = vpop.xlane.xlu0 %1808
    %v1810 = vmul.f32 %v1797, %v394
    %v1811 = vmul.f32 %v1800, %v394
    %v1812 = vmul.f32 %v1803, %v394
    %v1813 = vmul.f32 %v1806, %v394
    %v1814 = vmul.f32 %v1809, %v394
    %v1815 = vadd.f32 %v1810, 1e-05
    %v1816 = vadd.f32 %v1811, 1e-05
    %v1817 = vadd.f32 %v1812, 1e-05
    %v1818 = vadd.f32 %v1813, 1e-05
    %v1819 = vadd.f32 %v1814, 1e-05
    %v1820 = vrsqrt.pop %v1815
    %v1821 = vrsqrt.pop %v1816
    %v1822 = vrsqrt.pop %v1817
    %v1823 = vrsqrt.pop %v1818
    %v1824 = vrsqrt.pop %v1819
    %v1825 = vmul.f32 %v1785, %v1820
    %v1826 = vmul.f32 %v1786, %v1821
    %v1827 = vmul.f32 %v1787, %v1822
    %v1828 = vmul.f32 %v1788, %v1823
    %v1829 = vmul.f32 %v1789, %v1824
    %v1831 = vlaneseq
    %v1832 = vshrl.u32 %v1831, 7
    %v1833 = vsub.s32 0, %v1832
    %v1834 = vrot.slane %v1763, %v1833
    %v1836 = vmul.f32 %v1825, %v1834
    %v1837 = vmul.f32 %v1826, %v1834
    %v1838 = vmul.f32 %v1827, %v1834
    %v1839 = vmul.f32 %v1828, %v1834
    %v1840 = vmul.f32 %v1829, %v1834
    %v1842 = vlaneseq
    %v1843 = vshrl.u32 %v1842, 7
    %v1844 = vsub.s32 0, %v1843
    %v1845 = vrot.slane %v1764, %v1844
    %v1847 = vadd.f32 %v1836, %v1845
    %v1848 = vadd.f32 %v1837, %v1845
    %v1849 = vadd.f32 %v1838, %v1845
    %v1850 = vadd.f32 %v1839, %v1845
    %v1851 = vadd.f32 %v1840, %v1845
    %v1852 = vld [vmem:[%s18] sm:$0xff]
    %v1853 = vld [vmem:[%s18 + $0x8] sm:$0xff]
    %v1854 = vld [vmem:[%s18 + $0x10] sm:$0xff]
    %v1855 = vld [vmem:[%s18 + $0x18] sm:$0xff]
    %v1856 = vpack.c.bf16 %v1848, %v1847
    %v1857 = vpack.c.bf16 %v1850, %v1849
    %v1858 = vpack.c.bf16 %v1851, %v1851
    %v1859 = vpack.c.bf16 %v1853, %v1852
    %v1860 = vpack.c.bf16 %v1855, %v1854
    %v1861 = vld [vmem:[%s19] sm:$0x1]
    %v1863 = vlaneseq
    %v1864 = vshrl.u32 %v1863, 7
    %v1865 = vsub.s32 0, %v1864
    %v1866 = vrot.slane %v1861, %v1865
    %v1869 = vsel %vm255, %v1856, 0
    %v1872 = vsel %vm255, %v1857, 0
    %v1875 = vsel %vm255, %v1858, 0
    %1877 = vmatprep.subr.bf16.mxu0 0
    %1878 = vmatpush1.bf16.msra.mxu0 %v1859
    %1879 = vmatprep.subr.bf16.mxu0 0
    %1880 = vmatpush1.bf16.msra.mxu0 %v1860
    %1881 = vmatprep.subr.bf16.mxu0 0
    %1882 = vmatpush1.bf16.msra.mxu0 0
    %1883 = vmatprep.subr.bf16.mxu0 0
    %1884 = vmatpush1.bf16.msra.mxu0 0
    %1885 = vmatprep.subr.bf16.mxu0 0
    %1886 = vmatpush1.bf16.msra.mxu0 0
    %1887 = vmatprep.subr.bf16.mxu0 0
    %1888 = vmatpush1.bf16.msra.mxu0 0
    %1889 = vmatprep.subr.bf16.mxu0 0
    %1890 = vmatpush1.bf16.msra.mxu0 0
    %1891 = vmatprep.subr.bf16.mxu0 0
    %1892 = vmatpush1.bf16.msra.mxu0 0
    %1893 = vmatprep.subr.bf16.mxu0 0
    %1894 = vmatpush1.bf16.msra.mxu0 0
    %1895 = vmatprep.subr.bf16.mxu0 0
    %1896 = vmatpush1.bf16.msra.mxu0 0
    %1897 = vmatprep.subr.bf16.mxu0 0
    %1898 = vmatpush1.bf16.msra.mxu0 0
    %1899 = vmatprep.subr.bf16.mxu0 0
    %1900 = vmatpush1.bf16.msra.mxu0 0
    %1901 = vmatprep.subr.bf16.mxu0 0
    %1902 = vmatpush1.bf16.msra.mxu0 0
    %1903 = vmatprep.subr.bf16.mxu0 0
    %1904 = vmatpush1.bf16.msra.mxu0 0
    %1905 = vmatprep.subr.bf16.mxu0 0
    %1906 = vmatpush1.bf16.msra.mxu0 0
    %1907 = vmatprep.subr.bf16.mxu0 0
    %1908 = vmatpush1.bf16.msra.mxu0 0
    %1909 = vmatprep.mubr.bf16.mxu0 0
    %1910 = vmatmul.mubr.bf16.gmra.mrb[0].mxu0 %v1869
    %v1911 = vpop.f32.mrb[0].mxu0
    %v1912 = vadd.f32 %v1866, %v1911
    %v1913 = vpop.f32.mrb[0].mxu0
    %v1914 = vpop.f32.mrb[0].mxu0
    %v1915 = vadd.f32 %v1866, %v1914
    %v1916 = vpop.f32.mrb[0].mxu0
    %1917 = vmatprep.mubr.bf16.mxu0 0
    %1918 = vmatmul.mubr.bf16.gmra.mrb[0].mxu0 %v1872
    %v1919 = vpop.f32.mrb[0].mxu0
    %v1920 = vadd.f32 %v1866, %v1919
    %v1921 = vpop.f32.mrb[0].mxu0
    %v1922 = vpop.f32.mrb[0].mxu0
    %v1923 = vadd.f32 %v1866, %v1922
    %v1924 = vpop.f32.mrb[0].mxu0
    %1925 = vmatprep.mubr.bf16.mxu0 0
    %1926 = vmatmul.mubr.bf16.gmra.mrb[0].mxu0 %v1875
    %v1927 = vpop.f32.mrb[0].mxu0
    %v1928 = vadd.f32 %v1866, %v1927
    %v1929 = vpop.f32.mrb[0].mxu0
    %v1930 = vpop.f32.mrb[0].mxu0
    %v1931 = vpop.f32.mrb[0].mxu0
    %1932 = vdwg.mxu0
    %v1933 = vmul.f32 %v1912, %v1912
    %v1934 = vmul.f32 %v1915, %v1915
    %v1935 = vmul.f32 %v1920, %v1920
    %v1936 = vmul.f32 %v1923, %v1923
    %v1937 = vmul.f32 %v1928, %v1928
    %v1938 = vmul.f32 %v1912, %v1933
    %v1939 = vmul.f32 %v1915, %v1934
    %v1940 = vmul.f32 %v1920, %v1935
    %v1941 = vmul.f32 %v1923, %v1936
    %v1942 = vmul.f32 %v1928, %v1937
    %v1943 = vmul.f32 %v1938, 0.044715
    %v1944 = vmul.f32 %v1939, 0.044715
    %v1945 = vmul.f32 %v1940, 0.044715
    %v1946 = vmul.f32 %v1941, 0.044715
    %v1947 = vmul.f32 %v1942, 0.044715
    %v1948 = vadd.f32 %v1912, %v1943
    %v1949 = vadd.f32 %v1915, %v1944
    %v1950 = vadd.f32 %v1920, %v1945
    %v1951 = vadd.f32 %v1923, %v1946
    %v1952 = vadd.f32 %v1928, %v1947
    %v1953 = vmul.f32 %v1948, 0.7978846
    %v1954 = vmul.f32 %v1949, 0.7978846
    %v1955 = vmul.f32 %v1950, 0.7978846
    %v1956 = vmul.f32 %v1951, 0.7978846
    %v1957 = vmul.f32 %v1952, 0.7978846
    %v1958 = vtanh.pop %v1953
    %v1959 = vtanh.pop %v1954
    %v1960 = vtanh.pop %v1955
    %v1961 = vtanh.pop %v1956
    %v1962 = vtanh.pop %v1957
    %v1963 = vadd.f32 %v1958, 1.0
    %v1964 = vadd.f32 %v1959, 1.0
    %v1965 = vadd.f32 %v1960, 1.0
    %v1966 = vadd.f32 %v1961, 1.0
    %v1967 = vadd.f32 %v1962, 1.0
    %v1968 = vmul.f32 %v1963, 0.5
    %v1969 = vmul.f32 %v1964, 0.5
    %v1970 = vmul.f32 %v1965, 0.5
    %v1971 = vmul.f32 %v1966, 0.5
    %v1972 = vmul.f32 %v1967, 0.5
    %v1973 = vmul.f32 %v1912, %v1968
    %v1974 = vmul.f32 %v1915, %v1969
    %v1975 = vmul.f32 %v1920, %v1970
    %v1976 = vmul.f32 %v1923, %v1971
    %v1977 = vmul.f32 %v1928, %v1972
    %v1978 = vld [vmem:[%s20] sm:$0xff]
    %v1979 = vld [vmem:[%s20 + $0x8] sm:$0xff]
    %v1980 = vld [vmem:[%s20 + $0x10] sm:$0xff]
    %v1981 = vld [vmem:[%s20 + $0x18] sm:$0xff]
    %v1982 = vld [vmem:[%s20 + $0x20] sm:$0xff]
    %v1983 = vld [vmem:[%s20 + $0x28] sm:$0xff]
    %v1984 = vld [vmem:[%s20 + $0x30] sm:$0xff]
    %v1985 = vld [vmem:[%s20 + $0x38] sm:$0xff]
    %v1986 = vld [vmem:[%s20 + $0x40] sm:$0xff]
    %v1987 = vld [vmem:[%s20 + $0x48] sm:$0xff]
    %v1988 = vld [vmem:[%s20 + $0x50] sm:$0xff]
    %v1989 = vld [vmem:[%s20 + $0x58] sm:$0xff]
    %v1990 = vld [vmem:[%s20 + $0x60] sm:$0xff]
    %v1991 = vld [vmem:[%s20 + $0x68] sm:$0xff]
    %v1992 = vld [vmem:[%s20 + $0x70] sm:$0xff]
    %v1993 = vld [vmem:[%s20 + $0x78] sm:$0xff]
    %v1994 = vpack.c.bf16 %v1974, %v1973
    %v1995 = vpack.c.bf16 %v1976, %v1975
    %v1996 = vpack.c.bf16 %v1977, %v1977
    %v1997 = vpack.c.bf16 %v1979, %v1978
    %v1998 = vpack.c.bf16 %v1981, %v1980
    %v1999 = vpack.c.bf16 %v1983, %v1982
    %v2000 = vpack.c.bf16 %v1985, %v1984
    %v2001 = vpack.c.bf16 %v1987, %v1986
    %v2002 = vpack.c.bf16 %v1989, %v1988
    %v2003 = vpack.c.bf16 %v1991, %v1990
    %v2004 = vpack.c.bf16 %v1993, %v1992
    %2005 = vmatprep.subr.bf16.mxu0 0
    %2006 = vmatpush1.bf16.msra.mxu0 %v1997
    %2007 = vmatprep.subr.bf16.mxu0 0
    %2008 = vmatpush1.bf16.msra.mxu0 %v1998
    %2009 = vmatprep.subr.bf16.mxu0 0
    %2010 = vmatpush1.bf16.msra.mxu0 %v1999
    %2011 = vmatprep.subr.bf16.mxu0 0
    %2012 = vmatpush1.bf16.msra.mxu0 %v2000
    %2013 = vmatprep.subr.bf16.mxu0 0
    %2014 = vmatpush1.bf16.msra.mxu0 %v2001
    %2015 = vmatprep.subr.bf16.mxu0 0
    %2016 = vmatpush1.bf16.msra.mxu0 %v2002
    %2017 = vmatprep.subr.bf16.mxu0 0
    %2018 = vmatpush1.bf16.msra.mxu0 %v2003
    %2019 = vmatprep.subr.bf16.mxu0 0
    %2020 = vmatpush1.bf16.msra.mxu0 %v2004
    %2021 = vmatprep.subr.bf16.mxu0 0
    %2022 = vmatpush1.bf16.msra.mxu0 0
    %2023 = vmatprep.subr.bf16.mxu0 0
    %2024 = vmatpush1.bf16.msra.mxu0 0
    %2025 = vmatprep.subr.bf16.mxu0 0
    %2026 = vmatpush1.bf16.msra.mxu0 0
    %2027 = vmatprep.subr.bf16.mxu0 0
    %2028 = vmatpush1.bf16.msra.mxu0 0
    %2029 = vmatprep.subr.bf16.mxu0 0
    %2030 = vmatpush1.bf16.msra.mxu0 0
    %2031 = vmatprep.subr.bf16.mxu0 0
    %2032 = vmatpush1.bf16.msra.mxu0 0
    %2033 = vmatprep.subr.bf16.mxu0 0
    %2034 = vmatpush1.bf16.msra.mxu0 0
    %2035 = vmatprep.subr.bf16.mxu0 0
    %2036 = vmatpush1.bf16.msra.mxu0 0
    %2037 = vmatprep.mubr.bf16.mxu0 0
    %2038 = vmatmul.mubr.bf16.gmra.mrb[0].mxu0 %v1994
    %v2039 = vpop.f32.mrb[0].mxu0
    %v2040 = vadd.f32 0.0, %v2039
    %v2041 = vpop.f32.mrb[0].mxu0
    %v2042 = vpop.f32.mrb[0].mxu0
    %v2043 = vadd.f32 0.0, %v2042
    %v2044 = vpop.f32.mrb[0].mxu0
    %2045 = vmatprep.mubr.bf16.mxu0 0
    %2046 = vmatmul.mubr.bf16.gmra.mrb[0].mxu0 %v1995
    %v2047 = vpop.f32.mrb[0].mxu0
    %v2048 = vadd.f32 0.0, %v2047
    %v2049 = vpop.f32.mrb[0].mxu0
    %v2050 = vpop.f32.mrb[0].mxu0
    %v2051 = vadd.f32 0.0, %v2050
    %v2052 = vpop.f32.mrb[0].mxu0
    %2053 = vmatprep.mubr.bf16.mxu0 0
    %2054 = vmatmul.mubr.bf16.gmra.mrb[0].mxu0 %v1996
    %v2055 = vpop.f32.mrb[0].mxu0
    %v2056 = vadd.f32 0.0, %v2055
    %v2057 = vpop.f32.mrb[0].mxu0
    %v2058 = vpop.f32.mrb[0].mxu0
    %v2059 = vpop.f32.mrb[0].mxu0
    %2060 = vdwg.mxu0
    %v2061 = vadd.f32 %v1758, %v2040
    %v2062 = vadd.f32 %v1759, %v2043
    %v2063 = vadd.f32 %v1760, %v2048
    %v2064 = vadd.f32 %v1761, %v2051
    %v2065 = vadd.f32 %v1762, %v2056
    %v2066 = vld [vmem:[%s21] sm:$0x1]
    %v2068 = vlaneseq
    %v2069 = vshrl.u32 %v2068, 7
    %v2070 = vsub.s32 0, %v2069
    %v2071 = vrot.slane %v2066, %v2070
    %v2073 = vadd.f32 %v2061, %v2071
    %v2074 = vadd.f32 %v2062, %v2071
    %v2075 = vadd.f32 %v2063, %v2071
    %v2076 = vadd.f32 %v2064, %v2071
    %v2077 = vadd.f32 %v2065, %v2071
    %s2078 = scalar_lea.vmem %s10, 1
    %v2079 = vld [vmem:[%s2078] sm:$0x1]
    %s2080 = scalar_lea.vmem %s11, 1
    %v2081 = vld [vmem:[%s2080] sm:$0x1]
    %v2082 = vsel %vm255, %v2073, 0.0
    %2083 = vadd.xlane.f32.xlu0 %v2082
    %v2084 = vpop.xlane.xlu0 %2083
    %v2085 = vsel %vm255, %v2074, 0.0
    %2086 = vadd.xlane.f32.xlu0 %v2085
    %v2087 = vpop.xlane.xlu0 %2086
    %v2088 = vsel %vm255, %v2075, 0.0
    %2089 = vadd.xlane.f32.xlu0 %v2088
    %v2090 = vpop.xlane.xlu0 %2089
    %v2091 = vsel %vm255, %v2076, 0.0
    %2092 = vadd.xlane.f32.xlu0 %v2091
    %v2093 = vpop.xlane.xlu0 %2092
    %v2094 = vsel %vm390, %v2077, 0.0
    %2095 = vadd.xlane.f32.xlu0 %v2094
    %v2096 = vpop.xlane.xlu0 %2095
    %v2097 = vmul.f32 %v2084, %v394
    %v2098 = vmul.f32 %v2087, %v394
    %v2099 = vmul.f32 %v2090, %v394
    %v2100 = vmul.f32 %v2093, %v394
    %v2101 = vmul.f32 %v2096, %v394
    %v2102 = vsub.f32 %v2073, %v2097
    %v2103 = vsub.f32 %v2074, %v2098
    %v2104 = vsub.f32 %v2075, %v2099
    %v2105 = vsub.f32 %v2076, %v2100
    %v2106 = vsub.f32 %v2077, %v2101
    %v2107 = vmul.f32 %v2102, %v2102
    %v2108 = vmul.f32 %v2103, %v2103
    %v2109 = vmul.f32 %v2104, %v2104
    %v2110 = vmul.f32 %v2105, %v2105
    %v2111 = vmul.f32 %v2106, %v2106
    %v2112 = vsel %vm255, %v2107, 0.0
    %2113 = vadd.xlane.f32.xlu0 %v2112
    %v2114 = vpop.xlane.xlu0 %2113
    %v2115 = vsel %vm255, %v2108, 0.0
    %2116 = vadd.xlane.f32.xlu0 %v2115
    %v2117 = vpop.xlane.xlu0 %2116
    %v2118 = vsel %vm255, %v2109, 0.0
    %2119 = vadd.xlane.f32.xlu0 %v2118
    %v2120 = vpop.xlane.xlu0 %2119
    %v2121 = vsel %vm255, %v2110, 0.0
    %2122 = vadd.xlane.f32.xlu0 %v2121
    %v2123 = vpop.xlane.xlu0 %2122
    %v2124 = vsel %vm390, %v2111, 0.0
    %2125 = vadd.xlane.f32.xlu0 %v2124
    %v2126 = vpop.xlane.xlu0 %2125
    %v2127 = vmul.f32 %v2114, %v394
    %v2128 = vmul.f32 %v2117, %v394
    %v2129 = vmul.f32 %v2120, %v394
    %v2130 = vmul.f32 %v2123, %v394
    %v2131 = vmul.f32 %v2126, %v394
    %v2132 = vadd.f32 %v2127, 1e-05
    %v2133 = vadd.f32 %v2128, 1e-05
    %v2134 = vadd.f32 %v2129, 1e-05
    %v2135 = vadd.f32 %v2130, 1e-05
    %v2136 = vadd.f32 %v2131, 1e-05
    %v2137 = vrsqrt.pop %v2132
    %v2138 = vrsqrt.pop %v2133
    %v2139 = vrsqrt.pop %v2134
    %v2140 = vrsqrt.pop %v2135
    %v2141 = vrsqrt.pop %v2136
    %v2142 = vmul.f32 %v2102, %v2137
    %v2143 = vmul.f32 %v2103, %v2138
    %v2144 = vmul.f32 %v2104, %v2139
    %v2145 = vmul.f32 %v2105, %v2140
    %v2146 = vmul.f32 %v2106, %v2141
    %v2148 = vlaneseq
    %v2149 = vshrl.u32 %v2148, 7
    %v2150 = vsub.s32 0, %v2149
    %v2151 = vrot.slane %v2079, %v2150
    %v2153 = vmul.f32 %v2142, %v2151
    %v2154 = vmul.f32 %v2143, %v2151
    %v2155 = vmul.f32 %v2144, %v2151
    %v2156 = vmul.f32 %v2145, %v2151
    %v2157 = vmul.f32 %v2146, %v2151
    %v2159 = vlaneseq
    %v2160 = vshrl.u32 %v2159, 7
    %v2161 = vsub.s32 0, %v2160
    %v2162 = vrot.slane %v2081, %v2161
    %v2164 = vadd.f32 %v2153, %v2162
    %v2165 = vadd.f32 %v2154, %v2162
    %v2166 = vadd.f32 %v2155, %v2162
    %v2167 = vadd.f32 %v2156, %v2162
    %v2168 = vadd.f32 %v2157, %v2162
    %s2169 = scalar_lea.vmem %s12, 32
    %v2170 = vld [vmem:[%s2169] sm:$0xff]
    %v2171 = vld [vmem:[%s2169 + $0x8] sm:$0xff]
    %v2172 = vld [vmem:[%s2169 + $0x10] sm:$0xff]
    %v2173 = vld [vmem:[%s2169 + $0x18] sm:$0xff]
    %v2174 = vpack.c.bf16 %v2165, %v2164
    %v2175 = vpack.c.bf16 %v2167, %v2166
    %v2176 = vpack.c.bf16 %v2168, %v2168
    %v2177 = vpack.c.bf16 %v2171, %v2170
    %v2178 = vpack.c.bf16 %v2173, %v2172
    %s2179 = scalar_lea.vmem %s13, 1
    %v2180 = vld [vmem:[%s2179] sm:$0x1]
    %v2182 = vlaneseq
    %v2183 = vshrl.u32 %v2182, 7
    %v2184 = vsub.s32 0, %v2183
    %v2185 = vrot.slane %v2180, %v2184
    %v2188 = vsel %vm255, %v2174, 0
    %v2191 = vsel %vm255, %v2175, 0
    %v2194 = vsel %vm255, %v2176, 0
    %2196 = vmatprep.subr.bf16.mxu0 0
    %2197 = vmatpush1.bf16.msra.mxu0 %v2177
    %2198 = vmatprep.subr.bf16.mxu0 0
    %2199 = vmatpush1.bf16.msra.mxu0 %v2178
    %2200 = vmatprep.subr.bf16.mxu0 0
    %2201 = vmatpush1.bf16.msra.mxu0 0
    %2202 = vmatprep.subr.bf16.mxu0 0
    %2203 = vmatpush1.bf16.msra.mxu0 0
    %2204 = vmatprep.subr.bf16.mxu0 0
    %2205 = vmatpush1.bf16.msra.mxu0 0
    %2206 = vmatprep.subr.bf16.mxu0 0
    %2207 = vmatpush1.bf16.msra.mxu0 0
    %2208 = vmatprep.subr.bf16.mxu0 0
    %2209 = vmatpush1.bf16.msra.mxu0 0
    %2210 = vmatprep.subr.bf16.mxu0 0
    %2211 = vmatpush1.bf16.msra.mxu0 0
    %2212 = vmatprep.subr.bf16.mxu0 0
    %2213 = vmatpush1.bf16.msra.mxu0 0
    %2214 = vmatprep.subr.bf16.mxu0 0
    %2215 = vmatpush1.bf16.msra.mxu0 0
    %2216 = vmatprep.subr.bf16.mxu0 0
    %2217 = vmatpush1.bf16.msra.mxu0 0
    %2218 = vmatprep.subr.bf16.mxu0 0
    %2219 = vmatpush1.bf16.msra.mxu0 0
    %2220 = vmatprep.subr.bf16.mxu0 0
    %2221 = vmatpush1.bf16.msra.mxu0 0
    %2222 = vmatprep.subr.bf16.mxu0 0
    %2223 = vmatpush1.bf16.msra.mxu0 0
    %2224 = vmatprep.subr.bf16.mxu0 0
    %2225 = vmatpush1.bf16.msra.mxu0 0
    %2226 = vmatprep.subr.bf16.mxu0 0
    %2227 = vmatpush1.bf16.msra.mxu0 0
    %2228 = vmatprep.mubr.bf16.mxu0 0
    %2229 = vmatmul.mubr.bf16.gmra.mrb[0].mxu0 %v2188
    %v2230 = vpop.f32.mrb[0].mxu0
    %v2231 = vadd.f32 %v2185, %v2230
    %v2232 = vpop.f32.mrb[0].mxu0
    %v2233 = vpop.f32.mrb[0].mxu0
    %v2234 = vadd.f32 %v2185, %v2233
    %v2235 = vpop.f32.mrb[0].mxu0
    %2236 = vmatprep.mubr.bf16.mxu0 0
    %2237 = vmatmul.mubr.bf16.gmra.mrb[0].mxu0 %v2191
    %v2238 = vpop.f32.mrb[0].mxu0
    %v2239 = vadd.f32 %v2185, %v2238
    %v2240 = vpop.f32.mrb[0].mxu0
    %v2241 = vpop.f32.mrb[0].mxu0
    %v2242 = vadd.f32 %v2185, %v2241
    %v2243 = vpop.f32.mrb[0].mxu0
    %2244 = vmatprep.mubr.bf16.mxu0 0
    %2245 = vmatmul.mubr.bf16.gmra.mrb[0].mxu0 %v2194
    %v2246 = vpop.f32.mrb[0].mxu0
    %v2247 = vadd.f32 %v2185, %v2246
    %v2248 = vpop.f32.mrb[0].mxu0
    %v2249 = vpop.f32.mrb[0].mxu0
    %v2250 = vpop.f32.mrb[0].mxu0
    %2251 = vdwg.mxu0
    %v2252 = vmul.f32 %v2231, 0.35355338
    %v2253 = vmul.f32 %v2234, 0.35355338
    %v2254 = vmul.f32 %v2239, 0.35355338
    %v2255 = vmul.f32 %v2242, 0.35355338
    %v2256 = vmul.f32 %v2247, 0.35355338
    %v2257 = vpack.c.bf16 %v2253, %v2252
    %v2258 = vpack.c.bf16 %v2255, %v2254
    %v2259 = vpack.c.bf16 %v2256, %v2256
    %v2260 = vpack.c.bf16 %v2234, %v2231
    %v2261 = vpack.c.bf16 %v2242, %v2239
    %v2262 = vpack.c.bf16 %v2247, %v2247
    %s2263 = scalar_lea.vmem %s14, 32
    %v2264 = vld [vmem:[%s2263] sm:$0xff]
    %v2265 = vld [vmem:[%s2263 + $0x8] sm:$0xff]
    %v2266 = vld [vmem:[%s2263 + $0x10] sm:$0xff]
    %v2267 = vld [vmem:[%s2263 + $0x18] sm:$0xff]
    %2271 = vrot.lane.b32.xlu0 %v2260, 96
    %v2272 = vpop.permute.xlu0 %2271
    %2273 = vrot.lane.b32.xlu0 %v2261, 96
    %v2274 = vpop.permute.xlu0 %2273
    %2275 = vrot.lane.b32.xlu0 %v2262, 96
    %v2276 = vpop.permute.xlu0 %2275
    %v2278 = vsel %vm572, %v2257, 0
    %v2281 = vsel %vm572, %v2258, 0
    %v2284 = vsel %vm572, %v2259, 0
    %v2287 = vsel %vm572, %v2272, 0
    %v2290 = vsel %vm572, %v2274, 0
    %v2293 = vsel %vm572, %v2276, 0
    %2295 = vmatprep.subr.bf16.mxu0 0
    %2296 = vmatpush1.bf16.xpose.msra.mxu0 %v2287
    %2297 = vmatprep.subr.bf16.mxu0 0
    %2298 = vmatpush1.bf16.xpose.msra.mxu0 %v2290
    %2299 = vmatprep.subr.bf16.mxu0 0
    %2300 = vmatpush1.bf16.xpose.msra.mxu0 %v2293
    %2301 = vmatprep.subr.bf16.mxu0 0
    %2302 = vmatpush1.bf16.xpose.msra.mxu0 0
    %2303 = vmatprep.subr.bf16.mxu0 0
    %2304 = vmatpush1.bf16.xpose.msra.mxu0 0
    %2305 = vmatprep.subr.bf16.mxu0 0
    %2306 = vmatpush1.bf16.xpose.msra.mxu0 0
    %2307 = vmatprep.subr.bf16.mxu0 0
    %2308 = vmatpush1.bf16.xpose.msra.mxu0 0
    %2309 = vmatprep.subr.bf16.mxu0 0
    %2310 = vmatpush1.bf16.xpose.msra.mxu0 0
    %2311 = vmatprep.subr.bf16.mxu0 0
    %2312 = vmatpush1.bf16.xpose.msra.mxu0 0
    %2313 = vmatprep.subr.bf16.mxu0 0
    %2314 = vmatpush1.bf16.xpose.msra.mxu0 0
    %2315 = vmatprep.subr.bf16.mxu0 0
    %2316 = vmatpush1.bf16.xpose.msra.mxu0 0
    %2317 = vmatprep.subr.bf16.mxu0 0
    %2318 = vmatpush1.bf16.xpose.msra.mxu0 0
    %2319 = vmatprep.subr.bf16.mxu0 0
    %2320 = vmatpush1.bf16.xpose.msra.mxu0 0
    %2321 = vmatprep.subr.bf16.mxu0 0
    %2322 = vmatpush1.bf16.xpose.msra.mxu0 0
    %2323 = vmatprep.subr.bf16.mxu0 0
    %2324 = vmatpush1.bf16.xpose.msra.mxu0 0
    %2325 = vmatprep.subr.bf16.mxu0 0
    %2326 = vmatpush1.bf16.xpose.msra.mxu0 0
    %2327 = vmatprep.mubr.bf16.mxu0 0
    %2328 = vmatmul.mubr.bf16.gmra.mrb[0].mxu0 %v2278
    %v2329 = vpop.f32.mrb[0].mxu0
    %v2330 = vadd.f32 %v371, %v2329
    %v2331 = vpop.f32.mrb[0].mxu0
    %v2332 = vpop.f32.mrb[0].mxu0
    %v2333 = vadd.f32 %v372, %v2332
    %v2334 = vpop.f32.mrb[0].mxu0
    %2335 = vmatprep.mubr.bf16.mxu0 0
    %2336 = vmatmul.mubr.bf16.gmra.mrb[0].mxu0 %v2281
    %v2337 = vpop.f32.mrb[0].mxu0
    %v2338 = vadd.f32 %v373, %v2337
    %v2339 = vpop.f32.mrb[0].mxu0
    %v2340 = vpop.f32.mrb[0].mxu0
    %v2341 = vadd.f32 %v374, %v2340
    %v2342 = vpop.f32.mrb[0].mxu0
    %2343 = vmatprep.mubr.bf16.mxu0 0
    %2344 = vmatmul.mubr.bf16.gmra.mrb[0].mxu0 %v2284
    %v2345 = vpop.f32.mrb[0].mxu0
    %v2346 = vadd.f32 %v375, %v2345
    %v2347 = vpop.f32.mrb[0].mxu0
    %v2348 = vpop.f32.mrb[0].mxu0
    %v2349 = vpop.f32.mrb[0].mxu0
    %2350 = vdwg.mxu0
    %v2351 = vsel %vm647, %v2330, -inf
    %2352 = vmax.xlane.f32.xlu0 %v2351
    %v2353 = vpop.xlane.xlu0 %2352
    %v2354 = vsel %vm647, %v2333, -inf
    %2355 = vmax.xlane.f32.xlu0 %v2354
    %v2356 = vpop.xlane.xlu0 %2355
    %v2357 = vsel %vm647, %v2338, -inf
    %2358 = vmax.xlane.f32.xlu0 %v2357
    %v2359 = vpop.xlane.xlu0 %2358
    %v2360 = vsel %vm647, %v2341, -inf
    %2361 = vmax.xlane.f32.xlu0 %v2360
    %v2362 = vpop.xlane.xlu0 %2361
    %v2363 = vsel %vm660, %v2346, -inf
    %2364 = vmax.xlane.f32.xlu0 %v2363
    %v2365 = vpop.xlane.xlu0 %2364
    %v2366 = vsub.f32 %v2330, %v2353
    %v2367 = vsub.f32 %v2333, %v2356
    %v2368 = vsub.f32 %v2338, %v2359
    %v2369 = vsub.f32 %v2341, %v2362
    %v2370 = vsub.f32 %v2346, %v2365
    %v2371 = vmul.f32 %v2366, 1.442695
    %v2372 = vpow.pop %v2371
    %v2373 = vmul.f32 %v2367, 1.442695
    %v2374 = vpow.pop %v2373
    %v2375 = vmul.f32 %v2368, 1.442695
    %v2376 = vpow.pop %v2375
    %v2377 = vmul.f32 %v2369, 1.442695
    %v2378 = vpow.pop %v2377
    %v2379 = vmul.f32 %v2370, 1.442695
    %v2380 = vpow.pop %v2379
    %v2381 = vsel %vm647, %v2372, 0.0
    %2382 = vadd.xlane.f32.xlu0 %v2381
    %v2383 = vpop.xlane.xlu0 %2382
    %v2384 = vsel %vm647, %v2374, 0.0
    %2385 = vadd.xlane.f32.xlu0 %v2384
    %v2386 = vpop.xlane.xlu0 %2385
    %v2387 = vsel %vm647, %v2376, 0.0
    %2388 = vadd.xlane.f32.xlu0 %v2387
    %v2389 = vpop.xlane.xlu0 %2388
    %v2390 = vsel %vm647, %v2378, 0.0
    %2391 = vadd.xlane.f32.xlu0 %v2390
    %v2392 = vpop.xlane.xlu0 %2391
    %v2393 = vsel %vm660, %v2380, 0.0
    %2394 = vadd.xlane.f32.xlu0 %v2393
    %v2395 = vpop.xlane.xlu0 %2394
    %v2396 = vrcp.pop %v2383
    %v2397 = vrcp.pop %v2386
    %v2398 = vrcp.pop %v2389
    %v2399 = vrcp.pop %v2392
    %v2400 = vrcp.pop %v2395
    %v2401 = vmul.f32 %v2372, %v2396
    %v2402 = vmul.f32 %v2374, %v2397
    %v2403 = vmul.f32 %v2376, %v2398
    %v2404 = vmul.f32 %v2378, %v2399
    %v2405 = vmul.f32 %v2380, %v2400
    %v2406 = vpack.c.bf16 %v2402, %v2401
    %v2407 = vpack.c.bf16 %v2404, %v2403
    %v2408 = vpack.c.bf16 %v2405, %v2405
    %2409 = vrot.lane.b32.xlu0 %v2260, 64
    %v2410 = vpop.permute.xlu0 %2409
    %2411 = vrot.lane.b32.xlu0 %v2261, 64
    %v2412 = vpop.permute.xlu0 %2411
    %2413 = vrot.lane.b32.xlu0 %v2262, 64
    %v2414 = vpop.permute.xlu0 %2413
    %v2418 = vsel %vm647, %v2406, 0
    %v2421 = vsel %vm647, %v2407, 0
    %v2424 = vsel %vm647, %v2408, 0
    %v2427 = vsel %vm724, %v2414, 0
    %2429 = vmatprep.subr.bf16.mxu0 0
    %2430 = vmatpush1.bf16.msra.mxu0 %v2410
    %2431 = vmatprep.subr.bf16.mxu0 0
    %2432 = vmatpush1.bf16.msra.mxu0 %v2412
    %2433 = vmatprep.subr.bf16.mxu0 0
    %2434 = vmatpush1.bf16.msra.mxu0 %v2427
    %2435 = vmatprep.subr.bf16.mxu0 0
    %2436 = vmatpush1.bf16.msra.mxu0 0
    %2437 = vmatprep.subr.bf16.mxu0 0
    %2438 = vmatpush1.bf16.msra.mxu0 0
    %2439 = vmatprep.subr.bf16.mxu0 0
    %2440 = vmatpush1.bf16.msra.mxu0 0
    %2441 = vmatprep.subr.bf16.mxu0 0
    %2442 = vmatpush1.bf16.msra.mxu0 0
    %2443 = vmatprep.subr.bf16.mxu0 0
    %2444 = vmatpush1.bf16.msra.mxu0 0
    %2445 = vmatprep.subr.bf16.mxu0 0
    %2446 = vmatpush1.bf16.msra.mxu0 0
    %2447 = vmatprep.subr.bf16.mxu0 0
    %2448 = vmatpush1.bf16.msra.mxu0 0
    %2449 = vmatprep.subr.bf16.mxu0 0
    %2450 = vmatpush1.bf16.msra.mxu0 0
    %2451 = vmatprep.subr.bf16.mxu0 0
    %2452 = vmatpush1.bf16.msra.mxu0 0
    %2453 = vmatprep.subr.bf16.mxu0 0
    %2454 = vmatpush1.bf16.msra.mxu0 0
    %2455 = vmatprep.subr.bf16.mxu0 0
    %2456 = vmatpush1.bf16.msra.mxu0 0
    %2457 = vmatprep.subr.bf16.mxu0 0
    %2458 = vmatpush1.bf16.msra.mxu0 0
    %2459 = vmatprep.subr.bf16.mxu0 0
    %2460 = vmatpush1.bf16.msra.mxu0 0
    %2461 = vmatprep.mubr.bf16.mxu0 0
    %2462 = vmatmul.mubr.bf16.gmra.mrb[0].mxu0 %v2418
    %v2463 = vpop.f32.mrb[0].mxu0
    %v2464 = vadd.f32 0.0, %v2463
    %v2465 = vpop.f32.mrb[0].mxu0
    %v2466 = vpop.f32.mrb[0].mxu0
    %v2467 = vadd.f32 0.0, %v2466
    %v2468 = vpop.f32.mrb[0].mxu0
    %2469 = vmatprep.mubr.bf16.mxu0 0
    %2470 = vmatmul.mubr.bf16.gmra.mrb[0].mxu0 %v2421
    %v2471 = vpop.f32.mrb[0].mxu0
    %v2472 = vadd.f32 0.0, %v2471
    %v2473 = vpop.f32.mrb[0].mxu0
    %v2474 = vpop.f32.mrb[0].mxu0
    %v2475 = vadd.f32 0.0, %v2474
    %v2476 = vpop.f32.mrb[0].mxu0
    %2477 = vmatprep.mubr.bf16.mxu0 0
    %2478 = vmatmul.mubr.bf16.gmra.mrb[0].mxu0 %v2424
    %v2479 = vpop.f32.mrb[0].mxu0
    %v2480 = vadd.f32 0.0, %v2479
    %v2481 = vpop.f32.mrb[0].mxu0
    %v2482 = vpop.f32.mrb[0].mxu0
    %v2483 = vpop.f32.mrb[0].mxu0
    %2484 = vdwg.mxu0
    %v2485 = vpack.c.bf16 %v2467, %v2464
    %v2486 = vpack.c.bf16 %v2475, %v2472
    %v2487 = vpack.c.bf16 %v2480, %v2480
    %v2488 = vpack.c.bf16 %v2264, %v2264
    %2492 = vrot.lane.b32.xlu0 %v2257, 120
    %v2493 = vpop.permute.xlu0 %2492
    %2494 = vrot.lane.b32.xlu0 %v2258, 120
    %v2495 = vpop.permute.xlu0 %2494
    %2496 = vrot.lane.b32.xlu0 %v2259, 120
    %v2497 = vpop.permute.xlu0 %2496
    %2498 = vrot.lane.b32.xlu0 %v2260, 88
    %v2499 = vpop.permute.xlu0 %2498
    %2500 = vrot.lane.b32.xlu0 %v2261, 88
    %v2501 = vpop.permute.xlu0 %2500
    %2502 = vrot.lane.b32.xlu0 %v2262, 88
    %v2503 = vpop.permute.xlu0 %2502
    %v2505 = vsel %vm572, %v2493, 0
    %v2508 = vsel %vm572, %v2495, 0
    %v2511 = vsel %vm572, %v2497, 0
    %v2514 = vsel %vm572, %v2499, 0
    %v2517 = vsel %vm572, %v2501, 0
    %v2520 = vsel %vm572, %v2503, 0
    %2522 = vmatprep.subr.bf16.mxu0 0
    %2523 = vmatpush1.bf16.xpose.msra.mxu0 %v2514
    %2524 = vmatprep.subr.bf16.mxu0 0
    %2525 = vmatpush1.bf16.xpose.msra.mxu0 %v2517
    %2526 = vmatprep.subr.bf16.mxu0 0
    %2527 = vmatpush1.bf16.xpose.msra.mxu0 %v2520
    %2528 = vmatprep.subr.bf16.mxu0 0
    %2529 = vmatpush1.bf16.xpose.msra.mxu0 0
    %2530 = vmatprep.subr.bf16.mxu0 0
    %2531 = vmatpush1.bf16.xpose.msra.mxu0 0
    %2532 = vmatprep.subr.bf16.mxu0 0
    %2533 = vmatpush1.bf16.xpose.msra.mxu0 0
    %2534 = vmatprep.subr.bf16.mxu0 0
    %2535 = vmatpush1.bf16.xpose.msra.mxu0 0
    %2536 = vmatprep.subr.bf16.mxu0 0
    %2537 = vmatpush1.bf16.xpose.msra.mxu0 0
    %2538 = vmatprep.subr.bf16.mxu0 0
    %2539 = vmatpush1.bf16.xpose.msra.mxu0 0
    %2540 = vmatprep.subr.bf16.mxu0 0
    %2541 = vmatpush1.bf16.xpose.msra.mxu0 0
    %2542 = vmatprep.subr.bf16.mxu0 0
    %2543 = vmatpush1.bf16.xpose.msra.mxu0 0
    %2544 = vmatprep.subr.bf16.mxu0 0
    %2545 = vmatpush1.bf16.xpose.msra.mxu0 0
    %2546 = vmatprep.subr.bf16.mxu0 0
    %2547 = vmatpush1.bf16.xpose.msra.mxu0 0
    %2548 = vmatprep.subr.bf16.mxu0 0
    %2549 = vmatpush1.bf16.xpose.msra.mxu0 0
    %2550 = vmatprep.subr.bf16.mxu0 0
    %2551 = vmatpush1.bf16.xpose.msra.mxu0 0
    %2552 = vmatprep.subr.bf16.mxu0 0
    %2553 = vmatpush1.bf16.xpose.msra.mxu0 0
    %2554 = vmatprep.mubr.bf16.mxu0 0
    %2555 = vmatmul.mubr.bf16.gmra.mrb[0].mxu0 %v2505
    %v2556 = vpop.f32.mrb[0].mxu0
    %v2557 = vadd.f32 %v371, %v2556
    %v2558 = vpop.f32.mrb[0].mxu0
    %v2559 = vpop.f32.mrb[0].mxu0
    %v2560 = vadd.f32 %v372, %v2559
    %v2561 = vpop.f32.mrb[0].mxu0
    %2562 = vmatprep.mubr.bf16.mxu0 0
    %2563 = vmatmul.mubr.bf16.gmra.mrb[0].mxu0 %v2508
    %v2564 = vpop.f32.mrb[0].mxu0
    %v2565 = vadd.f32 %v373, %v2564
    %v2566 = vpop.f32.mrb[0].mxu0
    %v2567 = vpop.f32.mrb[0].mxu0
    %v2568 = vadd.f32 %v374, %v2567
    %v2569 = vpop.f32.mrb[0].mxu0
    %2570 = vmatprep.mubr.bf16.mxu0 0
    %2571 = vmatmul.mubr.bf16.gmra.mrb[0].mxu0 %v2511
    %v2572 = vpop.f32.mrb[0].mxu0
    %v2573 = vadd.f32 %v375, %v2572
    %v2574 = vpop.f32.mrb[0].mxu0
    %v2575 = vpop.f32.mrb[0].mxu0
    %v2576 = vpop.f32.mrb[0].mxu0
    %2577 = vdwg.mxu0
    %v2578 = vsel %vm647, %v2557, -inf
    %2579 = vmax.xlane.f32.xlu0 %v2578
    %v2580 = vpop.xlane.xlu0 %2579
    %v2581 = vsel %vm647, %v2560, -inf
    %2582 = vmax.xlane.f32.xlu0 %v2581
    %v2583 = vpop.xlane.xlu0 %2582
    %v2584 = vsel %vm647, %v2565, -inf
    %2585 = vmax.xlane.f32.xlu0 %v2584
    %v2586 = vpop.xlane.xlu0 %2585
    %v2587 = vsel %vm647, %v2568, -inf
    %2588 = vmax.xlane.f32.xlu0 %v2587
    %v2589 = vpop.xlane.xlu0 %2588
    %v2590 = vsel %vm660, %v2573, -inf
    %2591 = vmax.xlane.f32.xlu0 %v2590
    %v2592 = vpop.xlane.xlu0 %2591
    %v2593 = vsub.f32 %v2557, %v2580
    %v2594 = vsub.f32 %v2560, %v2583
    %v2595 = vsub.f32 %v2565, %v2586
    %v2596 = vsub.f32 %v2568, %v2589
    %v2597 = vsub.f32 %v2573, %v2592
    %v2598 = vmul.f32 %v2593, 1.442695
    %v2599 = vpow.pop %v2598
    %v2600 = vmul.f32 %v2594, 1.442695
    %v2601 = vpow.pop %v2600
    %v2602 = vmul.f32 %v2595, 1.442695
    %v2603 = vpow.pop %v2602
    %v2604 = vmul.f32 %v2596, 1.442695
    %v2605 = vpow.pop %v2604
    %v2606 = vmul.f32 %v2597, 1.442695
    %v2607 = vpow.pop %v2606
    %v2608 = vsel %vm647, %v2599, 0.0
    %2609 = vadd.xlane.f32.xlu0 %v2608
    %v2610 = vpop.xlane.xlu0 %2609
    %v2611 = vsel %vm647, %v2601, 0.0
    %2612 = vadd.xlane.f32.xlu0 %v2611
    %v2613 = vpop.xlane.xlu0 %2612
    %v2614 = vsel %vm647, %v2603, 0.0
    %2615 = vadd.xlane.f32.xlu0 %v2614
    %v2616 = vpop.xlane.xlu0 %2615
    %v2617 = vsel %vm647, %v2605, 0.0
    %2618 = vadd.xlane.f32.xlu0 %v2617
    %v2619 = vpop.xlane.xlu0 %2618
    %v2620 = vsel %vm660, %v2607, 0.0
    %2621 = vadd.xlane.f32.xlu0 %v2620
    %v2622 = vpop.xlane.xlu0 %2621
    %v2623 = vrcp.pop %v2610
    %v2624 = vrcp.pop %v2613
    %v2625 = vrcp.pop %v2616
    %v2626 = vrcp.pop %v2619
    %v2627 = vrcp.pop %v2622
    %v2628 = vmul.f32 %v2599, %v2623
    %v2629 = vmul.f32 %v2601, %v2624
    %v2630 = vmul.f32 %v2603, %v2625
    %v2631 = vmul.f32 %v2605, %v2626
    %v2632 = vmul.f32 %v2607, %v2627
    %v2633 = vpack.c.bf16 %v2629, %v2628
    %v2634 = vpack.c.bf16 %v2631, %v2630
    %v2635 = vpack.c.bf16 %v2632, %v2632
    %2636 = vrot.lane.b32.xlu0 %v2260, 56
    %v2637 = vpop.permute.xlu0 %2636
    %2638 = vrot.lane.b32.xlu0 %v2261, 56
    %v2639 = vpop.permute.xlu0 %2638
    %2640 = vrot.lane.b32.xlu0 %v2262, 56
    %v2641 = vpop.permute.xlu0 %2640
    %v2645 = vsel %vm647, %v2633, 0
    %v2648 = vsel %vm647, %v2634, 0
    %v2651 = vsel %vm647, %v2635, 0
    %v2654 = vsel %vm724, %v2641, 0
    %2656 = vmatprep.subr.bf16.mxu0 0
    %2657 = vmatpush1.bf16.msra.mxu0 %v2637
    %2658 = vmatprep.subr.bf16.mxu0 0
    %2659 = vmatpush1.bf16.msra.mxu0 %v2639
    %2660 = vmatprep.subr.bf16.mxu0 0
    %2661 = vmatpush1.bf16.msra.mxu0 %v2654
    %2662 = vmatprep.subr.bf16.mxu0 0
    %2663 = vmatpush1.bf16.msra.mxu0 0
    %2664 = vmatprep.subr.bf16.mxu0 0
    %2665 = vmatpush1.bf16.msra.mxu0 0
    %2666 = vmatprep.subr.bf16.mxu0 0
    %2667 = vmatpush1.bf16.msra.mxu0 0
    %2668 = vmatprep.subr.bf16.mxu0 0
    %2669 = vmatpush1.bf16.msra.mxu0 0
    %2670 = vmatprep.subr.bf16.mxu0 0
    %2671 = vmatpush1.bf16.msra.mxu0 0
    %2672 = vmatprep.subr.bf16.mxu0 0
    %2673 = vmatpush1.bf16.msra.mxu0 0
    %2674 = vmatprep.subr.bf16.mxu0 0
    %2675 = vmatpush1.bf16.msra.mxu0 0
    %2676 = vmatprep.subr.bf16.mxu0 0
    %2677 = vmatpush1.bf16.msra.mxu0 0
    %2678 = vmatprep.subr.bf16.mxu0 0
    %2679 = vmatpush1.bf16.msra.mxu0 0
    %2680 = vmatprep.subr.bf16.mxu0 0
    %2681 = vmatpush1.bf16.msra.mxu0 0
    %2682 = vmatprep.subr.bf16.mxu0 0
    %2683 = vmatpush1.bf16.msra.mxu0 0
    %2684 = vmatprep.subr.bf16.mxu0 0
    %2685 = vmatpush1.bf16.msra.mxu0 0
    %2686 = vmatprep.subr.bf16.mxu0 0
    %2687 = vmatpush1.bf16.msra.mxu0 0
    %2688 = vmatprep.mubr.bf16.mxu0 0
    %2689 = vmatmul.mubr.bf16.gmra.mrb[0].mxu0 %v2645
    %v2690 = vpop.f32.mrb[0].mxu0
    %v2691 = vadd.f32 0.0, %v2690
    %v2692 = vpop.f32.mrb[0].mxu0
    %v2693 = vpop.f32.mrb[0].mxu0
    %v2694 = vadd.f32 0.0, %v2693
    %v2695 = vpop.f32.mrb[0].mxu0
    %2696 = vmatprep.mubr.bf16.mxu0 0
    %2697 = vmatmul.mubr.bf16.gmra.mrb[0].mxu0 %v2648
    %v2698 = vpop.f32.mrb[0].mxu0
    %v2699 = vadd.f32 0.0, %v2698
    %v2700 = vpop.f32.mrb[0].mxu0
    %v2701 = vpop.f32.mrb[0].mxu0
    %v2702 = vadd.f32 0.0, %v2701
    %v2703 = vpop.f32.mrb[0].mxu0
    %2704 = vmatprep.mubr.bf16.mxu0 0
    %2705 = vmatmul.mubr.bf16.gmra.mrb[0].mxu0 %v2651
    %v2706 = vpop.f32.mrb[0].mxu0
    %v2707 = vadd.f32 0.0, %v2706
    %v2708 = vpop.f32.mrb[0].mxu0
    %v2709 = vpop.f32.mrb[0].mxu0
    %v2710 = vpop.f32.mrb[0].mxu0
    %2711 = vdwg.mxu0
    %v2712 = vpack.c.bf16 %v2694, %v2691
    %v2713 = vpack.c.bf16 %v2702, %v2699
    %v2714 = vpack.c.bf16 %v2707, %v2707
    %v2715 = vpack.c.bf16 %v2265, %v2265
    %v2717 = vsel %vm572, %v2712, 0
    %v2720 = vsel %vm572, %v2713, 0
    %v2723 = vsel %vm572, %v2714, 0
    %v2726 = vsel %vm1024, %v2715, 0
    %2728 = vmatprep.subr.bf16.mxu0 0
    %2729 = vmatpush1.bf16.msra.mxu0 %v2726
    %2730 = vmatprep.subr.bf16.mxu0 0
    %2731 = vmatpush1.bf16.msra.mxu0 0
    %2732 = vmatprep.subr.bf16.mxu0 0
    %2733 = vmatpush1.bf16.msra.mxu0 0
    %2734 = vmatprep.subr.bf16.mxu0 0
    %2735 = vmatpush1.bf16.msra.mxu0 0
    %2736 = vmatprep.subr.bf16.mxu0 0
    %2737 = vmatpush1.bf16.msra.mxu0 0
    %2738 = vmatprep.subr.bf16.mxu0 0
    %2739 = vmatpush1.bf16.msra.mxu0 0
    %2740 = vmatprep.subr.bf16.mxu0 0
    %2741 = vmatpush1.bf16.msra.mxu0 0
    %2742 = vmatprep.subr.bf16.mxu0 0
    %2743 = vmatpush1.bf16.msra.mxu0 0
    %2744 = vmatprep.subr.bf16.mxu0 0
    %2745 = vmatpush1.bf16.msra.mxu0 0
    %2746 = vmatprep.subr.bf16.mxu0 0
    %2747 = vmatpush1.bf16.msra.mxu0 0
    %2748 = vmatprep.subr.bf16.mxu0 0
    %2749 = vmatpush1.bf16.msra.mxu0 0
    %2750 = vmatprep.subr.bf16.mxu0 0
    %2751 = vmatpush1.bf16.msra.mxu0 0
    %2752 = vmatprep.subr.bf16.mxu0 0
    %2753 = vmatpush1.bf16.msra.mxu0 0
    %2754 = vmatprep.subr.bf16.mxu0 0
    %2755 = vmatpush1.bf16.msra.mxu0 0
    %2756 = vmatprep.subr.bf16.mxu0 0
    %2757 = vmatpush1.bf16.msra.mxu0 0
    %2758 = vmatprep.subr.bf16.mxu0 0
    %2759 = vmatpush1.bf16.msra.mxu0 0
    %2760 = vmatprep.mubr.bf16.mxu0 0
    %2761 = vmatmul.mubr.bf16.gmra.mrb[0].mxu0 %v2717
    %v2762 = vpop.f32.mrb[0].mxu0
    %v2763 = vadd.f32 0.0, %v2762
    %v2764 = vpop.f32.mrb[0].mxu0
    %v2765 = vpop.f32.mrb[0].mxu0
    %v2766 = vadd.f32 0.0, %v2765
    %v2767 = vpop.f32.mrb[0].mxu0
    %2768 = vmatprep.mubr.bf16.mxu0 0
    %2769 = vmatmul.mubr.bf16.gmra.mrb[0].mxu0 %v2720
    %v2770 = vpop.f32.mrb[0].mxu0
    %v2771 = vadd.f32 0.0, %v2770
    %v2772 = vpop.f32.mrb[0].mxu0
    %v2773 = vpop.f32.mrb[0].mxu0
    %v2774 = vadd.f32 0.0, %v2773
    %v2775 = vpop.f32.mrb[0].mxu0
    %2776 = vmatprep.mubr.bf16.mxu0 0
    %2777 = vmatmul.mubr.bf16.gmra.mrb[0].mxu0 %v2723
    %v2778 = vpop.f32.mrb[0].mxu0
    %v2779 = vadd.f32 0.0, %v2778
    %v2780 = vpop.f32.mrb[0].mxu0
    %v2781 = vpop.f32.mrb[0].mxu0
    %v2782 = vpop.f32.mrb[0].mxu0
    %2783 = vdwg.mxu0
    %v2785 = vsel %vm572, %v2485, 0
    %v2788 = vsel %vm572, %v2486, 0
    %v2791 = vsel %vm572, %v2487, 0
    %v2794 = vsel %vm1024, %v2488, 0
    %2796 = vmatprep.subr.bf16.mxu0 0
    %2797 = vmatpush1.bf16.msra.mxu0 %v2794
    %2798 = vmatprep.subr.bf16.mxu0 0
    %2799 = vmatpush1.bf16.msra.mxu0 0
    %2800 = vmatprep.subr.bf16.mxu0 0
    %2801 = vmatpush1.bf16.msra.mxu0 0
    %2802 = vmatprep.subr.bf16.mxu0 0
    %2803 = vmatpush1.bf16.msra.mxu0 0
    %2804 = vmatprep.subr.bf16.mxu0 0
    %2805 = vmatpush1.bf16.msra.mxu0 0
    %2806 = vmatprep.subr.bf16.mxu0 0
    %2807 = vmatpush1.bf16.msra.mxu0 0
    %2808 = vmatprep.subr.bf16.mxu0 0
    %2809 = vmatpush1.bf16.msra.mxu0 0
    %2810 = vmatprep.subr.bf16.mxu0 0
    %2811 = vmatpush1.bf16.msra.mxu0 0
    %2812 = vmatprep.subr.bf16.mxu0 0
    %2813 = vmatpush1.bf16.msra.mxu0 0
    %2814 = vmatprep.subr.bf16.mxu0 0
    %2815 = vmatpush1.bf16.msra.mxu0 0
    %2816 = vmatprep.subr.bf16.mxu0 0
    %2817 = vmatpush1.bf16.msra.mxu0 0
    %2818 = vmatprep.subr.bf16.mxu0 0
    %2819 = vmatpush1.bf16.msra.mxu0 0
    %2820 = vmatprep.subr.bf16.mxu0 0
    %2821 = vmatpush1.bf16.msra.mxu0 0
    %2822 = vmatprep.subr.bf16.mxu0 0
    %2823 = vmatpush1.bf16.msra.mxu0 0
    %2824 = vmatprep.subr.bf16.mxu0 0
    %2825 = vmatpush1.bf16.msra.mxu0 0
    %2826 = vmatprep.subr.bf16.mxu0 0
    %2827 = vmatpush1.bf16.msra.mxu0 0
    %2828 = vmatprep.mubr.bf16.mxu0 0
    %2829 = vmatmul.mubr.bf16.gmra.mrb[0].mxu0 %v2785
    %v2830 = vpop.f32.mrb[0].mxu0
    %v2831 = vadd.f32 %v2763, %v2830
    %v2832 = vpop.f32.mrb[0].mxu0
    %v2833 = vpop.f32.mrb[0].mxu0
    %v2834 = vadd.f32 %v2766, %v2833
    %v2835 = vpop.f32.mrb[0].mxu0
    %2836 = vmatprep.mubr.bf16.mxu0 0
    %2837 = vmatmul.mubr.bf16.gmra.mrb[0].mxu0 %v2788
    %v2838 = vpop.f32.mrb[0].mxu0
    %v2839 = vadd.f32 %v2771, %v2838
    %v2840 = vpop.f32.mrb[0].mxu0
    %v2841 = vpop.f32.mrb[0].mxu0
    %v2842 = vadd.f32 %v2774, %v2841
    %v2843 = vpop.f32.mrb[0].mxu0
    %2844 = vmatprep.mubr.bf16.mxu0 0
    %2845 = vmatmul.mubr.bf16.gmra.mrb[0].mxu0 %v2791
    %v2846 = vpop.f32.mrb[0].mxu0
    %v2847 = vadd.f32 %v2779, %v2846
    %v2848 = vpop.f32.mrb[0].mxu0
    %v2849 = vpop.f32.mrb[0].mxu0
    %v2850 = vpop.f32.mrb[0].mxu0
    %2851 = vdwg.mxu0
    %2852 = vrot.lane.b32.xlu0 %v2257, 112
    %v2853 = vpop.permute.xlu0 %2852
    %2854 = vrot.lane.b32.xlu0 %v2258, 112
    %v2855 = vpop.permute.xlu0 %2854
    %2856 = vrot.lane.b32.xlu0 %v2259, 112
    %v2857 = vpop.permute.xlu0 %2856
    %2858 = vrot.lane.b32.xlu0 %v2260, 80
    %v2859 = vpop.permute.xlu0 %2858
    %2860 = vrot.lane.b32.xlu0 %v2261, 80
    %v2861 = vpop.permute.xlu0 %2860
    %2862 = vrot.lane.b32.xlu0 %v2262, 80
    %v2863 = vpop.permute.xlu0 %2862
    %v2865 = vsel %vm572, %v2853, 0
    %v2868 = vsel %vm572, %v2855, 0
    %v2871 = vsel %vm572, %v2857, 0
    %v2874 = vsel %vm572, %v2859, 0
    %v2877 = vsel %vm572, %v2861, 0
    %v2880 = vsel %vm572, %v2863, 0
    %2882 = vmatprep.subr.bf16.mxu0 0
    %2883 = vmatpush1.bf16.xpose.msra.mxu0 %v2874
    %2884 = vmatprep.subr.bf16.mxu0 0
    %2885 = vmatpush1.bf16.xpose.msra.mxu0 %v2877
    %2886 = vmatprep.subr.bf16.mxu0 0
    %2887 = vmatpush1.bf16.xpose.msra.mxu0 %v2880
    %2888 = vmatprep.subr.bf16.mxu0 0
    %2889 = vmatpush1.bf16.xpose.msra.mxu0 0
    %2890 = vmatprep.subr.bf16.mxu0 0
    %2891 = vmatpush1.bf16.xpose.msra.mxu0 0
    %2892 = vmatprep.subr.bf16.mxu0 0
    %2893 = vmatpush1.bf16.xpose.msra.mxu0 0
    %2894 = vmatprep.subr.bf16.mxu0 0
    %2895 = vmatpush1.bf16.xpose.msra.mxu0 0
    %2896 = vmatprep.subr.bf16.mxu0 0
    %2897 = vmatpush1.bf16.xpose.msra.mxu0 0
    %2898 = vmatprep.subr.bf16.mxu0 0
    %2899 = vmatpush1.bf16.xpose.msra.mxu0 0
    %2900 = vmatprep.subr.bf16.mxu0 0
    %2901 = vmatpush1.bf16.xpose.msra.mxu0 0
    %2902 = vmatprep.subr.bf16.mxu0 0
    %2903 = vmatpush1.bf16.xpose.msra.mxu0 0
    %2904 = vmatprep.subr.bf16.mxu0 0
    %2905 = vmatpush1.bf16.xpose.msra.mxu0 0
    %2906 = vmatprep.subr.bf16.mxu0 0
    %2907 = vmatpush1.bf16.xpose.msra.mxu0 0
    %2908 = vmatprep.subr.bf16.mxu0 0
    %2909 = vmatpush1.bf16.xpose.msra.mxu0 0
    %2910 = vmatprep.subr.bf16.mxu0 0
    %2911 = vmatpush1.bf16.xpose.msra.mxu0 0
    %2912 = vmatprep.subr.bf16.mxu0 0
    %2913 = vmatpush1.bf16.xpose.msra.mxu0 0
    %2914 = vmatprep.mubr.bf16.mxu0 0
    %2915 = vmatmul.mubr.bf16.gmra.mrb[0].mxu0 %v2865
    %v2916 = vpop.f32.mrb[0].mxu0
    %v2917 = vadd.f32 %v371, %v2916
    %v2918 = vpop.f32.mrb[0].mxu0
    %v2919 = vpop.f32.mrb[0].mxu0
    %v2920 = vadd.f32 %v372, %v2919
    %v2921 = vpop.f32.mrb[0].mxu0
    %2922 = vmatprep.mubr.bf16.mxu0 0
    %2923 = vmatmul.mubr.bf16.gmra.mrb[0].mxu0 %v2868
    %v2924 = vpop.f32.mrb[0].mxu0
    %v2925 = vadd.f32 %v373, %v2924
    %v2926 = vpop.f32.mrb[0].mxu0
    %v2927 = vpop.f32.mrb[0].mxu0
    %v2928 = vadd.f32 %v374, %v2927
    %v2929 = vpop.f32.mrb[0].mxu0
    %2930 = vmatprep.mubr.bf16.mxu0 0
    %2931 = vmatmul.mubr.bf16.gmra.mrb[0].mxu0 %v2871
    %v2932 = vpop.f32.mrb[0].mxu0
    %v2933 = vadd.f32 %v375, %v2932
    %v2934 = vpop.f32.mrb[0].mxu0
    %v2935 = vpop.f32.mrb[0].mxu0
    %v2936 = vpop.f32.mrb[0].mxu0
    %2937 = vdwg.mxu0
    %v2938 = vsel %vm647, %v2917, -inf
    %2939 = vmax.xlane.f32.xlu0 %v2938
    %v2940 = vpop.xlane.xlu0 %2939
    %v2941 = vsel %vm647, %v2920, -inf
    %2942 = vmax.xlane.f32.xlu0 %v2941
    %v2943 = vpop.xlane.xlu0 %2942
    %v2944 = vsel %vm647, %v2925, -inf
    %2945 = vmax.xlane.f32.xlu0 %v2944
    %v2946 = vpop.xlane.xlu0 %2945
    %v2947 = vsel %vm647, %v2928, -inf
    %2948 = vmax.xlane.f32.xlu0 %v2947
    %v2949 = vpop.xlane.xlu0 %2948
    %v2950 = vsel %vm660, %v2933, -inf
    %2951 = vmax.xlane.f32.xlu0 %v2950
    %v2952 = vpop.xlane.xlu0 %2951
    %v2953 = vsub.f32 %v2917, %v2940
    %v2954 = vsub.f32 %v2920, %v2943
    %v2955 = vsub.f32 %v2925, %v2946
    %v2956 = vsub.f32 %v2928, %v2949
    %v2957 = vsub.f32 %v2933, %v2952
    %v2958 = vmul.f32 %v2953, 1.442695
    %v2959 = vpow.pop %v2958
    %v2960 = vmul.f32 %v2954, 1.442695
    %v2961 = vpow.pop %v2960
    %v2962 = vmul.f32 %v2955, 1.442695
    %v2963 = vpow.pop %v2962
    %v2964 = vmul.f32 %v2956, 1.442695
    %v2965 = vpow.pop %v2964
    %v2966 = vmul.f32 %v2957, 1.442695
    %v2967 = vpow.pop %v2966
    %v2968 = vsel %vm647, %v2959, 0.0
    %2969 = vadd.xlane.f32.xlu0 %v2968
    %v2970 = vpop.xlane.xlu0 %2969
    %v2971 = vsel %vm647, %v2961, 0.0
    %2972 = vadd.xlane.f32.xlu0 %v2971
    %v2973 = vpop.xlane.xlu0 %2972
    %v2974 = vsel %vm647, %v2963, 0.0
    %2975 = vadd.xlane.f32.xlu0 %v2974
    %v2976 = vpop.xlane.xlu0 %2975
    %v2977 = vsel %vm647, %v2965, 0.0
    %2978 = vadd.xlane.f32.xlu0 %v2977
    %v2979 = vpop.xlane.xlu0 %2978
    %v2980 = vsel %vm660, %v2967, 0.0
    %2981 = vadd.xlane.f32.xlu0 %v2980
    %v2982 = vpop.xlane.xlu0 %2981
    %v2983 = vrcp.pop %v2970
    %v2984 = vrcp.pop %v2973
    %v2985 = vrcp.pop %v2976
    %v2986 = vrcp.pop %v2979
    %v2987 = vrcp.pop %v2982
    %v2988 = vmul.f32 %v2959, %v2983
    %v2989 = vmul.f32 %v2961, %v2984
    %v2990 = vmul.f32 %v2963, %v2985
    %v2991 = vmul.f32 %v2965, %v2986
    %v2992 = vmul.f32 %v2967, %v2987
    %v2993 = vpack.c.bf16 %v2989, %v2988
    %v2994 = vpack.c.bf16 %v2991, %v2990
    %v2995 = vpack.c.bf16 %v2992, %v2992
    %2996 = vrot.lane.b32.xlu0 %v2260, 48
    %v2997 = vpop.permute.xlu0 %2996
    %2998 = vrot.lane.b32.xlu0 %v2261, 48
    %v2999 = vpop.permute.xlu0 %2998
    %3000 = vrot.lane.b32.xlu0 %v2262, 48
    %v3001 = vpop.permute.xlu0 %3000
    %v3005 = vsel %vm647, %v2993, 0
    %v3008 = vsel %vm647, %v2994, 0
    %v3011 = vsel %vm647, %v2995, 0
    %v3014 = vsel %vm724, %v3001, 0
    %3016 = vmatprep.subr.bf16.mxu0 0
    %3017 = vmatpush1.bf16.msra.mxu0 %v2997
    %3018 = vmatprep.subr.bf16.mxu0 0
    %3019 = vmatpush1.bf16.msra.mxu0 %v2999
    %3020 = vmatprep.subr.bf16.mxu0 0
    %3021 = vmatpush1.bf16.msra.mxu0 %v3014
    %3022 = vmatprep.subr.bf16.mxu0 0
    %3023 = vmatpush1.bf16.msra.mxu0 0
    %3024 = vmatprep.subr.bf16.mxu0 0
    %3025 = vmatpush1.bf16.msra.mxu0 0
    %3026 = vmatprep.subr.bf16.mxu0 0
    %3027 = vmatpush1.bf16.msra.mxu0 0
    %3028 = vmatprep.subr.bf16.mxu0 0
    %3029 = vmatpush1.bf16.msra.mxu0 0
    %3030 = vmatprep.subr.bf16.mxu0 0
    %3031 = vmatpush1.bf16.msra.mxu0 0
    %3032 = vmatprep.subr.bf16.mxu0 0
    %3033 = vmatpush1.bf16.msra.mxu0 0
    %3034 = vmatprep.subr.bf16.mxu0 0
    %3035 = vmatpush1.bf16.msra.mxu0 0
    %3036 = vmatprep.subr.bf16.mxu0 0
    %3037 = vmatpush1.bf16.msra.mxu0 0
    %3038 = vmatprep.subr.bf16.mxu0 0
    %3039 = vmatpush1.bf16.msra.mxu0 0
    %3040 = vmatprep.subr.bf16.mxu0 0
    %3041 = vmatpush1.bf16.msra.mxu0 0
    %3042 = vmatprep.subr.bf16.mxu0 0
    %3043 = vmatpush1.bf16.msra.mxu0 0
    %3044 = vmatprep.subr.bf16.mxu0 0
    %3045 = vmatpush1.bf16.msra.mxu0 0
    %3046 = vmatprep.subr.bf16.mxu0 0
    %3047 = vmatpush1.bf16.msra.mxu0 0
    %3048 = vmatprep.mubr.bf16.mxu0 0
    %3049 = vmatmul.mubr.bf16.gmra.mrb[0].mxu0 %v3005
    %v3050 = vpop.f32.mrb[0].mxu0
    %v3051 = vadd.f32 0.0, %v3050
    %v3052 = vpop.f32.mrb[0].mxu0
    %v3053 = vpop.f32.mrb[0].mxu0
    %v3054 = vadd.f32 0.0, %v3053
    %v3055 = vpop.f32.mrb[0].mxu0
    %3056 = vmatprep.mubr.bf16.mxu0 0
    %3057 = vmatmul.mubr.bf16.gmra.mrb[0].mxu0 %v3008
    %v3058 = vpop.f32.mrb[0].mxu0
    %v3059 = vadd.f32 0.0, %v3058
    %v3060 = vpop.f32.mrb[0].mxu0
    %v3061 = vpop.f32.mrb[0].mxu0
    %v3062 = vadd.f32 0.0, %v3061
    %v3063 = vpop.f32.mrb[0].mxu0
    %3064 = vmatprep.mubr.bf16.mxu0 0
    %3065 = vmatmul.mubr.bf16.gmra.mrb[0].mxu0 %v3011
    %v3066 = vpop.f32.mrb[0].mxu0
    %v3067 = vadd.f32 0.0, %v3066
    %v3068 = vpop.f32.mrb[0].mxu0
    %v3069 = vpop.f32.mrb[0].mxu0
    %v3070 = vpop.f32.mrb[0].mxu0
    %3071 = vdwg.mxu0
    %v3072 = vpack.c.bf16 %v3054, %v3051
    %v3073 = vpack.c.bf16 %v3062, %v3059
    %v3074 = vpack.c.bf16 %v3067, %v3067
    %v3075 = vpack.c.bf16 %v2266, %v2266
    %v3077 = vsel %vm572, %v3072, 0
    %v3080 = vsel %vm572, %v3073, 0
    %v3083 = vsel %vm572, %v3074, 0
    %v3086 = vsel %vm1024, %v3075, 0
    %3088 = vmatprep.subr.bf16.mxu0 0
    %3089 = vmatpush1.bf16.msra.mxu0 %v3086
    %3090 = vmatprep.subr.bf16.mxu0 0
    %3091 = vmatpush1.bf16.msra.mxu0 0
    %3092 = vmatprep.subr.bf16.mxu0 0
    %3093 = vmatpush1.bf16.msra.mxu0 0
    %3094 = vmatprep.subr.bf16.mxu0 0
    %3095 = vmatpush1.bf16.msra.mxu0 0
    %3096 = vmatprep.subr.bf16.mxu0 0
    %3097 = vmatpush1.bf16.msra.mxu0 0
    %3098 = vmatprep.subr.bf16.mxu0 0
    %3099 = vmatpush1.bf16.msra.mxu0 0
    %3100 = vmatprep.subr.bf16.mxu0 0
    %3101 = vmatpush1.bf16.msra.mxu0 0
    %3102 = vmatprep.subr.bf16.mxu0 0
    %3103 = vmatpush1.bf16.msra.mxu0 0
    %3104 = vmatprep.subr.bf16.mxu0 0
    %3105 = vmatpush1.bf16.msra.mxu0 0
    %3106 = vmatprep.subr.bf16.mxu0 0
    %3107 = vmatpush1.bf16.msra.mxu0 0
    %3108 = vmatprep.subr.bf16.mxu0 0
    %3109 = vmatpush1.bf16.msra.mxu0 0
    %3110 = vmatprep.subr.bf16.mxu0 0
    %3111 = vmatpush1.bf16.msra.mxu0 0
    %3112 = vmatprep.subr.bf16.mxu0 0
    %3113 = vmatpush1.bf16.msra.mxu0 0
    %3114 = vmatprep.subr.bf16.mxu0 0
    %3115 = vmatpush1.bf16.msra.mxu0 0
    %3116 = vmatprep.subr.bf16.mxu0 0
    %3117 = vmatpush1.bf16.msra.mxu0 0
    %3118 = vmatprep.subr.bf16.mxu0 0
    %3119 = vmatpush1.bf16.msra.mxu0 0
    %3120 = vmatprep.mubr.bf16.mxu0 0
    %3121 = vmatmul.mubr.bf16.gmra.mrb[0].mxu0 %v3077
    %v3122 = vpop.f32.mrb[0].mxu0
    %v3123 = vadd.f32 0.0, %v3122
    %v3124 = vpop.f32.mrb[0].mxu0
    %v3125 = vpop.f32.mrb[0].mxu0
    %v3126 = vadd.f32 0.0, %v3125
    %v3127 = vpop.f32.mrb[0].mxu0
    %3128 = vmatprep.mubr.bf16.mxu0 0
    %3129 = vmatmul.mubr.bf16.gmra.mrb[0].mxu0 %v3080
    %v3130 = vpop.f32.mrb[0].mxu0
    %v3131 = vadd.f32 0.0, %v3130
    %v3132 = vpop.f32.mrb[0].mxu0
    %v3133 = vpop.f32.mrb[0].mxu0
    %v3134 = vadd.f32 0.0, %v3133
    %v3135 = vpop.f32.mrb[0].mxu0
    %3136 = vmatprep.mubr.bf16.mxu0 0
    %3137 = vmatmul.mubr.bf16.gmra.mrb[0].mxu0 %v3083
    %v3138 = vpop.f32.mrb[0].mxu0
    %v3139 = vadd.f32 0.0, %v3138
    %v3140 = vpop.f32.mrb[0].mxu0
    %v3141 = vpop.f32.mrb[0].mxu0
    %v3142 = vpop.f32.mrb[0].mxu0
    %3143 = vdwg.mxu0
    %v3144 = vadd.f32 %v2831, %v3123
    %v3145 = vadd.f32 %v2834, %v3126
    %v3146 = vadd.f32 %v2839, %v3131
    %v3147 = vadd.f32 %v2842, %v3134
    %v3148 = vadd.f32 %v2847, %v3139
    %3149 = vrot.lane.b32.xlu0 %v2257, 104
    %v3150 = vpop.permute.xlu0 %3149
    %3151 = vrot.lane.b32.xlu0 %v2258, 104
    %v3152 = vpop.permute.xlu0 %3151
    %3153 = vrot.lane.b32.xlu0 %v2259, 104
    %v3154 = vpop.permute.xlu0 %3153
    %3155 = vrot.lane.b32.xlu0 %v2260, 72
    %v3156 = vpop.permute.xlu0 %3155
    %3157 = vrot.lane.b32.xlu0 %v2261, 72
    %v3158 = vpop.permute.xlu0 %3157
    %3159 = vrot.lane.b32.xlu0 %v2262, 72
    %v3160 = vpop.permute.xlu0 %3159
    %v3162 = vsel %vm572, %v3150, 0
    %v3165 = vsel %vm572, %v3152, 0
    %v3168 = vsel %vm572, %v3154, 0
    %v3171 = vsel %vm572, %v3156, 0
    %v3174 = vsel %vm572, %v3158, 0
    %v3177 = vsel %vm572, %v3160, 0
    %3179 = vmatprep.subr.bf16.mxu0 0
    %3180 = vmatpush1.bf16.xpose.msra.mxu0 %v3171
    %3181 = vmatprep.subr.bf16.mxu0 0
    %3182 = vmatpush1.bf16.xpose.msra.mxu0 %v3174
    %3183 = vmatprep.subr.bf16.mxu0 0
    %3184 = vmatpush1.bf16.xpose.msra.mxu0 %v3177
    %3185 = vmatprep.subr.bf16.mxu0 0
    %3186 = vmatpush1.bf16.xpose.msra.mxu0 0
    %3187 = vmatprep.subr.bf16.mxu0 0
    %3188 = vmatpush1.bf16.xpose.msra.mxu0 0
    %3189 = vmatprep.subr.bf16.mxu0 0
    %3190 = vmatpush1.bf16.xpose.msra.mxu0 0
    %3191 = vmatprep.subr.bf16.mxu0 0
    %3192 = vmatpush1.bf16.xpose.msra.mxu0 0
    %3193 = vmatprep.subr.bf16.mxu0 0
    %3194 = vmatpush1.bf16.xpose.msra.mxu0 0
    %3195 = vmatprep.subr.bf16.mxu0 0
    %3196 = vmatpush1.bf16.xpose.msra.mxu0 0
    %3197 = vmatprep.subr.bf16.mxu0 0
    %3198 = vmatpush1.bf16.xpose.msra.mxu0 0
    %3199 = vmatprep.subr.bf16.mxu0 0
    %3200 = vmatpush1.bf16.xpose.msra.mxu0 0
    %3201 = vmatprep.subr.bf16.mxu0 0
    %3202 = vmatpush1.bf16.xpose.msra.mxu0 0
    %3203 = vmatprep.subr.bf16.mxu0 0
    %3204 = vmatpush1.bf16.xpose.msra.mxu0 0
    %3205 = vmatprep.subr.bf16.mxu0 0
    %3206 = vmatpush1.bf16.xpose.msra.mxu0 0
    %3207 = vmatprep.subr.bf16.mxu0 0
    %3208 = vmatpush1.bf16.xpose.msra.mxu0 0
    %3209 = vmatprep.subr.bf16.mxu0 0
    %3210 = vmatpush1.bf16.xpose.msra.mxu0 0
    %3211 = vmatprep.mubr.bf16.mxu0 0
    %3212 = vmatmul.mubr.bf16.gmra.mrb[0].mxu0 %v3162
    %v3213 = vpop.f32.mrb[0].mxu0
    %v3214 = vadd.f32 %v371, %v3213
    %v3215 = vpop.f32.mrb[0].mxu0
    %v3216 = vpop.f32.mrb[0].mxu0
    %v3217 = vadd.f32 %v372, %v3216
    %v3218 = vpop.f32.mrb[0].mxu0
    %3219 = vmatprep.mubr.bf16.mxu0 0
    %3220 = vmatmul.mubr.bf16.gmra.mrb[0].mxu0 %v3165
    %v3221 = vpop.f32.mrb[0].mxu0
    %v3222 = vadd.f32 %v373, %v3221
    %v3223 = vpop.f32.mrb[0].mxu0
    %v3224 = vpop.f32.mrb[0].mxu0
    %v3225 = vadd.f32 %v374, %v3224
    %v3226 = vpop.f32.mrb[0].mxu0
    %3227 = vmatprep.mubr.bf16.mxu0 0
    %3228 = vmatmul.mubr.bf16.gmra.mrb[0].mxu0 %v3168
    %v3229 = vpop.f32.mrb[0].mxu0
    %v3230 = vadd.f32 %v375, %v3229
    %v3231 = vpop.f32.mrb[0].mxu0
    %v3232 = vpop.f32.mrb[0].mxu0
    %v3233 = vpop.f32.mrb[0].mxu0
    %3234 = vdwg.mxu0
    %v3235 = vsel %vm647, %v3214, -inf
    %3236 = vmax.xlane.f32.xlu0 %v3235
    %v3237 = vpop.xlane.xlu0 %3236
    %v3238 = vsel %vm647, %v3217, -inf
    %3239 = vmax.xlane.f32.xlu0 %v3238
    %v3240 = vpop.xlane.xlu0 %3239
    %v3241 = vsel %vm647, %v3222, -inf
    %3242 = vmax.xlane.f32.xlu0 %v3241
    %v3243 = vpop.xlane.xlu0 %3242
    %v3244 = vsel %vm647, %v3225, -inf
    %3245 = vmax.xlane.f32.xlu0 %v3244
    %v3246 = vpop.xlane.xlu0 %3245
    %v3247 = vsel %vm660, %v3230, -inf
    %3248 = vmax.xlane.f32.xlu0 %v3247
    %v3249 = vpop.xlane.xlu0 %3248
    %v3250 = vsub.f32 %v3214, %v3237
    %v3251 = vsub.f32 %v3217, %v3240
    %v3252 = vsub.f32 %v3222, %v3243
    %v3253 = vsub.f32 %v3225, %v3246
    %v3254 = vsub.f32 %v3230, %v3249
    %v3255 = vmul.f32 %v3250, 1.442695
    %v3256 = vpow.pop %v3255
    %v3257 = vmul.f32 %v3251, 1.442695
    %v3258 = vpow.pop %v3257
    %v3259 = vmul.f32 %v3252, 1.442695
    %v3260 = vpow.pop %v3259
    %v3261 = vmul.f32 %v3253, 1.442695
    %v3262 = vpow.pop %v3261
    %v3263 = vmul.f32 %v3254, 1.442695
    %v3264 = vpow.pop %v3263
    %v3265 = vsel %vm647, %v3256, 0.0
    %3266 = vadd.xlane.f32.xlu0 %v3265
    %v3267 = vpop.xlane.xlu0 %3266
    %v3268 = vsel %vm647, %v3258, 0.0
    %3269 = vadd.xlane.f32.xlu0 %v3268
    %v3270 = vpop.xlane.xlu0 %3269
    %v3271 = vsel %vm647, %v3260, 0.0
    %3272 = vadd.xlane.f32.xlu0 %v3271
    %v3273 = vpop.xlane.xlu0 %3272
    %v3274 = vsel %vm647, %v3262, 0.0
    %3275 = vadd.xlane.f32.xlu0 %v3274
    %v3276 = vpop.xlane.xlu0 %3275
    %v3277 = vsel %vm660, %v3264, 0.0
    %3278 = vadd.xlane.f32.xlu0 %v3277
    %v3279 = vpop.xlane.xlu0 %3278
    %v3280 = vrcp.pop %v3267
    %v3281 = vrcp.pop %v3270
    %v3282 = vrcp.pop %v3273
    %v3283 = vrcp.pop %v3276
    %v3284 = vrcp.pop %v3279
    %v3285 = vmul.f32 %v3256, %v3280
    %v3286 = vmul.f32 %v3258, %v3281
    %v3287 = vmul.f32 %v3260, %v3282
    %v3288 = vmul.f32 %v3262, %v3283
    %v3289 = vmul.f32 %v3264, %v3284
    %v3290 = vpack.c.bf16 %v3286, %v3285
    %v3291 = vpack.c.bf16 %v3288, %v3287
    %v3292 = vpack.c.bf16 %v3289, %v3289
    %3293 = vrot.lane.b32.xlu0 %v2260, 40
    %v3294 = vpop.permute.xlu0 %3293
    %3295 = vrot.lane.b32.xlu0 %v2261, 40
    %v3296 = vpop.permute.xlu0 %3295
    %3297 = vrot.lane.b32.xlu0 %v2262, 40
    %v3298 = vpop.permute.xlu0 %3297
    %v3302 = vsel %vm647, %v3290, 0
    %v3305 = vsel %vm647, %v3291, 0
    %v3308 = vsel %vm647, %v3292, 0
    %v3311 = vsel %vm724, %v3298, 0
    %3313 = vmatprep.subr.bf16.mxu0 0
    %3314 = vmatpush1.bf16.msra.mxu0 %v3294
    %3315 = vmatprep.subr.bf16.mxu0 0
    %3316 = vmatpush1.bf16.msra.mxu0 %v3296
    %3317 = vmatprep.subr.bf16.mxu0 0
    %3318 = vmatpush1.bf16.msra.mxu0 %v3311
    %3319 = vmatprep.subr.bf16.mxu0 0
    %3320 = vmatpush1.bf16.msra.mxu0 0
    %3321 = vmatprep.subr.bf16.mxu0 0
    %3322 = vmatpush1.bf16.msra.mxu0 0
    %3323 = vmatprep.subr.bf16.mxu0 0
    %3324 = vmatpush1.bf16.msra.mxu0 0
    %3325 = vmatprep.subr.bf16.mxu0 0
    %3326 = vmatpush1.bf16.msra.mxu0 0
    %3327 = vmatprep.subr.bf16.mxu0 0
    %3328 = vmatpush1.bf16.msra.mxu0 0
    %3329 = vmatprep.subr.bf16.mxu0 0
    %3330 = vmatpush1.bf16.msra.mxu0 0
    %3331 = vmatprep.subr.bf16.mxu0 0
    %3332 = vmatpush1.bf16.msra.mxu0 0
    %3333 = vmatprep.subr.bf16.mxu0 0
    %3334 = vmatpush1.bf16.msra.mxu0 0
    %3335 = vmatprep.subr.bf16.mxu0 0
    %3336 = vmatpush1.bf16.msra.mxu0 0
    %3337 = vmatprep.subr.bf16.mxu0 0
    %3338 = vmatpush1.bf16.msra.mxu0 0
    %3339 = vmatprep.subr.bf16.mxu0 0
    %3340 = vmatpush1.bf16.msra.mxu0 0
    %3341 = vmatprep.subr.bf16.mxu0 0
    %3342 = vmatpush1.bf16.msra.mxu0 0
    %3343 = vmatprep.subr.bf16.mxu0 0
    %3344 = vmatpush1.bf16.msra.mxu0 0
    %3345 = vmatprep.mubr.bf16.mxu0 0
    %3346 = vmatmul.mubr.bf16.gmra.mrb[0].mxu0 %v3302
    %v3347 = vpop.f32.mrb[0].mxu0
    %v3348 = vadd.f32 0.0, %v3347
    %v3349 = vpop.f32.mrb[0].mxu0
    %v3350 = vpop.f32.mrb[0].mxu0
    %v3351 = vadd.f32 0.0, %v3350
    %v3352 = vpop.f32.mrb[0].mxu0
    %3353 = vmatprep.mubr.bf16.mxu0 0
    %3354 = vmatmul.mubr.bf16.gmra.mrb[0].mxu0 %v3305
    %v3355 = vpop.f32.mrb[0].mxu0
    %v3356 = vadd.f32 0.0, %v3355
    %v3357 = vpop.f32.mrb[0].mxu0
    %v3358 = vpop.f32.mrb[0].mxu0
    %v3359 = vadd.f32 0.0, %v3358
    %v3360 = vpop.f32.mrb[0].mxu0
    %3361 = vmatprep.mubr.bf16.mxu0 0
    %3362 = vmatmul.mubr.bf16.gmra.mrb[0].mxu0 %v3308
    %v3363 = vpop.f32.mrb[0].mxu0
    %v3364 = vadd.f32 0.0, %v3363
    %v3365 = vpop.f32.mrb[0].mxu0
    %v3366 = vpop.f32.mrb[0].mxu0
    %v3367 = vpop.f32.mrb[0].mxu0
    %3368 = vdwg.mxu0
    %v3369 = vpack.c.bf16 %v3351, %v3348
    %v3370 = vpack.c.bf16 %v3359, %v3356
    %v3371 = vpack.c.bf16 %v3364, %v3364
    %v3372 = vpack.c.bf16 %v2267, %v2267
    %v3374 = vsel %vm572, %v3369, 0
    %v3377 = vsel %vm572, %v3370, 0
    %v3380 = vsel %vm572, %v3371, 0
    %v3383 = vsel %vm1024, %v3372, 0
    %3385 = vmatprep.subr.bf16.mxu0 0
    %3386 = vmatpush1.bf16.msra.mxu0 %v3383
    %3387 = vmatprep.subr.bf16.mxu0 0
    %3388 = vmatpush1.bf16.msra.mxu0 0
    %3389 = vmatprep.subr.bf16.mxu0 0
    %3390 = vmatpush1.bf16.msra.mxu0 0
    %3391 = vmatprep.subr.bf16.mxu0 0
    %3392 = vmatpush1.bf16.msra.mxu0 0
    %3393 = vmatprep.subr.bf16.mxu0 0
    %3394 = vmatpush1.bf16.msra.mxu0 0
    %3395 = vmatprep.subr.bf16.mxu0 0
    %3396 = vmatpush1.bf16.msra.mxu0 0
    %3397 = vmatprep.subr.bf16.mxu0 0
    %3398 = vmatpush1.bf16.msra.mxu0 0
    %3399 = vmatprep.subr.bf16.mxu0 0
    %3400 = vmatpush1.bf16.msra.mxu0 0
    %3401 = vmatprep.subr.bf16.mxu0 0
    %3402 = vmatpush1.bf16.msra.mxu0 0
    %3403 = vmatprep.subr.bf16.mxu0 0
    %3404 = vmatpush1.bf16.msra.mxu0 0
    %3405 = vmatprep.subr.bf16.mxu0 0
    %3406 = vmatpush1.bf16.msra.mxu0 0
    %3407 = vmatprep.subr.bf16.mxu0 0
    %3408 = vmatpush1.bf16.msra.mxu0 0
    %3409 = vmatprep.subr.bf16.mxu0 0
    %3410 = vmatpush1.bf16.msra.mxu0 0
    %3411 = vmatprep.subr.bf16.mxu0 0
    %3412 = vmatpush1.bf16.msra.mxu0 0
    %3413 = vmatprep.subr.bf16.mxu0 0
    %3414 = vmatpush1.bf16.msra.mxu0 0
    %3415 = vmatprep.subr.bf16.mxu0 0
    %3416 = vmatpush1.bf16.msra.mxu0 0
    %3417 = vmatprep.mubr.bf16.mxu0 0
    %3418 = vmatmul.mubr.bf16.gmra.mrb[0].mxu0 %v3374
    %v3419 = vpop.f32.mrb[0].mxu0
    %v3420 = vadd.f32 0.0, %v3419
    %v3421 = vpop.f32.mrb[0].mxu0
    %v3422 = vpop.f32.mrb[0].mxu0
    %v3423 = vadd.f32 0.0, %v3422
    %v3424 = vpop.f32.mrb[0].mxu0
    %3425 = vmatprep.mubr.bf16.mxu0 0
    %3426 = vmatmul.mubr.bf16.gmra.mrb[0].mxu0 %v3377
    %v3427 = vpop.f32.mrb[0].mxu0
    %v3428 = vadd.f32 0.0, %v3427
    %v3429 = vpop.f32.mrb[0].mxu0
    %v3430 = vpop.f32.mrb[0].mxu0
    %v3431 = vadd.f32 0.0, %v3430
    %v3432 = vpop.f32.mrb[0].mxu0
    %3433 = vmatprep.mubr.bf16.mxu0 0
    %3434 = vmatmul.mubr.bf16.gmra.mrb[0].mxu0 %v3380
    %v3435 = vpop.f32.mrb[0].mxu0
    %v3436 = vadd.f32 0.0, %v3435
    %v3437 = vpop.f32.mrb[0].mxu0
    %v3438 = vpop.f32.mrb[0].mxu0
    %v3439 = vpop.f32.mrb[0].mxu0
    %3440 = vdwg.mxu0
    %v3441 = vadd.f32 %v3144, %v3420
    %v3442 = vadd.f32 %v3145, %v3423
    %v3443 = vadd.f32 %v3146, %v3428
    %v3444 = vadd.f32 %v3147, %v3431
    %v3445 = vadd.f32 %v3148, %v3436
    %v3446 = vadd.f32 %v2073, %v3441
    %v3447 = vadd.f32 %v2074, %v3442
    %v3448 = vadd.f32 %v2075, %v3443
    %v3449 = vadd.f32 %v2076, %v3444
    %v3450 = vadd.f32 %v2077, %v3445
    %s3451 = scalar_lea.vmem %s15, 1
    %v3452 = vld [vmem:[%s3451] sm:$0x1]
    %v3454 = vlaneseq
    %v3455 = vshrl.u32 %v3454, 7
    %v3456 = vsub.s32 0, %v3455
    %v3457 = vrot.slane %v3452, %v3456
    %v3459 = vadd.f32 %v3446, %v3457
    %v3460 = vadd.f32 %v3447, %v3457
    %v3461 = vadd.f32 %v3448, %v3457
    %v3462 = vadd.f32 %v3449, %v3457
    %v3463 = vadd.f32 %v3450, %v3457
    %s3464 = scalar_lea.vmem %s16, 1
    %v3465 = vld [vmem:[%s3464] sm:$0x1]
    %s3466 = scalar_lea.vmem %s17, 1
    %v3467 = vld [vmem:[%s3466] sm:$0x1]
    %v3468 = vsel %vm255, %v3459, 0.0
    %3469 = vadd.xlane.f32.xlu0 %v3468
    %v3470 = vpop.xlane.xlu0 %3469
    %v3471 = vsel %vm255, %v3460, 0.0
    %3472 = vadd.xlane.f32.xlu0 %v3471
    %v3473 = vpop.xlane.xlu0 %3472
    %v3474 = vsel %vm255, %v3461, 0.0
    %3475 = vadd.xlane.f32.xlu0 %v3474
    %v3476 = vpop.xlane.xlu0 %3475
    %v3477 = vsel %vm255, %v3462, 0.0
    %3478 = vadd.xlane.f32.xlu0 %v3477
    %v3479 = vpop.xlane.xlu0 %3478
    %v3480 = vsel %vm390, %v3463, 0.0
    %3481 = vadd.xlane.f32.xlu0 %v3480
    %v3482 = vpop.xlane.xlu0 %3481
    %v3483 = vmul.f32 %v3470, %v394
    %v3484 = vmul.f32 %v3473, %v394
    %v3485 = vmul.f32 %v3476, %v394
    %v3486 = vmul.f32 %v3479, %v394
    %v3487 = vmul.f32 %v3482, %v394
    %v3488 = vsub.f32 %v3459, %v3483
    %v3489 = vsub.f32 %v3460, %v3484
    %v3490 = vsub.f32 %v3461, %v3485
    %v3491 = vsub.f32 %v3462, %v3486
    %v3492 = vsub.f32 %v3463, %v3487
    %v3493 = vmul.f32 %v3488, %v3488
    %v3494 = vmul.f32 %v3489, %v3489
    %v3495 = vmul.f32 %v3490, %v3490
    %v3496 = vmul.f32 %v3491, %v3491
    %v3497 = vmul.f32 %v3492, %v3492
    %v3498 = vsel %vm255, %v3493, 0.0
    %3499 = vadd.xlane.f32.xlu0 %v3498
    %v3500 = vpop.xlane.xlu0 %3499
    %v3501 = vsel %vm255, %v3494, 0.0
    %3502 = vadd.xlane.f32.xlu0 %v3501
    %v3503 = vpop.xlane.xlu0 %3502
    %v3504 = vsel %vm255, %v3495, 0.0
    %3505 = vadd.xlane.f32.xlu0 %v3504
    %v3506 = vpop.xlane.xlu0 %3505
    %v3507 = vsel %vm255, %v3496, 0.0
    %3508 = vadd.xlane.f32.xlu0 %v3507
    %v3509 = vpop.xlane.xlu0 %3508
    %v3510 = vsel %vm390, %v3497, 0.0
    %3511 = vadd.xlane.f32.xlu0 %v3510
    %v3512 = vpop.xlane.xlu0 %3511
    %v3513 = vmul.f32 %v3500, %v394
    %v3514 = vmul.f32 %v3503, %v394
    %v3515 = vmul.f32 %v3506, %v394
    %v3516 = vmul.f32 %v3509, %v394
    %v3517 = vmul.f32 %v3512, %v394
    %v3518 = vadd.f32 %v3513, 1e-05
    %v3519 = vadd.f32 %v3514, 1e-05
    %v3520 = vadd.f32 %v3515, 1e-05
    %v3521 = vadd.f32 %v3516, 1e-05
    %v3522 = vadd.f32 %v3517, 1e-05
    %v3523 = vrsqrt.pop %v3518
    %v3524 = vrsqrt.pop %v3519
    %v3525 = vrsqrt.pop %v3520
    %v3526 = vrsqrt.pop %v3521
    %v3527 = vrsqrt.pop %v3522
    %v3528 = vmul.f32 %v3488, %v3523
    %v3529 = vmul.f32 %v3489, %v3524
    %v3530 = vmul.f32 %v3490, %v3525
    %v3531 = vmul.f32 %v3491, %v3526
    %v3532 = vmul.f32 %v3492, %v3527
    %v3534 = vlaneseq
    %v3535 = vshrl.u32 %v3534, 7
    %v3536 = vsub.s32 0, %v3535
    %v3537 = vrot.slane %v3465, %v3536
    %v3539 = vmul.f32 %v3528, %v3537
    %v3540 = vmul.f32 %v3529, %v3537
    %v3541 = vmul.f32 %v3530, %v3537
    %v3542 = vmul.f32 %v3531, %v3537
    %v3543 = vmul.f32 %v3532, %v3537
    %v3545 = vlaneseq
    %v3546 = vshrl.u32 %v3545, 7
    %v3547 = vsub.s32 0, %v3546
    %v3548 = vrot.slane %v3467, %v3547
    %v3550 = vadd.f32 %v3539, %v3548
    %v3551 = vadd.f32 %v3540, %v3548
    %v3552 = vadd.f32 %v3541, %v3548
    %v3553 = vadd.f32 %v3542, %v3548
    %v3554 = vadd.f32 %v3543, %v3548
    %s3555 = scalar_lea.vmem %s18, 32
    %v3556 = vld [vmem:[%s3555] sm:$0xff]
    %v3557 = vld [vmem:[%s3555 + $0x8] sm:$0xff]
    %v3558 = vld [vmem:[%s3555 + $0x10] sm:$0xff]
    %v3559 = vld [vmem:[%s3555 + $0x18] sm:$0xff]
    %v3560 = vpack.c.bf16 %v3551, %v3550
    %v3561 = vpack.c.bf16 %v3553, %v3552
    %v3562 = vpack.c.bf16 %v3554, %v3554
    %v3563 = vpack.c.bf16 %v3557, %v3556
    %v3564 = vpack.c.bf16 %v3559, %v3558
    %s3565 = scalar_lea.vmem %s19, 1
    %v3566 = vld [vmem:[%s3565] sm:$0x1]
    %v3568 = vlaneseq
    %v3569 = vshrl.u32 %v3568, 7
    %v3570 = vsub.s32 0, %v3569
    %v3571 = vrot.slane %v3566, %v3570
    %v3574 = vsel %vm255, %v3560, 0
    %v3577 = vsel %vm255, %v3561, 0
    %v3580 = vsel %vm255, %v3562, 0
    %3582 = vmatprep.subr.bf16.mxu0 0
    %3583 = vmatpush1.bf16.msra.mxu0 %v3563
    %3584 = vmatprep.subr.bf16.mxu0 0
    %3585 = vmatpush1.bf16.msra.mxu0 %v3564
    %3586 = vmatprep.subr.bf16.mxu0 0
    %3587 = vmatpush1.bf16.msra.mxu0 0
    %3588 = vmatprep.subr.bf16.mxu0 0
    %3589 = vmatpush1.bf16.msra.mxu0 0
    %3590 = vmatprep.subr.bf16.mxu0 0
    %3591 = vmatpush1.bf16.msra.mxu0 0
    %3592 = vmatprep.subr.bf16.mxu0 0
    %3593 = vmatpush1.bf16.msra.mxu0 0
    %3594 = vmatprep.subr.bf16.mxu0 0
    %3595 = vmatpush1.bf16.msra.mxu0 0
    %3596 = vmatprep.subr.bf16.mxu0 0
    %3597 = vmatpush1.bf16.msra.mxu0 0
    %3598 = vmatprep.subr.bf16.mxu0 0
    %3599 = vmatpush1.bf16.msra.mxu0 0
    %3600 = vmatprep.subr.bf16.mxu0 0
    %3601 = vmatpush1.bf16.msra.mxu0 0
    %3602 = vmatprep.subr.bf16.mxu0 0
    %3603 = vmatpush1.bf16.msra.mxu0 0
    %3604 = vmatprep.subr.bf16.mxu0 0
    %3605 = vmatpush1.bf16.msra.mxu0 0
    %3606 = vmatprep.subr.bf16.mxu0 0
    %3607 = vmatpush1.bf16.msra.mxu0 0
    %3608 = vmatprep.subr.bf16.mxu0 0
    %3609 = vmatpush1.bf16.msra.mxu0 0
    %3610 = vmatprep.subr.bf16.mxu0 0
    %3611 = vmatpush1.bf16.msra.mxu0 0
    %3612 = vmatprep.subr.bf16.mxu0 0
    %3613 = vmatpush1.bf16.msra.mxu0 0
    %3614 = vmatprep.mubr.bf16.mxu0 0
    %3615 = vmatmul.mubr.bf16.gmra.mrb[0].mxu0 %v3574
    %v3616 = vpop.f32.mrb[0].mxu0
    %v3617 = vadd.f32 %v3571, %v3616
    %v3618 = vpop.f32.mrb[0].mxu0
    %v3619 = vpop.f32.mrb[0].mxu0
    %v3620 = vadd.f32 %v3571, %v3619
    %v3621 = vpop.f32.mrb[0].mxu0
    %3622 = vmatprep.mubr.bf16.mxu0 0
    %3623 = vmatmul.mubr.bf16.gmra.mrb[0].mxu0 %v3577
    %v3624 = vpop.f32.mrb[0].mxu0
    %v3625 = vadd.f32 %v3571, %v3624
    %v3626 = vpop.f32.mrb[0].mxu0
    %v3627 = vpop.f32.mrb[0].mxu0
    %v3628 = vadd.f32 %v3571, %v3627
    %v3629 = vpop.f32.mrb[0].mxu0
    %3630 = vmatprep.mubr.bf16.mxu0 0
    %3631 = vmatmul.mubr.bf16.gmra.mrb[0].mxu0 %v3580
    %v3632 = vpop.f32.mrb[0].mxu0
    %v3633 = vadd.f32 %v3571, %v3632
    %v3634 = vpop.f32.mrb[0].mxu0
    %v3635 = vpop.f32.mrb[0].mxu0
    %v3636 = vpop.f32.mrb[0].mxu0
    %3637 = vdwg.mxu0
    %v3638 = vmul.f32 %v3617, %v3617
    %v3639 = vmul.f32 %v3620, %v3620
    %v3640 = vmul.f32 %v3625, %v3625
    %v3641 = vmul.f32 %v3628, %v3628
    %v3642 = vmul.f32 %v3633, %v3633
    %v3643 = vmul.f32 %v3617, %v3638
    %v3644 = vmul.f32 %v3620, %v3639
    %v3645 = vmul.f32 %v3625, %v3640
    %v3646 = vmul.f32 %v3628, %v3641
    %v3647 = vmul.f32 %v3633, %v3642
    %v3648 = vmul.f32 %v3643, 0.044715
    %v3649 = vmul.f32 %v3644, 0.044715
    %v3650 = vmul.f32 %v3645, 0.044715
    %v3651 = vmul.f32 %v3646, 0.044715
    %v3652 = vmul.f32 %v3647, 0.044715
    %v3653 = vadd.f32 %v3617, %v3648
    %v3654 = vadd.f32 %v3620, %v3649
    %v3655 = vadd.f32 %v3625, %v3650
    %v3656 = vadd.f32 %v3628, %v3651
    %v3657 = vadd.f32 %v3633, %v3652
    %v3658 = vmul.f32 %v3653, 0.7978846
    %v3659 = vmul.f32 %v3654, 0.7978846
    %v3660 = vmul.f32 %v3655, 0.7978846
    %v3661 = vmul.f32 %v3656, 0.7978846
    %v3662 = vmul.f32 %v3657, 0.7978846
    %v3663 = vtanh.pop %v3658
    %v3664 = vtanh.pop %v3659
    %v3665 = vtanh.pop %v3660
    %v3666 = vtanh.pop %v3661
    %v3667 = vtanh.pop %v3662
    %v3668 = vadd.f32 %v3663, 1.0
    %v3669 = vadd.f32 %v3664, 1.0
    %v3670 = vadd.f32 %v3665, 1.0
    %v3671 = vadd.f32 %v3666, 1.0
    %v3672 = vadd.f32 %v3667, 1.0
    %v3673 = vmul.f32 %v3668, 0.5
    %v3674 = vmul.f32 %v3669, 0.5
    %v3675 = vmul.f32 %v3670, 0.5
    %v3676 = vmul.f32 %v3671, 0.5
    %v3677 = vmul.f32 %v3672, 0.5
    %v3678 = vmul.f32 %v3617, %v3673
    %v3679 = vmul.f32 %v3620, %v3674
    %v3680 = vmul.f32 %v3625, %v3675
    %v3681 = vmul.f32 %v3628, %v3676
    %v3682 = vmul.f32 %v3633, %v3677
    %s3683 = scalar_lea.vmem %s20, 128
    %v3684 = vld [vmem:[%s3683] sm:$0xff]
    %v3685 = vld [vmem:[%s3683 + $0x8] sm:$0xff]
    %v3686 = vld [vmem:[%s3683 + $0x10] sm:$0xff]
    %v3687 = vld [vmem:[%s3683 + $0x18] sm:$0xff]
    %v3688 = vld [vmem:[%s3683 + $0x20] sm:$0xff]
    %v3689 = vld [vmem:[%s3683 + $0x28] sm:$0xff]
    %v3690 = vld [vmem:[%s3683 + $0x30] sm:$0xff]
    %v3691 = vld [vmem:[%s3683 + $0x38] sm:$0xff]
    %v3692 = vld [vmem:[%s3683 + $0x40] sm:$0xff]
    %v3693 = vld [vmem:[%s3683 + $0x48] sm:$0xff]
    %v3694 = vld [vmem:[%s3683 + $0x50] sm:$0xff]
    %v3695 = vld [vmem:[%s3683 + $0x58] sm:$0xff]
    %v3696 = vld [vmem:[%s3683 + $0x60] sm:$0xff]
    %v3697 = vld [vmem:[%s3683 + $0x68] sm:$0xff]
    %v3698 = vld [vmem:[%s3683 + $0x70] sm:$0xff]
    %v3699 = vld [vmem:[%s3683 + $0x78] sm:$0xff]
    %v3700 = vpack.c.bf16 %v3679, %v3678
    %v3701 = vpack.c.bf16 %v3681, %v3680
    %v3702 = vpack.c.bf16 %v3682, %v3682
    %v3703 = vpack.c.bf16 %v3685, %v3684
    %v3704 = vpack.c.bf16 %v3687, %v3686
    %v3705 = vpack.c.bf16 %v3689, %v3688
    %v3706 = vpack.c.bf16 %v3691, %v3690
    %v3707 = vpack.c.bf16 %v3693, %v3692
    %v3708 = vpack.c.bf16 %v3695, %v3694
    %v3709 = vpack.c.bf16 %v3697, %v3696
    %v3710 = vpack.c.bf16 %v3699, %v3698
    %3711 = vmatprep.subr.bf16.mxu0 0
    %3712 = vmatpush1.bf16.msra.mxu0 %v3703
    %3713 = vmatprep.subr.bf16.mxu0 0
    %3714 = vmatpush1.bf16.msra.mxu0 %v3704
    %3715 = vmatprep.subr.bf16.mxu0 0
    %3716 = vmatpush1.bf16.msra.mxu0 %v3705
    %3717 = vmatprep.subr.bf16.mxu0 0
    %3718 = vmatpush1.bf16.msra.mxu0 %v3706
    %3719 = vmatprep.subr.bf16.mxu0 0
    %3720 = vmatpush1.bf16.msra.mxu0 %v3707
    %3721 = vmatprep.subr.bf16.mxu0 0
    %3722 = vmatpush1.bf16.msra.mxu0 %v3708
    %3723 = vmatprep.subr.bf16.mxu0 0
    %3724 = vmatpush1.bf16.msra.mxu0 %v3709
    %3725 = vmatprep.subr.bf16.mxu0 0
    %3726 = vmatpush1.bf16.msra.mxu0 %v3710
    %3727 = vmatprep.subr.bf16.mxu0 0
    %3728 = vmatpush1.bf16.msra.mxu0 0
    %3729 = vmatprep.subr.bf16.mxu0 0
    %3730 = vmatpush1.bf16.msra.mxu0 0
    %3731 = vmatprep.subr.bf16.mxu0 0
    %3732 = vmatpush1.bf16.msra.mxu0 0
    %3733 = vmatprep.subr.bf16.mxu0 0
    %3734 = vmatpush1.bf16.msra.mxu0 0
    %3735 = vmatprep.subr.bf16.mxu0 0
    %3736 = vmatpush1.bf16.msra.mxu0 0
    %3737 = vmatprep.subr.bf16.mxu0 0
    %3738 = vmatpush1.bf16.msra.mxu0 0
    %3739 = vmatprep.subr.bf16.mxu0 0
    %3740 = vmatpush1.bf16.msra.mxu0 0
    %3741 = vmatprep.subr.bf16.mxu0 0
    %3742 = vmatpush1.bf16.msra.mxu0 0
    %3743 = vmatprep.mubr.bf16.mxu0 0
    %3744 = vmatmul.mubr.bf16.gmra.mrb[0].mxu0 %v3700
    %v3745 = vpop.f32.mrb[0].mxu0
    %v3746 = vadd.f32 0.0, %v3745
    %v3747 = vpop.f32.mrb[0].mxu0
    %v3748 = vpop.f32.mrb[0].mxu0
    %v3749 = vadd.f32 0.0, %v3748
    %v3750 = vpop.f32.mrb[0].mxu0
    %3751 = vmatprep.mubr.bf16.mxu0 0
    %3752 = vmatmul.mubr.bf16.gmra.mrb[0].mxu0 %v3701
    %v3753 = vpop.f32.mrb[0].mxu0
    %v3754 = vadd.f32 0.0, %v3753
    %v3755 = vpop.f32.mrb[0].mxu0
    %v3756 = vpop.f32.mrb[0].mxu0
    %v3757 = vadd.f32 0.0, %v3756
    %v3758 = vpop.f32.mrb[0].mxu0
    %3759 = vmatprep.mubr.bf16.mxu0 0
    %3760 = vmatmul.mubr.bf16.gmra.mrb[0].mxu0 %v3702
    %v3761 = vpop.f32.mrb[0].mxu0
    %v3762 = vadd.f32 0.0, %v3761
    %v3763 = vpop.f32.mrb[0].mxu0
    %v3764 = vpop.f32.mrb[0].mxu0
    %v3765 = vpop.f32.mrb[0].mxu0
    %3766 = vdwg.mxu0
    %v3767 = vadd.f32 %v3459, %v3746
    %v3768 = vadd.f32 %v3460, %v3749
    %v3769 = vadd.f32 %v3461, %v3754
    %v3770 = vadd.f32 %v3462, %v3757
    %v3771 = vadd.f32 %v3463, %v3762
    %s3772 = scalar_lea.vmem %s21, 1
    %v3773 = vld [vmem:[%s3772] sm:$0x1]
    %v3775 = vlaneseq
    %v3776 = vshrl.u32 %v3775, 7
    %v3777 = vsub.s32 0, %v3776
    %v3778 = vrot.slane %v3773, %v3777
    %v3780 = vadd.f32 %v3767, %v3778
    %v3781 = vadd.f32 %v3768, %v3778
    %v3782 = vadd.f32 %v3769, %v3778
    %v3783 = vadd.f32 %v3770, %v3778
    %v3784 = vadd.f32 %v3771, %v3778
    %v3785 = vld [vmem:[%s22] sm:$0x1]
    %v3786 = vld [vmem:[%s23] sm:$0x1]
    %v3787 = vsel %vm255, %v3780, 0.0
    %3788 = vadd.xlane.f32.xlu0 %v3787
    %v3789 = vpop.xlane.xlu0 %3788
    %v3790 = vsel %vm255, %v3781, 0.0
    %3791 = vadd.xlane.f32.xlu0 %v3790
    %v3792 = vpop.xlane.xlu0 %3791
    %v3793 = vsel %vm255, %v3782, 0.0
    %3794 = vadd.xlane.f32.xlu0 %v3793
    %v3795 = vpop.xlane.xlu0 %3794
    %v3796 = vsel %vm255, %v3783, 0.0
    %3797 = vadd.xlane.f32.xlu0 %v3796
    %v3798 = vpop.xlane.xlu0 %3797
    %v3799 = vsel %vm390, %v3784, 0.0
    %3800 = vadd.xlane.f32.xlu0 %v3799
    %v3801 = vpop.xlane.xlu0 %3800
    %v3802 = vmul.f32 %v3789, %v394
    %v3803 = vmul.f32 %v3792, %v394
    %v3804 = vmul.f32 %v3795, %v394
    %v3805 = vmul.f32 %v3798, %v394
    %v3806 = vmul.f32 %v3801, %v394
    %v3807 = vsub.f32 %v3780, %v3802
    %v3808 = vsub.f32 %v3781, %v3803
    %v3809 = vsub.f32 %v3782, %v3804
    %v3810 = vsub.f32 %v3783, %v3805
    %v3811 = vsub.f32 %v3784, %v3806
    %v3812 = vmul.f32 %v3807, %v3807
    %v3813 = vmul.f32 %v3808, %v3808
    %v3814 = vmul.f32 %v3809, %v3809
    %v3815 = vmul.f32 %v3810, %v3810
    %v3816 = vmul.f32 %v3811, %v3811
    %v3817 = vsel %vm255, %v3812, 0.0
    %3818 = vadd.xlane.f32.xlu0 %v3817
    %v3819 = vpop.xlane.xlu0 %3818
    %v3820 = vsel %vm255, %v3813, 0.0
    %3821 = vadd.xlane.f32.xlu0 %v3820
    %v3822 = vpop.xlane.xlu0 %3821
    %v3823 = vsel %vm255, %v3814, 0.0
    %3824 = vadd.xlane.f32.xlu0 %v3823
    %v3825 = vpop.xlane.xlu0 %3824
    %v3826 = vsel %vm255, %v3815, 0.0
    %3827 = vadd.xlane.f32.xlu0 %v3826
    %v3828 = vpop.xlane.xlu0 %3827
    %v3829 = vsel %vm390, %v3816, 0.0
    %3830 = vadd.xlane.f32.xlu0 %v3829
    %v3831 = vpop.xlane.xlu0 %3830
    %v3832 = vmul.f32 %v3819, %v394
    %v3833 = vmul.f32 %v3822, %v394
    %v3834 = vmul.f32 %v3825, %v394
    %v3835 = vmul.f32 %v3828, %v394
    %v3836 = vmul.f32 %v3831, %v394
    %v3837 = vadd.f32 %v3832, 1e-05
    %v3838 = vadd.f32 %v3833, 1e-05
    %v3839 = vadd.f32 %v3834, 1e-05
    %v3840 = vadd.f32 %v3835, 1e-05
    %v3841 = vadd.f32 %v3836, 1e-05
    %v3842 = vrsqrt.pop %v3837
    %v3843 = vrsqrt.pop %v3838
    %v3844 = vrsqrt.pop %v3839
    %v3845 = vrsqrt.pop %v3840
    %v3846 = vrsqrt.pop %v3841
    %v3847 = vmul.f32 %v3807, %v3842
    %v3848 = vmul.f32 %v3808, %v3843
    %v3849 = vmul.f32 %v3809, %v3844
    %v3850 = vmul.f32 %v3810, %v3845
    %v3851 = vmul.f32 %v3811, %v3846
    %v3853 = vlaneseq
    %v3854 = vshrl.u32 %v3853, 7
    %v3855 = vsub.s32 0, %v3854
    %v3856 = vrot.slane %v3785, %v3855
    %v3858 = vmul.f32 %v3847, %v3856
    %v3859 = vmul.f32 %v3848, %v3856
    %v3860 = vmul.f32 %v3849, %v3856
    %v3861 = vmul.f32 %v3850, %v3856
    %v3862 = vmul.f32 %v3851, %v3856
    %v3864 = vlaneseq
    %v3865 = vshrl.u32 %v3864, 7
    %v3866 = vsub.s32 0, %v3865
    %v3867 = vrot.slane %v3786, %v3866
    %v3869 = vadd.f32 %v3858, %v3867
    %v3870 = vadd.f32 %v3859, %v3867
    %v3871 = vadd.f32 %v3860, %v3867
    %v3872 = vadd.f32 %v3861, %v3867
    %v3873 = vadd.f32 %v3862, %v3867
    %v3874 = vld [vmem:[%s24] sm:$0xff]
    %v3875 = vld [vmem:[%s24 + $0x8] sm:$0xff]
    %v3876 = vld [vmem:[%s24 + $0x10] sm:$0xff]
    %v3877 = vld [vmem:[%s24 + $0x18] sm:$0xff]
    %v3878 = vpack.c.bf16 %v3870, %v3869
    %v3879 = vpack.c.bf16 %v3872, %v3871
    %v3880 = vpack.c.bf16 %v3873, %v3873
    %v3881 = vpack.c.bf16 %v3875, %v3874
    %v3882 = vpack.c.bf16 %v3877, %v3876
    %v3883 = vld [vmem:[%s25] sm:$0x1]
    %v3885 = vlaneseq
    %v3886 = vshrl.u32 %v3885, 7
    %v3887 = vsub.s32 0, %v3886
    %v3888 = vrot.slane %v3883, %v3887
    %v3891 = vsel %vm255, %v3878, 0
    %v3894 = vsel %vm255, %v3879, 0
    %v3897 = vsel %vm255, %v3880, 0
    %3899 = vmatprep.subr.bf16.mxu0 0
    %3900 = vmatpush1.bf16.msra.mxu0 %v3881
    %3901 = vmatprep.subr.bf16.mxu0 0
    %3902 = vmatpush1.bf16.msra.mxu0 %v3882
    %3903 = vmatprep.subr.bf16.mxu0 0
    %3904 = vmatpush1.bf16.msra.mxu0 0
    %3905 = vmatprep.subr.bf16.mxu0 0
    %3906 = vmatpush1.bf16.msra.mxu0 0
    %3907 = vmatprep.subr.bf16.mxu0 0
    %3908 = vmatpush1.bf16.msra.mxu0 0
    %3909 = vmatprep.subr.bf16.mxu0 0
    %3910 = vmatpush1.bf16.msra.mxu0 0
    %3911 = vmatprep.subr.bf16.mxu0 0
    %3912 = vmatpush1.bf16.msra.mxu0 0
    %3913 = vmatprep.subr.bf16.mxu0 0
    %3914 = vmatpush1.bf16.msra.mxu0 0
    %3915 = vmatprep.subr.bf16.mxu0 0
    %3916 = vmatpush1.bf16.msra.mxu0 0
    %3917 = vmatprep.subr.bf16.mxu0 0
    %3918 = vmatpush1.bf16.msra.mxu0 0
    %3919 = vmatprep.subr.bf16.mxu0 0
    %3920 = vmatpush1.bf16.msra.mxu0 0
    %3921 = vmatprep.subr.bf16.mxu0 0
    %3922 = vmatpush1.bf16.msra.mxu0 0
    %3923 = vmatprep.subr.bf16.mxu0 0
    %3924 = vmatpush1.bf16.msra.mxu0 0
    %3925 = vmatprep.subr.bf16.mxu0 0
    %3926 = vmatpush1.bf16.msra.mxu0 0
    %3927 = vmatprep.subr.bf16.mxu0 0
    %3928 = vmatpush1.bf16.msra.mxu0 0
    %3929 = vmatprep.subr.bf16.mxu0 0
    %3930 = vmatpush1.bf16.msra.mxu0 0
    %3931 = vmatprep.mubr.bf16.mxu0 0
    %3932 = vmatmul.mubr.bf16.gmra.mrb[0].mxu0 %v3891
    %v3933 = vpop.f32.mrb[0].mxu0
    %v3934 = vadd.f32 %v3888, %v3933
    %v3935 = vpop.f32.mrb[0].mxu0
    %v3936 = vpop.f32.mrb[0].mxu0
    %v3937 = vadd.f32 %v3888, %v3936
    %v3938 = vpop.f32.mrb[0].mxu0
    %3939 = vmatprep.mubr.bf16.mxu0 0
    %3940 = vmatmul.mubr.bf16.gmra.mrb[0].mxu0 %v3894
    %v3941 = vpop.f32.mrb[0].mxu0
    %v3942 = vadd.f32 %v3888, %v3941
    %v3943 = vpop.f32.mrb[0].mxu0
    %v3944 = vpop.f32.mrb[0].mxu0
    %v3945 = vadd.f32 %v3888, %v3944
    %v3946 = vpop.f32.mrb[0].mxu0
    %3947 = vmatprep.mubr.bf16.mxu0 0
    %3948 = vmatmul.mubr.bf16.gmra.mrb[0].mxu0 %v3897
    %v3949 = vpop.f32.mrb[0].mxu0
    %v3950 = vadd.f32 %v3888, %v3949
    %v3951 = vpop.f32.mrb[0].mxu0
    %v3952 = vpop.f32.mrb[0].mxu0
    %v3953 = vpop.f32.mrb[0].mxu0
    %3954 = vdwg.mxu0
    %v3955 = vld [vmem:[%s4] sm:$0xff]
    %v3956 = vld [vmem:[%s4 + $0x8] sm:$0xff]
    %v3957 = vld [vmem:[%s4 + $0x10] sm:$0xff]
    %v3958 = vld [vmem:[%s4 + $0x18] sm:$0xff]
    %v3960 = vsel %vm647, %v3955, 0
    %v3963 = vsel %vm647, %v3956, 0
    %v3966 = vsel %vm647, %v3957, 0
    %v3969 = vsel %vm647, %v3958, 0
    %vm3971 = vcmask 1041408
    %v3973 = vsel %vm3971, %v3950, 0
    %3975 = vmatprep.subr.mxu0 0.0
    %3976 = vmatpush1.msra.mxu0 %v3934
    %3977 = vmatprep.subr.mxu0 0.0
    %3978 = vmatpush1.msra.mxu0 %v3937
    %3979 = vmatprep.subr.mxu0 0.0
    %3980 = vmatpush1.msra.mxu0 %v3942
    %3981 = vmatprep.subr.mxu0 0.0
    %3982 = vmatpush1.msra.mxu0 %v3945
    %3983 = vmatprep.subr.mxu0 0.0
    %3984 = vmatpush1.msra.mxu0 %v3973
    %3985 = vmatprep.subr.mxu0 0.0
    %3986 = vmatpush1.msra.mxu0 0.0
    %3987 = vmatprep.subr.mxu0 0.0
    %3988 = vmatpush1.msra.mxu0 0.0
    %3989 = vmatprep.subr.mxu0 0.0
    %3990 = vmatpush1.msra.mxu0 0.0
    %3991 = vmatprep.subr.mxu0 0.0
    %3992 = vmatpush1.msra.mxu0 0.0
    %3993 = vmatprep.subr.mxu0 0.0
    %3994 = vmatpush1.msra.mxu0 0.0
    %3995 = vmatprep.subr.mxu0 0.0
    %3996 = vmatpush1.msra.mxu0 0.0
    %3997 = vmatprep.subr.mxu0 0.0
    %3998 = vmatpush1.msra.mxu0 0.0
    %3999 = vmatprep.subr.mxu0 0.0
    %4000 = vmatpush1.msra.mxu0 0.0
    %4001 = vmatprep.subr.mxu0 0.0
    %4002 = vmatpush1.msra.mxu0 0.0
    %4003 = vmatprep.subr.mxu0 0.0
    %4004 = vmatpush1.msra.mxu0 0.0
    %4005 = vmatprep.subr.mxu0 0.0
    %4006 = vmatpush1.msra.mxu0 0.0
    %4007 = vmatprep.subr.mxu0 0.0
    %4008 = vmatpush1.msra.mxu0 0.0
    %4009 = vmatprep.subr.mxu0 0.0
    %4010 = vmatpush1.msra.mxu0 0.0
    %4011 = vmatprep.subr.mxu0 0.0
    %4012 = vmatpush1.msra.mxu0 0.0
    %4013 = vmatprep.subr.mxu0 0.0
    %4014 = vmatpush1.msra.mxu0 0.0
    %4015 = vmatprep.subr.mxu0 0.0
    %4016 = vmatpush1.msra.mxu0 0.0
    %4017 = vmatprep.subr.mxu0 0.0
    %4018 = vmatpush1.msra.mxu0 0.0
    %4019 = vmatprep.subr.mxu0 0.0
    %4020 = vmatpush1.msra.mxu0 0.0
    %4021 = vmatprep.subr.mxu0 0.0
    %4022 = vmatpush1.msra.mxu0 0.0
    %4023 = vmatprep.subr.mxu0 0.0
    %4024 = vmatpush1.msra.mxu0 0.0
    %4025 = vmatprep.subr.mxu0 0.0
    %4026 = vmatpush1.msra.mxu0 0.0
    %4027 = vmatprep.subr.mxu0 0.0
    %4028 = vmatpush1.msra.mxu0 0.0
    %4029 = vmatprep.subr.mxu0 0.0
    %4030 = vmatpush1.msra.mxu0 0.0
    %4031 = vmatprep.subr.mxu0 0.0
    %4032 = vmatpush1.msra.mxu0 0.0
    %4033 = vmatprep.subr.mxu0 0.0
    %4034 = vmatpush1.msra.mxu0 0.0
    %4035 = vmatprep.subr.mxu0 0.0
    %4036 = vmatpush1.msra.mxu0 0.0
    %4037 = vmatprep.subr.mxu0 0.0
    %4038 = vmatpush1.msra.mxu0 0.0
    %4039 = vmatprep.mubr.f32.mxu0 0.0
    %4040 = vmatmul.mubr.f32.gmra.mrb[0].mxu0 %v3960
    %v4041 = vpop.f32.mrb[0].mxu0
    %v4042 = vadd.f32 0.0, %v4041
    %v4043 = vpop.f32.mrb[0].mxu0
    %4044 = vmatprep.mubr.f32.mxu0 0.0
    %4045 = vmatmul.mubr.f32.gmra.mrb[0].mxu0 %v3963
    %v4046 = vpop.f32.mrb[0].mxu0
    %v4047 = vadd.f32 0.0, %v4046
    %v4048 = vpop.f32.mrb[0].mxu0
    %4049 = vmatprep.mubr.f32.mxu0 0.0
    %4050 = vmatmul.mubr.f32.gmra.mrb[0].mxu0 %v3966
    %v4051 = vpop.f32.mrb[0].mxu0
    %v4052 = vadd.f32 0.0, %v4051
    %v4053 = vpop.f32.mrb[0].mxu0
    %4054 = vmatprep.mubr.f32.mxu0 0.0
    %4055 = vmatmul.mubr.f32.gmra.mrb[0].mxu0 %v3969
    %v4056 = vpop.f32.mrb[0].mxu0
    %v4057 = vadd.f32 0.0, %v4056
    %v4058 = vpop.f32.mrb[0].mxu0
    %4059 = vdwg.mxu0
    %4060 = vst.msk [vmem:[#allocation2] sm:$0xff] %vm110, %v4042
    %4061 = vst.msk [vmem:[#allocation2 + $0x8] sm:$0xff] %vm110, %v4047
    %4062 = vst.msk [vmem:[#allocation2 + $0x10] sm:$0xff] %vm110, %v4052
    %4063 = vst.msk [vmem:[#allocation2 + $0x18] sm:$0xff] %vm110, %v4057
    %v4064 = vld [vmem:[%s5] sm:$0xff]
    %v4065 = vld [vmem:[%s5 + $0x8] sm:$0xff]
    %v4066 = vld [vmem:[%s5 + $0x10] sm:$0xff]
    %v4067 = vld [vmem:[%s5 + $0x18] sm:$0xff]
    %v4068 = vsub.f32 %v4042, %v4064
    %v4069 = vsub.f32 %v4047, %v4065
    %v4070 = vsub.f32 %v4052, %v4066
    %v4071 = vsub.f32 %v4057, %v4067
    %v4072 = vmul.f32 %v4068, %v4068
    %v4073 = vmul.f32 %v4069, %v4069
    %v4074 = vmul.f32 %v4070, %v4070
    %v4075 = vmul.f32 %v4071, %v4071
    %v4076 = vsel %vm110, %v4072, 0.0
    %4077 = vadd.xlane.f32.xlu0 %v4076
    %v4078 = vpop.xlane.xlu0 %4077
    %v4079 = vsel %vm110, %v4073, 0.0
    %4080 = vadd.xlane.f32.xlu0 %v4079
    %v4081 = vpop.xlane.xlu0 %4080
    %v4082 = vsel %vm110, %v4074, 0.0
    %4083 = vadd.xlane.f32.xlu0 %v4082
    %v4084 = vpop.xlane.xlu0 %4083
    %v4085 = vsel %vm110, %v4075, 0.0
    %4086 = vadd.xlane.f32.xlu0 %v4085
    %v4087 = vpop.xlane.xlu0 %4086
    %v4088 = vrcp.pop 48.0
    %v4089 = vmul.f32 %v4078, %v4088
    %v4090 = vmul.f32 %v4081, %v4088
    %v4091 = vmul.f32 %v4084, %v4088
    %v4092 = vmul.f32 %v4087, %v4088
    %v4093 = vld [vmem:[%s6] sm:$0xff]
    %v4094 = vld [vmem:[%s6 + $0x8] sm:$0xff]
    %v4095 = vld [vmem:[%s6 + $0x10] sm:$0xff]
    %v4096 = vld [vmem:[%s6 + $0x18] sm:$0xff]
    %v4097 = vmul.f32 %v4089, %v4093
    %v4098 = vmul.f32 %v4090, %v4094
    %v4099 = vmul.f32 %v4091, %v4095
    %v4100 = vmul.f32 %v4092, %v4096
    %vm4101 = vcmask 7168
    %v4102 = vsel %vm4101, %v4097, 0.0
    %v4103 = vsel %vm4101, %v4098, 0.0
    %v4104 = vadd.f32 %v4102, %v4103
    %v4105 = vsel %vm4101, %v4099, 0.0
    %v4106 = vadd.f32 %v4104, %v4105
    %v4107 = vsel %vm4101, %v4100, 0.0
    %v4108 = vadd.f32 %v4106, %v4107
    %4109 = vadd.xlane.f32.xlu0 %v4108
    %v4110 = vpop.xlane.xlu0 %4109
    %v4111 = vrot.slane %v4110, 4
    %v4112 = vadd.f32 %v4110, %v4111
    %v4113 = vrot.slane %v4112, 2
    %v4114 = vadd.f32 %v4112, %v4113
    %v4115 = vrot.slane %v4114, 1
    %v4116 = vadd.f32 %v4114, %v4115
    %s4117 = vtos %v4116
    %v4118 = vsel %vm4101, %v4093, 0.0
    %v4119 = vsel %vm4101, %v4094, 0.0
    %v4120 = vadd.f32 %v4118, %v4119
    %v4121 = vsel %vm4101, %v4095, 0.0
    %v4122 = vadd.f32 %v4120, %v4121
    %v4123 = vsel %vm4101, %v4096, 0.0
    %v4124 = vadd.f32 %v4122, %v4123
    %4125 = vadd.xlane.f32.xlu0 %v4124
    %v4126 = vpop.xlane.xlu0 %4125
    %v4127 = vrot.slane %v4126, 4
    %v4128 = vadd.f32 %v4126, %v4127
    %v4129 = vrot.slane %v4128, 2
    %v4130 = vadd.f32 %v4128, %v4129
    %v4131 = vrot.slane %v4130, 1
    %v4132 = vadd.f32 %v4130, %v4131
    %s4133 = vtos %v4132
    %v4134 = vstv %s4133
    %v4135 = vrcp.pop %v4134
    %s4136 = vtos %v4135
    %s4137 = smul.f32 %s4117, %s4136
    %v4138 = vstv %s4137
    %vm4139 = vcmask 0
    %4140 = vst.msk [vmem:[#allocation4] sm:$0x1] %vm4139, %v4138
    // Predicated region
    $region106: #{forward.1} parent=1 // pred_check
      _
    $region107: #{forward.1} parent=1 // pred_check_branch
      %4142 = sbr.rel (0) target = $region109
    $region108: #{forward.1} parent=1 // pred_region
      %s4144 = ssub.s32 512, 512
      %4145 = vsyncadd [#allocation3], %s4144
      %s4146 = sshll.u32 [#allocation2], 4
      %s4147 = int_to_ptr.vmem [resolvable:$true] %s4146
      %4152 = dma.vmem_to_hbm [thread:$0]  %s4147, 512, %s26, [#allocation3], 128, 128, 8
    $region109: #{forward.1} parent=1 // pred_fallthru
      _
    // Predicated region
    $region110: #{forward.1} parent=1 // pred_check
      _
    $region111: #{forward.1} parent=1 // pred_check_branch
      %4154 = sbr.rel (0) target = $region113
    $region112: #{forward.1} parent=1 // pred_region
      %s4156 = ssub.s32 16, 16
      %4157 = vsyncadd [#allocation5], %s4156
      %s4159 = sshll.u32 [#allocation4], 4
      %s4160 = int_to_ptr.vmem [resolvable:$true] %s4159
      %4162 = dma.vmem_to_hbm [thread:$0]  %s4160, 16, %s27, [#allocation5]
    $region113: #{forward.1} parent=1 // pred_fallthru
      _
    // Predicated region
    $region114: #{forward.1} parent=1 // pred_check
      _
    $region115: #{forward.1} parent=1 // pred_check_branch
      %4164 = sbr.rel (0) target = $region117
    $region116: #{forward.1} parent=1 // pred_region
      %4165 = dma.done [#allocation3], 512
    $region117: #{forward.1} parent=1 // pred_fallthru
      _
    // Predicated region
    $region118: #{forward.1} parent=1 // pred_check
      _
    $region119: #{forward.1} parent=1 // pred_check_branch
      %4167 = sbr.rel (0) target = $region121
    $region120: #{forward.1} parent=1 // pred_region
      %4168 = dma.done [#allocation5], 16
    $region121: #{forward.1} parent=1 // pred_fallthru
      _
    %4169 = vsyncpa [#allocation3], 1
    %4170 = vsyncpa [#allocation5], 1

</llo_original>
